<compile_context>
chip_gen: v7x
topology: tpu7x:2x2x1
jax: 0.10.0
libtpu: 0.0.40
codegen_flags: <defaults>
</compile_context>

<pallas_src>
import functools

import jax
import jax.numpy as jnp
from jax import lax
from jax.experimental import pallas as pl
from jax.experimental.pallas import tpu as pltpu


N_BLOCK = 128   # node rows per packed block (raise to 256 on v6e/v7x if VMEM allows)


def _round_up(x, m):
    return ((x + m - 1) // m) * m


def gin_fused_kernel(a_ref, x_ref, segm_ref, segt_ref, seg_ref, eps_ref,
                     w1_ref, b1_ref, w2_ref, b2_ref,
                     gnw_ref, gnb_ref, gns_ref,
                     pw1_ref, pb1_ref, pw2_ref, pb2_ref,
                     z_out_ref, *, num_layers):
    """One grid step == one packed block of graphs, run through all GIN layers."""
    a = a_ref[0]          # (N, N)   bf16 block-diagonal 0/1 adjacency (no self loops)
    feat = x_ref[0]       # (N, D)   f32 node features (padded rows / lanes are zero)
    segm = segm_ref[0]    # (Gpb, N) f32 segment matrix, rows scaled by 1/|g|
    segt = segt_ref[0]    # (N, Gpb) f32 0/1 node -> graph one-hot (stat broadcast)
    seg = seg_ref[0]      # (Gpb, N) f32 0/1 segment matrix (add-pool)

    for l in range(num_layers):              # static unroll; weights stacked on dim 0
        one_plus_eps = 1.0 + eps_ref[l]      # scalar read from SMEM

        # --- GINConv: (1+eps)*x + neighbor sum (block-diagonal A), then 2-layer MLP ---
        agg = jnp.dot(a, feat.astype(jnp.bfloat16),
                      preferred_element_type=jnp.float32) + one_plus_eps * feat
        h = jnp.dot(agg.astype(jnp.bfloat16), w1_ref[l],
                    preferred_element_type=jnp.float32) + b1_ref[l]
        h = jnp.maximum(h, 0.0)
        h = jnp.dot(h.astype(jnp.bfloat16), w2_ref[l],
                    preferred_element_type=jnp.float32) + b2_ref[l]

        # --- GraphNorm: per-graph stats via segment matmuls (padded nodes have zero
        #     columns in segm/segt, so real-node results are unaffected by padding) ---
        mean_g = jnp.dot(segm, h, preferred_element_type=jnp.float32)            # (Gpb, D)
        sub = h - jnp.dot(segt, mean_g, preferred_element_type=jnp.float32) * gns_ref[l]
        var_g = jnp.dot(segm, sub * sub, preferred_element_type=jnp.float32)     # (Gpb, D)
        rstd = jnp.dot(segt, lax.rsqrt(var_g + 1e-8),
                       preferred_element_type=jnp.float32)                       # (N, D)
        hn = gnw_ref[l] * sub * rstd + gnb_ref[l]

        feat = jnp.maximum(hn, 0.0)

        # --- projection MLP + per-graph add pool ---
        z = jnp.dot(feat.astype(jnp.bfloat16), pw1_ref[l],
                    preferred_element_type=jnp.float32) + pb1_ref[l]
        z = jnp.maximum(z, 0.0)
        z = jnp.dot(z.astype(jnp.bfloat16), pw2_ref[l],
                    preferred_element_type=jnp.float32) + pb2_ref[l]
        zg = jnp.dot(seg, z, preferred_element_type=jnp.float32)                 # (Gpb, D)

        z_out_ref[0, l] = zg     # full (Gpb, 128) tile -> unmasked lane-dense store


def gin_forward(A, x, segm, segt, seg, eps, params, *,
                num_layers, dim_targets, num_graphs):
    """A: (B, N, N) bf16; x: (B, N, D) f32; segment matrices per block; eps: (L,) f32."""
    B, N, _ = A.shape
    D = x.shape[-1]
    Gpb = seg.shape[1]
    L = num_layers

    per_block = lambda shape: pl.BlockSpec(shape, lambda b: (b, 0, 0))
    shared = lambda shape: pl.BlockSpec(shape, lambda b: (0,) * len(shape))

    out = pl.pallas_call(
        functools.partial(gin_fused_kernel, num_layers=L),
        out_shape=jax.ShapeDtypeStruct((B, L, Gpb, D), jnp.float32),
        grid=(B,),
        in_specs=[
            per_block((1, N, N)),       # block-diagonal adjacency (bf16)
            per_block((1, N, D)),       # packed node features
            per_block((1, Gpb, N)),     # SEGM (1/|g|-scaled segment matrix)
            per_block((1, N, Gpb)),     # SEG^T (stat broadcast)
            per_block((1, Gpb, N)),     # SEG (add-pool)
            pl.BlockSpec(memory_space=pltpu.MemorySpace.SMEM),   # eps (L,) scalars
            shared((L, D, D)), shared((L, 1, D)),   # GIN nn lin1 (bf16 W, f32 b)
            shared((L, D, D)), shared((L, 1, D)),   # GIN nn lin2
            shared((L, 1, D)), shared((L, 1, D)), shared((L, 1, D)),  # GraphNorm w, b, scale
            shared((L, D, D)), shared((L, 1, D)),   # proj lin1
            shared((L, D, D)), shared((L, 1, D)),   # proj lin2
        ],
        out_specs=pl.BlockSpec((1, L, Gpb, D), lambda b: (b, 0, 0, 0)),
        compiler_params=pltpu.CompilerParams(
            dimension_semantics=("parallel",),      # packed blocks shard across TCs (v7x)
        ),
    )(A, x, segm, segt, seg, eps,
      params["w1"], params["b1"], params["w2"], params["b2"],
      params["gnw"], params["gnb"], params["gns"],
      params["pw1"], params["pb1"], params["pw2"], params["pb2"])

    # (B, L, Gpb, D) -> per-graph rows, strip lane padding, layer-major concat (= torch.cat)
    out = jnp.transpose(out, (0, 2, 1, 3))[:, :, :, :dim_targets]
    return out.reshape(B * Gpb, L * dim_targets)[:num_graphs]


def init_gin_params(key, dim_features, dim_targets, hidden_dim, num_layers, d_pad):
    """PyTorch-Linear-style init, zero-padded to d_pad lanes (padded lanes stay exactly 0).

    Matmul weights are stored in bf16 (f32 MXU accumulation in-kernel); biases and
    GraphNorm affine params stay f32.
    """
    def linear(k, fan_in, fan_out):
        kw, kb = jax.random.split(k)
        bound = 1.0 / (fan_in ** 0.5)
        w = jax.random.uniform(kw, (fan_in, fan_out), jnp.float32, -bound, bound)
        b = jax.random.uniform(kb, (fan_out,), jnp.float32, -bound, bound)
        wp = jnp.zeros((d_pad, d_pad), jnp.float32).at[:fan_in, :fan_out].set(w)
        bp = jnp.zeros((1, d_pad), jnp.float32).at[0, :fan_out].set(b)
        return wp, bp

    names = ["w1", "b1", "w2", "b2", "gnw", "gnb", "gns", "pw1", "pb1", "pw2", "pb2"]
    stacks = {n: [] for n in names}
    for layer in range(num_layers):
        in_dim = dim_features if layer == 0 else hidden_dim
        key, k1, k2, k3, k4 = jax.random.split(key, 5)
        w1, b1 = linear(k1, in_dim, hidden_dim)          # GIN nn lin1
        w2, b2 = linear(k2, hidden_dim, hidden_dim)      # GIN nn lin2
        pw1, pb1 = linear(k3, hidden_dim, hidden_dim)    # proj MLP lin1
        pw2, pb2 = linear(k4, hidden_dim, dim_targets)   # proj MLP lin2
        gnw = jnp.zeros((1, d_pad), jnp.float32).at[0, :hidden_dim].set(1.0)
        gnb = jnp.zeros((1, d_pad), jnp.float32)
        gns = jnp.zeros((1, d_pad), jnp.float32).at[0, :hidden_dim].set(1.0)
        for n, v in zip(names, (w1, b1, w2, b2, gnw, gnb, gns, pw1, pb1, pw2, pb2)):
            stacks[n].append(v)

    params = {n: jnp.stack(v) for n, v in stacks.items()}
    for n in ("w1", "w2", "pw1", "pw2"):
        params[n] = params[n].astype(jnp.bfloat16)
    eps = jnp.zeros((num_layers,), jnp.float32)          # GINConv learnable eps, init 0
    return params, eps


def build_packed_batch(key, num_graphs, nodes_per_graph, dim_features, d_pad):
    """Pack graphs into block-diagonal blocks of N_BLOCK node rows.

    Invariants the kernel relies on (enforced here): padded node rows of x and padded
    rows/columns of A are zero; segment matrices have zero columns for padded nodes and
    zero rows for unused graph slots; SEGM rows are scaled by 1/|real nodes of g|.
    """
    g_per_block = N_BLOCK // nodes_per_graph
    num_blocks = -(-num_graphs // g_per_block)

    A = jnp.zeros((num_blocks, N_BLOCK, N_BLOCK), jnp.float32)
    X = jnp.zeros((num_blocks, N_BLOCK, d_pad), jnp.float32)
    SEG = jnp.zeros((num_blocks, g_per_block, N_BLOCK), jnp.float32)

    for g in range(num_graphs):
        b, slot = divmod(g, g_per_block)
        s = slot * nodes_per_graph
        key, ka, kx = jax.random.split(key, 3)
        blk = (jax.random.uniform(ka, (nodes_per_graph, nodes_per_graph)) < 0.4).astype(jnp.float32)
        blk = jnp.maximum(blk, blk.T) * (1.0 - jnp.eye(nodes_per_graph))  # symmetric, no self loops
        A = A.at[b, s:s + nodes_per_graph, s:s + nodes_per_graph].set(blk)
        X = X.at[b, s:s + nodes_per_graph, :dim_features].set(
            jax.random.normal(kx, (nodes_per_graph, dim_features), jnp.float32))
        SEG = SEG.at[b, slot, s:s + nodes_per_graph].set(1.0)

    SEGM = SEG / float(nodes_per_graph)
    SEGT = jnp.transpose(SEG, (0, 2, 1))
    return A.astype(jnp.bfloat16), X, SEGM, SEGT, SEG   # 0/1 adjacency is exact in bf16


def gin_reference(A, X, eps, params, *, num_graphs, nodes_per_graph,
                  num_layers, dim_targets):
    """Pure-JAX per-graph reference with the same bf16 cast points as the kernel."""
    g_per_block = A.shape[1] // nodes_per_graph
    rows = []
    for g in range(num_graphs):
        b, slot = divmod(g, g_per_block)
        s = slot * nodes_per_graph
        a_g = A[b, s:s + nodes_per_graph, s:s + nodes_per_graph]
        feat = X[b, s:s + nodes_per_graph, :]
        outs = []
        for l in range(num_layers):
            agg = jnp.dot(a_g, feat.astype(jnp.bfloat16),
                          preferred_element_type=jnp.float32) + (1.0 + eps[l]) * feat
            h = jnp.dot(agg.astype(jnp.bfloat16), params["w1"][l],
                        preferred_element_type=jnp.float32) + params["b1"][l]
            h = jnp.maximum(h, 0.0)
            h = jnp.dot(h.astype(jnp.bfloat16), params["w2"][l],
                        preferred_element_type=jnp.float32) + params["b2"][l]
            mean = jnp.mean(h, axis=0, keepdims=True)
            sub = h - mean * params["gns"][l]
            var = jnp.mean(sub * sub, axis=0, keepdims=True)
            hn = params["gnw"][l] * sub * lax.rsqrt(var + 1e-8) + params["gnb"][l]
            feat = jnp.maximum(hn, 0.0)
            z = jnp.dot(feat.astype(jnp.bfloat16), params["pw1"][l],
                        preferred_element_type=jnp.float32) + params["pb1"][l]
            z = jnp.maximum(z, 0.0)
            z = jnp.dot(z.astype(jnp.bfloat16), params["pw2"][l],
                        preferred_element_type=jnp.float32) + params["pb2"][l]
            outs.append(jnp.sum(z, axis=0)[:dim_targets])
        rows.append(jnp.concatenate(outs, axis=0))
    return jnp.stack(rows)


if __name__ == "__main__":
    # GIN config: num_layers=2, norm_layer='gn', bias=True, aggregation='add'
    dim_features = 16
    dim_targets = 8
    hidden_dim = 32
    num_layers = 2
    num_graphs = 16
    nodes_per_graph = 16     # 16 graphs x 16 nodes -> 2 packed blocks of 128 node rows

    # one shared lane pad for features / hidden / targets (all <= 128 here)
    d_pad = _round_up(max(dim_features, hidden_dim, dim_targets), 128)

    key = jax.random.PRNGKey(0)
    k_graph, k_params = jax.random.split(key)

    A, X, SEGM, SEGT, SEG = build_packed_batch(
        k_graph, num_graphs, nodes_per_graph, dim_features, d_pad)
    params, eps = init_gin_params(
        k_params, dim_features, dim_targets, hidden_dim, num_layers, d_pad)

    fwd = jax.jit(functools.partial(
        gin_forward, num_layers=num_layers, dim_targets=dim_targets, num_graphs=num_graphs))
    z_cat = fwd(A, X, SEGM, SEGT, SEG, eps, params)
    jax.block_until_ready(z_cat)

    assert z_cat.shape == (num_graphs, num_layers * dim_targets)
    assert z_cat.dtype == jnp.float32
    assert bool(jnp.all(jnp.isfinite(z_cat)))

    z_ref = gin_reference(A, X, eps, params, num_graphs=num_graphs,
                          nodes_per_graph=nodes_per_graph,
                          num_layers=num_layers, dim_targets=dim_targets)
    max_err = float(jnp.max(jnp.abs(z_cat - z_ref)))
    assert bool(jnp.allclose(z_cat, z_ref, rtol=3e-2, atol=3e-2)), max_err

    print("KERNEL_OK")
</pallas_src>

<mosaic_0001>
module attributes {stable_mosaic.version = 11 : i64} {
  func.func @gin_fused_kernel(%arg0: i32, %arg1: memref<1x128x128xbf16, #tpu.memory_space<vmem>>, %arg2: memref<1x128x128xf32, #tpu.memory_space<vmem>>, %arg3: memref<1x8x128xf32, #tpu.memory_space<vmem>>, %arg4: memref<1x128x8xf32, #tpu.memory_space<vmem>>, %arg5: memref<1x8x128xf32, #tpu.memory_space<vmem>>, %arg6: memref<2xf32, #tpu.memory_space<smem>>, %arg7: memref<2x128x128xbf16, #tpu.memory_space<vmem>>, %arg8: memref<2x1x128xf32, #tpu.memory_space<vmem>>, %arg9: memref<2x128x128xbf16, #tpu.memory_space<vmem>>, %arg10: memref<2x1x128xf32, #tpu.memory_space<vmem>>, %arg11: memref<2x1x128xf32, #tpu.memory_space<vmem>>, %arg12: memref<2x1x128xf32, #tpu.memory_space<vmem>>, %arg13: memref<2x1x128xf32, #tpu.memory_space<vmem>>, %arg14: memref<2x128x128xbf16, #tpu.memory_space<vmem>>, %arg15: memref<2x1x128xf32, #tpu.memory_space<vmem>>, %arg16: memref<2x128x128xbf16, #tpu.memory_space<vmem>>, %arg17: memref<2x1x128xf32, #tpu.memory_space<vmem>>, %arg18: memref<1x2x8x128xf32, #tpu.memory_space<vmem>>) attributes {dimension_semantics = [#tpu.dimension_semantics<parallel>], iteration_bounds = array<i64: 2>, scalar_prefetch = 0 : i64, scratch_operands = 0 : i64, tpu.core_type = #tpu.core_type<tc>, window_params = [{transform_indices = @transform_0, window_bounds = array<i64: 1, 128, 128>}, {transform_indices = @transform_1, window_bounds = array<i64: 1, 128, 128>}, {transform_indices = @transform_2, window_bounds = array<i64: 1, 8, 128>}, {transform_indices = @transform_3, window_bounds = array<i64: 1, 128, 8>}, {transform_indices = @transform_4, window_bounds = array<i64: 1, 8, 128>}, {transform_indices = @transform_5, window_bounds = array<i64: 2>}, {pipeline_mode = #tpu.pipeline_mode<synchronous>, transform_indices = @transform_6, window_bounds = array<i64: 2, 128, 128>}, {pipeline_mode = #tpu.pipeline_mode<synchronous>, transform_indices = @transform_7, window_bounds = array<i64: 2, 1, 128>}, {pipeline_mode = #tpu.pipeline_mode<synchronous>, transform_indices = @transform_8, window_bounds = array<i64: 2, 128, 128>}, {pipeline_mode = #tpu.pipeline_mode<synchronous>, transform_indices = @transform_9, window_bounds = array<i64: 2, 1, 128>}, {pipeline_mode = #tpu.pipeline_mode<synchronous>, transform_indices = @transform_10, window_bounds = array<i64: 2, 1, 128>}, {pipeline_mode = #tpu.pipeline_mode<synchronous>, transform_indices = @transform_11, window_bounds = array<i64: 2, 1, 128>}, {pipeline_mode = #tpu.pipeline_mode<synchronous>, transform_indices = @transform_12, window_bounds = array<i64: 2, 1, 128>}, {pipeline_mode = #tpu.pipeline_mode<synchronous>, transform_indices = @transform_13, window_bounds = array<i64: 2, 128, 128>}, {pipeline_mode = #tpu.pipeline_mode<synchronous>, transform_indices = @transform_14, window_bounds = array<i64: 2, 1, 128>}, {pipeline_mode = #tpu.pipeline_mode<synchronous>, transform_indices = @transform_15, window_bounds = array<i64: 2, 128, 128>}, {pipeline_mode = #tpu.pipeline_mode<synchronous>, transform_indices = @transform_16, window_bounds = array<i64: 2, 1, 128>}, {transform_indices = @transform_17, window_bounds = array<i64: 1, 2, 8, 128>}]} {
    %c0 = arith.constant 0 : index
    %c0_0 = arith.constant 0 : index
    %c0_1 = arith.constant 0 : index
    %0 = vector.load %arg1[%c0, %c0_0, %c0_1] : memref<1x128x128xbf16, #tpu.memory_space<vmem>>, vector<1x128x128xbf16>
    %1 = vector.shape_cast %0 : vector<1x128x128xbf16> to vector<128x128xbf16>
    %c0_2 = arith.constant 0 : index
    %c0_3 = arith.constant 0 : index
    %c0_4 = arith.constant 0 : index
    %2 = vector.load %arg2[%c0_2, %c0_3, %c0_4] : memref<1x128x128xf32, #tpu.memory_space<vmem>>, vector<1x128x128xf32>
    %3 = vector.shape_cast %2 : vector<1x128x128xf32> to vector<128x128xf32>
    %c0_5 = arith.constant 0 : index
    %c0_6 = arith.constant 0 : index
    %c0_7 = arith.constant 0 : index
    %4 = vector.load %arg3[%c0_5, %c0_6, %c0_7] : memref<1x8x128xf32, #tpu.memory_space<vmem>>, vector<1x8x128xf32>
    %5 = vector.shape_cast %4 : vector<1x8x128xf32> to vector<8x128xf32>
    %c0_8 = arith.constant 0 : index
    %c0_9 = arith.constant 0 : index
    %c0_10 = arith.constant 0 : index
    %6 = vector.load %arg4[%c0_8, %c0_9, %c0_10] : memref<1x128x8xf32, #tpu.memory_space<vmem>>, vector<1x128x8xf32>
    %7 = vector.shape_cast %6 : vector<1x128x8xf32> to vector<128x8xf32>
    %c0_11 = arith.constant 0 : index
    %c0_12 = arith.constant 0 : index
    %c0_13 = arith.constant 0 : index
    %8 = vector.load %arg5[%c0_11, %c0_12, %c0_13] : memref<1x8x128xf32, #tpu.memory_space<vmem>>, vector<1x8x128xf32>
    %9 = vector.shape_cast %8 : vector<1x8x128xf32> to vector<8x128xf32>
    %c0_14 = arith.constant 0 : index
    %10 = memref.load %arg6[%c0_14] : memref<2xf32, #tpu.memory_space<smem>>
    %cst = arith.constant 1.000000e+00 : f32
    %11 = arith.addf %cst, %10 : f32
    %12 = arith.truncf %3 : vector<128x128xf32> to vector<128x128xbf16>
    %cst_15 = arith.constant dense<0.000000e+00> : vector<128x128xf32>
    %13 = tpu.matmul %1, %12, %cst_15 {dimension_numbers = #tpu.dot_dimension_numbers<[1], [0], [0], [1], [0, 0, 1, 1], [], []>} : vector<128x128xbf16>, vector<128x128xbf16>, vector<128x128xf32> -> vector<128x128xf32>
    %14 = vector.broadcast %11 : f32 to vector<128x128xf32>
    %15 = arith.mulf %14, %3 : vector<128x128xf32>
    %16 = arith.addf %13, %15 : vector<128x128xf32>
    %17 = arith.truncf %16 : vector<128x128xf32> to vector<128x128xbf16>
    %c0_16 = arith.constant 0 : index
    %c0_17 = arith.constant 0 : index
    %c0_18 = arith.constant 0 : index
    %18 = vector.load %arg7[%c0_16, %c0_17, %c0_18] : memref<2x128x128xbf16, #tpu.memory_space<vmem>>, vector<1x128x128xbf16>
    %19 = vector.shape_cast %18 : vector<1x128x128xbf16> to vector<128x128xbf16>
    %cst_19 = arith.constant dense<0.000000e+00> : vector<128x128xf32>
    %20 = tpu.matmul %17, %19, %cst_19 {dimension_numbers = #tpu.dot_dimension_numbers<[1], [0], [0], [1], [0, 0, 1, 1], [], []>} : vector<128x128xbf16>, vector<128x128xbf16>, vector<128x128xf32> -> vector<128x128xf32>
    %c0_20 = arith.constant 0 : index
    %c0_21 = arith.constant 0 : index
    %c0_22 = arith.constant 0 : index
    %21 = vector.load %arg8[%c0_20, %c0_21, %c0_22] : memref<2x1x128xf32, #tpu.memory_space<vmem>>, vector<1x1x128xf32>
    %22 = vector.shape_cast %21 : vector<1x1x128xf32> to vector<1x128xf32>
    %23 = vector.broadcast %22 : vector<1x128xf32> to vector<128x128xf32>
    %24 = arith.addf %20, %23 : vector<128x128xf32>
    %cst_23 = arith.constant 0.000000e+00 : f32
    %25 = vector.broadcast %cst_23 : f32 to vector<128x128xf32>
    %26 = arith.maximumf %24, %25 : vector<128x128xf32>
    %27 = arith.truncf %26 : vector<128x128xf32> to vector<128x128xbf16>
    %c0_24 = arith.constant 0 : index
    %c0_25 = arith.constant 0 : index
    %c0_26 = arith.constant 0 : index
    %28 = vector.load %arg9[%c0_24, %c0_25, %c0_26] : memref<2x128x128xbf16, #tpu.memory_space<vmem>>, vector<1x128x128xbf16>
    %29 = vector.shape_cast %28 : vector<1x128x128xbf16> to vector<128x128xbf16>
    %cst_27 = arith.constant dense<0.000000e+00> : vector<128x128xf32>
    %30 = tpu.matmul %27, %29, %cst_27 {dimension_numbers = #tpu.dot_dimension_numbers<[1], [0], [0], [1], [0, 0, 1, 1], [], []>} : vector<128x128xbf16>, vector<128x128xbf16>, vector<128x128xf32> -> vector<128x128xf32>
    %c0_28 = arith.constant 0 : index
    %c0_29 = arith.constant 0 : index
    %c0_30 = arith.constant 0 : index
    %31 = vector.load %arg10[%c0_28, %c0_29, %c0_30] : memref<2x1x128xf32, #tpu.memory_space<vmem>>, vector<1x1x128xf32>
    %32 = vector.shape_cast %31 : vector<1x1x128xf32> to vector<1x128xf32>
    %33 = vector.broadcast %32 : vector<1x128xf32> to vector<128x128xf32>
    %34 = arith.addf %30, %33 : vector<128x128xf32>
    %cst_31 = arith.constant dense<0.000000e+00> : vector<8x128xf32>
    %35 = tpu.matmul %5, %34, %cst_31 {dimension_numbers = #tpu.dot_dimension_numbers<[1], [0], [0], [1], [0, 0, 1, 1], [], []>} : vector<8x128xf32>, vector<128x128xf32>, vector<8x128xf32> -> vector<8x128xf32>
    %cst_32 = arith.constant dense<0.000000e+00> : vector<128x128xf32>
    %36 = tpu.matmul %7, %35, %cst_32 {dimension_numbers = #tpu.dot_dimension_numbers<[1], [0], [0], [1], [0, 0, 1, 1], [], []>} : vector<128x8xf32>, vector<8x128xf32>, vector<128x128xf32> -> vector<128x128xf32>
    %c0_33 = arith.constant 0 : index
    %c0_34 = arith.constant 0 : index
    %c0_35 = arith.constant 0 : index
    %37 = vector.load %arg13[%c0_33, %c0_34, %c0_35] : memref<2x1x128xf32, #tpu.memory_space<vmem>>, vector<1x1x128xf32>
    %38 = vector.shape_cast %37 : vector<1x1x128xf32> to vector<1x128xf32>
    %39 = vector.broadcast %38 : vector<1x128xf32> to vector<128x128xf32>
    %40 = arith.mulf %36, %39 : vector<128x128xf32>
    %41 = arith.subf %34, %40 : vector<128x128xf32>
    %42 = arith.mulf %41, %41 : vector<128x128xf32>
    %cst_36 = arith.constant dense<0.000000e+00> : vector<8x128xf32>
    %43 = tpu.matmul %5, %42, %cst_36 {dimension_numbers = #tpu.dot_dimension_numbers<[1], [0], [0], [1], [0, 0, 1, 1], [], []>} : vector<8x128xf32>, vector<128x128xf32>, vector<8x128xf32> -> vector<8x128xf32>
    %cst_37 = arith.constant 9.99999993E-9 : f32
    %44 = vector.broadcast %cst_37 : f32 to vector<8x128xf32>
    %45 = arith.addf %43, %44 : vector<8x128xf32>
    %46 = math.rsqrt %45 : vector<8x128xf32>
    %cst_38 = arith.constant dense<0.000000e+00> : vector<128x128xf32>
    %47 = tpu.matmul %7, %46, %cst_38 {dimension_numbers = #tpu.dot_dimension_numbers<[1], [0], [0], [1], [0, 0, 1, 1], [], []>} : vector<128x8xf32>, vector<8x128xf32>, vector<128x128xf32> -> vector<128x128xf32>
    %c0_39 = arith.constant 0 : index
    %c0_40 = arith.constant 0 : index
    %c0_41 = arith.constant 0 : index
    %48 = vector.load %arg11[%c0_39, %c0_40, %c0_41] : memref<2x1x128xf32, #tpu.memory_space<vmem>>, vector<1x1x128xf32>
    %49 = vector.shape_cast %48 : vector<1x1x128xf32> to vector<1x128xf32>
    %50 = vector.broadcast %49 : vector<1x128xf32> to vector<128x128xf32>
    %51 = arith.mulf %50, %41 : vector<128x128xf32>
    %52 = arith.mulf %51, %47 : vector<128x128xf32>
    %c0_42 = arith.constant 0 : index
    %c0_43 = arith.constant 0 : index
    %c0_44 = arith.constant 0 : index
    %53 = vector.load %arg12[%c0_42, %c0_43, %c0_44] : memref<2x1x128xf32, #tpu.memory_space<vmem>>, vector<1x1x128xf32>
    %54 = vector.shape_cast %53 : vector<1x1x128xf32> to vector<1x128xf32>
    %55 = vector.broadcast %54 : vector<1x128xf32> to vector<128x128xf32>
    %56 = arith.addf %52, %55 : vector<128x128xf32>
    %cst_45 = arith.constant 0.000000e+00 : f32
    %57 = vector.broadcast %cst_45 : f32 to vector<128x128xf32>
    %58 = arith.maximumf %56, %57 : vector<128x128xf32>
    %59 = arith.truncf %58 : vector<128x128xf32> to vector<128x128xbf16>
    %c0_46 = arith.constant 0 : index
    %c0_47 = arith.constant 0 : index
    %c0_48 = arith.constant 0 : index
    %60 = vector.load %arg14[%c0_46, %c0_47, %c0_48] : memref<2x128x128xbf16, #tpu.memory_space<vmem>>, vector<1x128x128xbf16>
    %61 = vector.shape_cast %60 : vector<1x128x128xbf16> to vector<128x128xbf16>
    %cst_49 = arith.constant dense<0.000000e+00> : vector<128x128xf32>
    %62 = tpu.matmul %59, %61, %cst_49 {dimension_numbers = #tpu.dot_dimension_numbers<[1], [0], [0], [1], [0, 0, 1, 1], [], []>} : vector<128x128xbf16>, vector<128x128xbf16>, vector<128x128xf32> -> vector<128x128xf32>
    %c0_50 = arith.constant 0 : index
    %c0_51 = arith.constant 0 : index
    %c0_52 = arith.constant 0 : index
    %63 = vector.load %arg15[%c0_50, %c0_51, %c0_52] : memref<2x1x128xf32, #tpu.memory_space<vmem>>, vector<1x1x128xf32>
    %64 = vector.shape_cast %63 : vector<1x1x128xf32> to vector<1x128xf32>
    %65 = vector.broadcast %64 : vector<1x128xf32> to vector<128x128xf32>
    %66 = arith.addf %62, %65 : vector<128x128xf32>
    %cst_53 = arith.constant 0.000000e+00 : f32
    %67 = vector.broadcast %cst_53 : f32 to vector<128x128xf32>
    %68 = arith.maximumf %66, %67 : vector<128x128xf32>
    %69 = arith.truncf %68 : vector<128x128xf32> to vector<128x128xbf16>
    %c0_54 = arith.constant 0 : index
    %c0_55 = arith.constant 0 : index
    %c0_56 = arith.constant 0 : index
    %70 = vector.load %arg16[%c0_54, %c0_55, %c0_56] : memref<2x128x128xbf16, #tpu.memory_space<vmem>>, vector<1x128x128xbf16>
    %71 = vector.shape_cast %70 : vector<1x128x128xbf16> to vector<128x128xbf16>
    %cst_57 = arith.constant dense<0.000000e+00> : vector<128x128xf32>
    %72 = tpu.matmul %69, %71, %cst_57 {dimension_numbers = #tpu.dot_dimension_numbers<[1], [0], [0], [1], [0, 0, 1, 1], [], []>} : vector<128x128xbf16>, vector<128x128xbf16>, vector<128x128xf32> -> vector<128x128xf32>
    %c0_58 = arith.constant 0 : index
    %c0_59 = arith.constant 0 : index
    %c0_60 = arith.constant 0 : index
    %73 = vector.load %arg17[%c0_58, %c0_59, %c0_60] : memref<2x1x128xf32, #tpu.memory_space<vmem>>, vector<1x1x128xf32>
    %74 = vector.shape_cast %73 : vector<1x1x128xf32> to vector<1x128xf32>
    %75 = vector.broadcast %74 : vector<1x128xf32> to vector<128x128xf32>
    %76 = arith.addf %72, %75 : vector<128x128xf32>
    %cst_61 = arith.constant dense<0.000000e+00> : vector<8x128xf32>
    %77 = tpu.matmul %9, %76, %cst_61 {dimension_numbers = #tpu.dot_dimension_numbers<[1], [0], [0], [1], [0, 0, 1, 1], [], []>} : vector<8x128xf32>, vector<128x128xf32>, vector<8x128xf32> -> vector<8x128xf32>
    %c0_62 = arith.constant 0 : index
    %c0_63 = arith.constant 0 : index
    %c0_64 = arith.constant 0 : index
    %c0_65 = arith.constant 0 : index
    %78 = vector.load %arg18[%c0_62, %c0_63, %c0_64, %c0_65] : memref<1x2x8x128xf32, #tpu.memory_space<vmem>>, vector<1x1x8x128xf32>
    %79 = vector.shape_cast %78 : vector<1x1x8x128xf32> to vector<8x128xf32>
    %80 = vector.shape_cast %77 : vector<8x128xf32> to vector<1x1x8x128xf32>
    tpu.vector_store %arg18[%c0_62, %c0_63, %c0_64, %c0_65], %80 {strides = array<i32>} : memref<1x2x8x128xf32, #tpu.memory_space<vmem>>, vector<1x1x8x128xf32>,
    %c1 = arith.constant 1 : index
    %81 = memref.load %arg6[%c1] : memref<2xf32, #tpu.memory_space<smem>>
    %cst_66 = arith.constant 1.000000e+00 : f32
    %82 = arith.addf %cst_66, %81 : f32
    %83 = arith.truncf %58 : vector<128x128xf32> to vector<128x128xbf16>
    %cst_67 = arith.constant dense<0.000000e+00> : vector<128x128xf32>
    %84 = tpu.matmul %1, %83, %cst_67 {dimension_numbers = #tpu.dot_dimension_numbers<[1], [0], [0], [1], [0, 0, 1, 1], [], []>} : vector<128x128xbf16>, vector<128x128xbf16>, vector<128x128xf32> -> vector<128x128xf32>
    %85 = vector.broadcast %82 : f32 to vector<128x128xf32>
    %86 = arith.mulf %85, %58 : vector<128x128xf32>
    %87 = arith.addf %84, %86 : vector<128x128xf32>
    %88 = arith.truncf %87 : vector<128x128xf32> to vector<128x128xbf16>
    %c1_68 = arith.constant 1 : index
    %c0_69 = arith.constant 0 : index
    %c0_70 = arith.constant 0 : index
    %89 = vector.load %arg7[%c1_68, %c0_69, %c0_70] : memref<2x128x128xbf16, #tpu.memory_space<vmem>>, vector<1x128x128xbf16>
    %90 = vector.shape_cast %89 : vector<1x128x128xbf16> to vector<128x128xbf16>
    %cst_71 = arith.constant dense<0.000000e+00> : vector<128x128xf32>
    %91 = tpu.matmul %88, %90, %cst_71 {dimension_numbers = #tpu.dot_dimension_numbers<[1], [0], [0], [1], [0, 0, 1, 1], [], []>} : vector<128x128xbf16>, vector<128x128xbf16>, vector<128x128xf32> -> vector<128x128xf32>
    %c1_72 = arith.constant 1 : index
    %c0_73 = arith.constant 0 : index
    %c0_74 = arith.constant 0 : index
    %92 = vector.load %arg8[%c1_72, %c0_73, %c0_74] : memref<2x1x128xf32, #tpu.memory_space<vmem>>, vector<1x1x128xf32>
    %93 = vector.shape_cast %92 : vector<1x1x128xf32> to vector<1x128xf32>
    %94 = vector.broadcast %93 : vector<1x128xf32> to vector<128x128xf32>
    %95 = arith.addf %91, %94 : vector<128x128xf32>
    %cst_75 = arith.constant 0.000000e+00 : f32
    %96 = vector.broadcast %cst_75 : f32 to vector<128x128xf32>
    %97 = arith.maximumf %95, %96 : vector<128x128xf32>
    %98 = arith.truncf %97 : vector<128x128xf32> to vector<128x128xbf16>
    %c1_76 = arith.constant 1 : index
    %c0_77 = arith.constant 0 : index
    %c0_78 = arith.constant 0 : index
    %99 = vector.load %arg9[%c1_76, %c0_77, %c0_78] : memref<2x128x128xbf16, #tpu.memory_space<vmem>>, vector<1x128x128xbf16>
    %100 = vector.shape_cast %99 : vector<1x128x128xbf16> to vector<128x128xbf16>
    %cst_79 = arith.constant dense<0.000000e+00> : vector<128x128xf32>
    %101 = tpu.matmul %98, %100, %cst_79 {dimension_numbers = #tpu.dot_dimension_numbers<[1], [0], [0], [1], [0, 0, 1, 1], [], []>} : vector<128x128xbf16>, vector<128x128xbf16>, vector<128x128xf32> -> vector<128x128xf32>
    %c1_80 = arith.constant 1 : index
    %c0_81 = arith.constant 0 : index
    %c0_82 = arith.constant 0 : index
    %102 = vector.load %arg10[%c1_80, %c0_81, %c0_82] : memref<2x1x128xf32, #tpu.memory_space<vmem>>, vector<1x1x128xf32>
    %103 = vector.shape_cast %102 : vector<1x1x128xf32> to vector<1x128xf32>
    %104 = vector.broadcast %103 : vector<1x128xf32> to vector<128x128xf32>
    %105 = arith.addf %101, %104 : vector<128x128xf32>
    %cst_83 = arith.constant dense<0.000000e+00> : vector<8x128xf32>
    %106 = tpu.matmul %5, %105, %cst_83 {dimension_numbers = #tpu.dot_dimension_numbers<[1], [0], [0], [1], [0, 0, 1, 1], [], []>} : vector<8x128xf32>, vector<128x128xf32>, vector<8x128xf32> -> vector<8x128xf32>
    %cst_84 = arith.constant dense<0.000000e+00> : vector<128x128xf32>
    %107 = tpu.matmul %7, %106, %cst_84 {dimension_numbers = #tpu.dot_dimension_numbers<[1], [0], [0], [1], [0, 0, 1, 1], [], []>} : vector<128x8xf32>, vector<8x128xf32>, vector<128x128xf32> -> vector<128x128xf32>
    %c1_85 = arith.constant 1 : index
    %c0_86 = arith.constant 0 : index
    %c0_87 = arith.constant 0 : index
    %108 = vector.load %arg13[%c1_85, %c0_86, %c0_87] : memref<2x1x128xf32, #tpu.memory_space<vmem>>, vector<1x1x128xf32>
    %109 = vector.shape_cast %108 : vector<1x1x128xf32> to vector<1x128xf32>
    %110 = vector.broadcast %109 : vector<1x128xf32> to vector<128x128xf32>
    %111 = arith.mulf %107, %110 : vector<128x128xf32>
    %112 = arith.subf %105, %111 : vector<128x128xf32>
    %113 = arith.mulf %112, %112 : vector<128x128xf32>
    %cst_88 = arith.constant dense<0.000000e+00> : vector<8x128xf32>
    %114 = tpu.matmul %5, %113, %cst_88 {dimension_numbers = #tpu.dot_dimension_numbers<[1], [0], [0], [1], [0, 0, 1, 1], [], []>} : vector<8x128xf32>, vector<128x128xf32>, vector<8x128xf32> -> vector<8x128xf32>
    %cst_89 = arith.constant 9.99999993E-9 : f32
    %115 = vector.broadcast %cst_89 : f32 to vector<8x128xf32>
    %116 = arith.addf %114, %115 : vector<8x128xf32>
    %117 = math.rsqrt %116 : vector<8x128xf32>
    %cst_90 = arith.constant dense<0.000000e+00> : vector<128x128xf32>
    %118 = tpu.matmul %7, %117, %cst_90 {dimension_numbers = #tpu.dot_dimension_numbers<[1], [0], [0], [1], [0, 0, 1, 1], [], []>} : vector<128x8xf32>, vector<8x128xf32>, vector<128x128xf32> -> vector<128x128xf32>
    %c1_91 = arith.constant 1 : index
    %c0_92 = arith.constant 0 : index
    %c0_93 = arith.constant 0 : index
    %119 = vector.load %arg11[%c1_91, %c0_92, %c0_93] : memref<2x1x128xf32, #tpu.memory_space<vmem>>, vector<1x1x128xf32>
    %120 = vector.shape_cast %119 : vector<1x1x128xf32> to vector<1x128xf32>
    %121 = vector.broadcast %120 : vector<1x128xf32> to vector<128x128xf32>
    %122 = arith.mulf %121, %112 : vector<128x128xf32>
    %123 = arith.mulf %122, %118 : vector<128x128xf32>
    %c1_94 = arith.constant 1 : index
    %c0_95 = arith.constant 0 : index
    %c0_96 = arith.constant 0 : index
    %124 = vector.load %arg12[%c1_94, %c0_95, %c0_96] : memref<2x1x128xf32, #tpu.memory_space<vmem>>, vector<1x1x128xf32>
    %125 = vector.shape_cast %124 : vector<1x1x128xf32> to vector<1x128xf32>
    %126 = vector.broadcast %125 : vector<1x128xf32> to vector<128x128xf32>
    %127 = arith.addf %123, %126 : vector<128x128xf32>
    %cst_97 = arith.constant 0.000000e+00 : f32
    %128 = vector.broadcast %cst_97 : f32 to vector<128x128xf32>
    %129 = arith.maximumf %127, %128 : vector<128x128xf32>
    %130 = arith.truncf %129 : vector<128x128xf32> to vector<128x128xbf16>
    %c1_98 = arith.constant 1 : index
    %c0_99 = arith.constant 0 : index
    %c0_100 = arith.constant 0 : index
    %131 = vector.load %arg14[%c1_98, %c0_99, %c0_100] : memref<2x128x128xbf16, #tpu.memory_space<vmem>>, vector<1x128x128xbf16>
    %132 = vector.shape_cast %131 : vector<1x128x128xbf16> to vector<128x128xbf16>
    %cst_101 = arith.constant dense<0.000000e+00> : vector<128x128xf32>
    %133 = tpu.matmul %130, %132, %cst_101 {dimension_numbers = #tpu.dot_dimension_numbers<[1], [0], [0], [1], [0, 0, 1, 1], [], []>} : vector<128x128xbf16>, vector<128x128xbf16>, vector<128x128xf32> -> vector<128x128xf32>
    %c1_102 = arith.constant 1 : index
    %c0_103 = arith.constant 0 : index
    %c0_104 = arith.constant 0 : index
    %134 = vector.load %arg15[%c1_102, %c0_103, %c0_104] : memref<2x1x128xf32, #tpu.memory_space<vmem>>, vector<1x1x128xf32>
    %135 = vector.shape_cast %134 : vector<1x1x128xf32> to vector<1x128xf32>
    %136 = vector.broadcast %135 : vector<1x128xf32> to vector<128x128xf32>
    %137 = arith.addf %133, %136 : vector<128x128xf32>
    %cst_105 = arith.constant 0.000000e+00 : f32
    %138 = vector.broadcast %cst_105 : f32 to vector<128x128xf32>
    %139 = arith.maximumf %137, %138 : vector<128x128xf32>
    %140 = arith.truncf %139 : vector<128x128xf32> to vector<128x128xbf16>
    %c1_106 = arith.constant 1 : index
    %c0_107 = arith.constant 0 : index
    %c0_108 = arith.constant 0 : index
    %141 = vector.load %arg16[%c1_106, %c0_107, %c0_108] : memref<2x128x128xbf16, #tpu.memory_space<vmem>>, vector<1x128x128xbf16>
    %142 = vector.shape_cast %141 : vector<1x128x128xbf16> to vector<128x128xbf16>
    %cst_109 = arith.constant dense<0.000000e+00> : vector<128x128xf32>
    %143 = tpu.matmul %140, %142, %cst_109 {dimension_numbers = #tpu.dot_dimension_numbers<[1], [0], [0], [1], [0, 0, 1, 1], [], []>} : vector<128x128xbf16>, vector<128x128xbf16>, vector<128x128xf32> -> vector<128x128xf32>
    %c1_110 = arith.constant 1 : index
    %c0_111 = arith.constant 0 : index
    %c0_112 = arith.constant 0 : index
    %144 = vector.load %arg17[%c1_110, %c0_111, %c0_112] : memref<2x1x128xf32, #tpu.memory_space<vmem>>, vector<1x1x128xf32>
    %145 = vector.shape_cast %144 : vector<1x1x128xf32> to vector<1x128xf32>
    %146 = vector.broadcast %145 : vector<1x128xf32> to vector<128x128xf32>
    %147 = arith.addf %143, %146 : vector<128x128xf32>
    %cst_113 = arith.constant dense<0.000000e+00> : vector<8x128xf32>
    %148 = tpu.matmul %9, %147, %cst_113 {dimension_numbers = #tpu.dot_dimension_numbers<[1], [0], [0], [1], [0, 0, 1, 1], [], []>} : vector<8x128xf32>, vector<128x128xf32>, vector<8x128xf32> -> vector<8x128xf32>
    %c0_114 = arith.constant 0 : index
    %c1_115 = arith.constant 1 : index
    %c0_116 = arith.constant 0 : index
    %c0_117 = arith.constant 0 : index
    %149 = vector.load %arg18[%c0_114, %c1_115, %c0_116, %c0_117] : memref<1x2x8x128xf32, #tpu.memory_space<vmem>>, vector<1x1x8x128xf32>
    %150 = vector.shape_cast %149 : vector<1x1x8x128xf32> to vector<8x128xf32>
    %151 = vector.shape_cast %148 : vector<8x128xf32> to vector<1x1x8x128xf32>
    tpu.vector_store %arg18[%c0_114, %c1_115, %c0_116, %c0_117], %151 {strides = array<i32>} : memref<1x2x8x128xf32, #tpu.memory_space<vmem>>, vector<1x1x8x128xf32>,
    return
  }
  func.func @transform_0(%arg0: i32) -> (i32, i32, i32) {
    %c0_i32 = arith.constant 0 : i32
    %c0_i32_0 = arith.constant 0 : i32
    %c0_i32_1 = arith.constant 0 : i32
    return %arg0, %c0_i32, %c0_i32_0 : i32, i32, i32
  }
  func.func @transform_1(%arg0: i32) -> (i32, i32, i32) {
    %c0_i32 = arith.constant 0 : i32
    %c0_i32_0 = arith.constant 0 : i32
    %c0_i32_1 = arith.constant 0 : i32
    return %arg0, %c0_i32, %c0_i32_0 : i32, i32, i32
  }
  func.func @transform_2(%arg0: i32) -> (i32, i32, i32) {
    %c0_i32 = arith.constant 0 : i32
    %c0_i32_0 = arith.constant 0 : i32
    %c0_i32_1 = arith.constant 0 : i32
    return %arg0, %c0_i32, %c0_i32_0 : i32, i32, i32
  }
  func.func @transform_3(%arg0: i32) -> (i32, i32, i32) {
    %c0_i32 = arith.constant 0 : i32
    %c0_i32_0 = arith.constant 0 : i32
    %c0_i32_1 = arith.constant 0 : i32
    return %arg0, %c0_i32, %c0_i32_0 : i32, i32, i32
  }
  func.func @transform_4(%arg0: i32) -> (i32, i32, i32) {
    %c0_i32 = arith.constant 0 : i32
    %c0_i32_0 = arith.constant 0 : i32
    %c0_i32_1 = arith.constant 0 : i32
    return %arg0, %c0_i32, %c0_i32_0 : i32, i32, i32
  }
  func.func @transform_5(%arg0: i32) -> i32 {
    %c0_i32 = arith.constant 0 : i32
    %c0_i32_0 = arith.constant 0 : i32
    return %c0_i32 : i32
  }
  func.func @transform_6(%arg0: i32) -> (i32, i32, i32) {
    %c0_i32 = arith.constant 0 : i32
    %c0_i32_0 = arith.constant 0 : i32
    %c0_i32_1 = arith.constant 0 : i32
    %c0_i32_2 = arith.constant 0 : i32
    return %c0_i32, %c0_i32_0, %c0_i32_1 : i32, i32, i32
  }
  func.func @transform_7(%arg0: i32) -> (i32, i32, i32) {
    %c0_i32 = arith.constant 0 : i32
    %c0_i32_0 = arith.constant 0 : i32
    %c0_i32_1 = arith.constant 0 : i32
    %c0_i32_2 = arith.constant 0 : i32
    return %c0_i32, %c0_i32_0, %c0_i32_1 : i32, i32, i32
  }
  func.func @transform_8(%arg0: i32) -> (i32, i32, i32) {
    %c0_i32 = arith.constant 0 : i32
    %c0_i32_0 = arith.constant 0 : i32
    %c0_i32_1 = arith.constant 0 : i32
    %c0_i32_2 = arith.constant 0 : i32
    return %c0_i32, %c0_i32_0, %c0_i32_1 : i32, i32, i32
  }
  func.func @transform_9(%arg0: i32) -> (i32, i32, i32) {
    %c0_i32 = arith.constant 0 : i32
    %c0_i32_0 = arith.constant 0 : i32
    %c0_i32_1 = arith.constant 0 : i32
    %c0_i32_2 = arith.constant 0 : i32
    return %c0_i32, %c0_i32_0, %c0_i32_1 : i32, i32, i32
  }
  func.func @transform_10(%arg0: i32) -> (i32, i32, i32) {
    %c0_i32 = arith.constant 0 : i32
    %c0_i32_0 = arith.constant 0 : i32
    %c0_i32_1 = arith.constant 0 : i32
    %c0_i32_2 = arith.constant 0 : i32
    return %c0_i32, %c0_i32_0, %c0_i32_1 : i32, i32, i32
  }
  func.func @transform_11(%arg0: i32) -> (i32, i32, i32) {
    %c0_i32 = arith.constant 0 : i32
    %c0_i32_0 = arith.constant 0 : i32
    %c0_i32_1 = arith.constant 0 : i32
    %c0_i32_2 = arith.constant 0 : i32
    return %c0_i32, %c0_i32_0, %c0_i32_1 : i32, i32, i32
  }
  func.func @transform_12(%arg0: i32) -> (i32, i32, i32) {
    %c0_i32 = arith.constant 0 : i32
    %c0_i32_0 = arith.constant 0 : i32
    %c0_i32_1 = arith.constant 0 : i32
    %c0_i32_2 = arith.constant 0 : i32
    return %c0_i32, %c0_i32_0, %c0_i32_1 : i32, i32, i32
  }
  func.func @transform_13(%arg0: i32) -> (i32, i32, i32) {
    %c0_i32 = arith.constant 0 : i32
    %c0_i32_0 = arith.constant 0 : i32
    %c0_i32_1 = arith.constant 0 : i32
    %c0_i32_2 = arith.constant 0 : i32
    return %c0_i32, %c0_i32_0, %c0_i32_1 : i32, i32, i32
  }
  func.func @transform_14(%arg0: i32) -> (i32, i32, i32) {
    %c0_i32 = arith.constant 0 : i32
    %c0_i32_0 = arith.constant 0 : i32
    %c0_i32_1 = arith.constant 0 : i32
    %c0_i32_2 = arith.constant 0 : i32
    return %c0_i32, %c0_i32_0, %c0_i32_1 : i32, i32, i32
  }
  func.func @transform_15(%arg0: i32) -> (i32, i32, i32) {
    %c0_i32 = arith.constant 0 : i32
    %c0_i32_0 = arith.constant 0 : i32
    %c0_i32_1 = arith.constant 0 : i32
    %c0_i32_2 = arith.constant 0 : i32
    return %c0_i32, %c0_i32_0, %c0_i32_1 : i32, i32, i32
  }
  func.func @transform_16(%arg0: i32) -> (i32, i32, i32) {
    %c0_i32 = arith.constant 0 : i32
    %c0_i32_0 = arith.constant 0 : i32
    %c0_i32_1 = arith.constant 0 : i32
    %c0_i32_2 = arith.constant 0 : i32
    return %c0_i32, %c0_i32_0, %c0_i32_1 : i32, i32, i32
  }
  func.func @transform_17(%arg0: i32) -> (i32, i32, i32, i32) {
    %c0_i32 = arith.constant 0 : i32
    %c0_i32_0 = arith.constant 0 : i32
    %c0_i32_1 = arith.constant 0 : i32
    %c0_i32_2 = arith.constant 0 : i32
    return %arg0, %c0_i32, %c0_i32_0, %c0_i32_1 : i32, i32, i32, i32
  }
}

</mosaic_0001>

<llo_original>
// kernel: gin_forward.1
$region0: #{gin_forward.1}
  #allocation0 [shape = 'u32[]', space=smem, size = 0x4, offset = 0x4, fixed_abs, tag = 'smem constant byte address 0x4 - core index']
  #allocation1 [shape = 'u32[144,128]{1,0:T(1,128)}', space=vmem, size = 0x12000, scoped, tag = 'internal scratch']
  %s0 = inlined_call_operand.hbm [shape: bf16[2,128,128], index: 0, kind: input, shape index: {}]
  %s1 = inlined_call_operand.vmem [shape: f32[2,128,128], index: 1, kind: input, shape index: {}]
  %s2 = inlined_call_operand.vmem [shape: f32[2,8,128], index: 2, kind: input, shape index: {}]
  %s3 = inlined_call_operand.vmem [shape: f32[2,128,8], index: 3, kind: input, shape index: {}]
  %s4 = inlined_call_operand.hbm [shape: f32[2,8,128], index: 4, kind: input, shape index: {}]
  %s5 = inlined_call_operand.vmem [shape: f32[2], index: 5, kind: input, shape index: {}]
  %s6 = inlined_call_operand.hbm [shape: bf16[2,128,128], index: 6, kind: input, shape index: {}]
  %s7 = inlined_call_operand.vmem [shape: f32[2,1,128], index: 7, kind: input, shape index: {}]
  %s8 = inlined_call_operand.hbm [shape: bf16[2,128,128], index: 8, kind: input, shape index: {}]
  %s9 = inlined_call_operand.vmem [shape: f32[2,1,128], index: 9, kind: input, shape index: {}]
  %s10 = inlined_call_operand.vmem [shape: f32[2,1,128], index: 10, kind: input, shape index: {}]
  %s11 = inlined_call_operand.vmem [shape: f32[2,1,128], index: 11, kind: input, shape index: {}]
  %s12 = inlined_call_operand.vmem [shape: f32[2,1,128], index: 12, kind: input, shape index: {}]
  %s13 = inlined_call_operand.hbm [shape: bf16[2,128,128], index: 13, kind: input, shape index: {}]
  %s14 = inlined_call_operand.vmem [shape: f32[2,1,128], index: 14, kind: input, shape index: {}]
  %s15 = inlined_call_operand.hbm [shape: bf16[2,128,128], index: 15, kind: input, shape index: {}]
  %s16 = inlined_call_operand.vmem [shape: f32[2,1,128], index: 16, kind: input, shape index: {}]
  %s17 = inlined_call_operand.vmem [shape: f32[2,2,8,128], index: 17, kind: output, shape index: {}]
  %s18 = sld [smem:[#allocation0]]
  $region129: #{gin_forward.1} parent=0
    _
  %s20 = ssub.s32 1, %s18
  %s21 = scalar_select 0, %s20, %s18
  $region1: #{gin_forward.1} parent=0
    #allocation2 [shape = 'u8[65536]{0}', space=vmem, size = 0x10000, scoped, tag = 'input window, operand 0']
    #allocation3 [shape = 's32[2]{0}', space=sflag, size = 0x8, scoped, tag = 'scoped memory for gin_forward.1']
    #allocation4 [shape = 's32[2]{0}', space=sflag, size = 0x8, scoped, tag = 'scoped memory for gin_forward.1']
    #allocation5 [shape = 'u8[8192]{0}', space=vmem, size = 0x2000, scoped, tag = 'input window, operand 4']
    #allocation6 [shape = 's32[2]{0}', space=sflag, size = 0x8, scoped, tag = 'scoped memory for gin_forward.1']
    #allocation7 [shape = 'u8[512]{0}', space=smem, size = 0x200, scoped, tag = 'input window, operand 5, single buffered']
    #allocation8 [shape = 'u8[65536]{0}', space=vmem, size = 0x10000, scoped, tag = 'input window, operand 6, single buffered']
    #allocation9 [shape = 'u8[65536]{0}', space=vmem, size = 0x10000, scoped, tag = 'input window, operand 8, single buffered']
    #allocation10 [shape = 's32[1]{0}', space=sflag, size = 0x4, scoped, tag = 'scoped memory for gin_forward.1']
    #allocation11 [shape = 'u8[65536]{0}', space=vmem, size = 0x10000, scoped, tag = 'input window, operand 13, single buffered']
    #allocation12 [shape = 'u8[65536]{0}', space=vmem, size = 0x10000, scoped, tag = 'input window, operand 15, single buffered']
    #allocation13 [shape = 's32[1]{0}', space=sflag, size = 0x4, scoped, tag = 'scoped memory for gin_forward.1']
    %22 = vsyncpa [#allocation3], 0
    %s23 = scalar_lea.sflag [#allocation3], 1
    %24 = vsyncpa %s23, 0
    %25 = vsyncpa [#allocation6], 0
    %s26 = scalar_lea.sflag [#allocation6], 1
    %27 = vsyncpa %s26, 0
    %28 = vsyncpa [#allocation4], 0
    %29 = vsyncpa [#allocation10], 0
    %30 = vsyncpa [#allocation13], 0
    loop: start=0, step=1, limit=4
    $region2: #{gin_forward.1} parent=1 // loop_pre_header
      _
    $region3: #{gin_forward.1} parent=1 // loop_header
      %s32 = sphi 0, %s36
      %p33 = scmp.ge.s32.totalorder %s32, 4
      %s42 = sphi 0, %s44
      %s45 = sphi 0, %s42
      %s46 = sphi 0, %s45
      %s62 = sphi 0, %s46
      %s68 = sphi 0, %s70
      %s71 = sphi 0, %s68
      %s72 = sphi 0, %s71
      %s88 = sphi 0, %s72
      %s94 = sphi 0, %s96
      %s97 = sphi 0, %s94
      %s98 = sphi 0, %s97
      %s114 = sphi 0, %s98
      %s120 = sphi 0, %s122
      %s123 = sphi 0, %s120
      %s124 = sphi 0, %s123
      %s140 = sphi 0, %s124
      %s146 = sphi 0, %s148
      %s149 = sphi 0, %s146
      %s150 = sphi 0, %s149
      %s166 = sphi 0, %s150
      %s170 = sphi 0, %s170
      %s172 = sphi 0, %s170
      %s173 = sphi 0, %s172
      %s187 = sphi 0, %s173
      %s191 = sphi 0, %s191
      %s193 = sphi 0, %s191
      %s194 = sphi 0, %s193
      %s208 = sphi 0, %s194
      %s212 = sphi 0, %s212
      %s214 = sphi 0, %s212
      %s215 = sphi 0, %s214
      %s229 = sphi 0, %s215
      %s233 = sphi 0, %s233
      %s235 = sphi 0, %s233
      %s236 = sphi 0, %s235
      %s250 = sphi 0, %s236
      %s254 = sphi 0, %s254
      %s256 = sphi 0, %s254
      %s257 = sphi 0, %s256
      %s271 = sphi 0, %s257
      %s275 = sphi 0, %s275
      %s277 = sphi 0, %s275
      %s278 = sphi 0, %s277
      %s292 = sphi 0, %s278
      %s296 = sphi 0, %s296
      %s298 = sphi 0, %s296
      %s299 = sphi 0, %s298
      %s313 = sphi 0, %s299
      %s317 = sphi 0, %s317
      %s319 = sphi 0, %s317
      %s320 = sphi 0, %s319
      %s334 = sphi 0, %s320
      %s338 = sphi 0, %s338
      %s340 = sphi 0, %s338
      %s341 = sphi 0, %s340
      %s355 = sphi 0, %s341
      %s359 = sphi 0, %s359
      %s361 = sphi 0, %s359
      %s362 = sphi 0, %s361
      %s376 = sphi 0, %s362
      %s380 = sphi 0, %s380
      %s382 = sphi 0, %s380
      %s383 = sphi 0, %s382
      %s397 = sphi 0, %s383
      %s401 = sphi 0, %s401
      %s403 = sphi 0, %s401
      %s404 = sphi 0, %s403
      %s418 = sphi 0, %s404
      %s424 = sphi 0, %s426
      %s427 = sphi 0, %s424
      %s428 = sphi 0, %s427
      %s444 = sphi 0, %s428
    $region4: #{gin_forward.1} parent=1 // loop_header_branch
      %35 = sbr.rel (%p33) target = $region8
    $region5: #{gin_forward.1} parent=1 // loop_body
      %s37 = ssub.s32 %s32, 1
      %s38 = ssub.s32 %s32, 2
      %s39 = sadd.s32 %s32, 1
      %s40 = ssub.s32 %s32, %s39
      %p41 = scmp.eq.s32.totalorder %s40, 0
      %s43 = sadd.s32 %s42, 1
      %s44 = scalar_select %p41, %s42, %s43
      %p47 = pneg %p41
      %p48 = scmp.eq.s32.totalorder %s32, 1
      %p49 = por %p47, %p48
      %p50 = scmp.ne.s32.totalorder %s42, %s45
      %p51 = scmp.eq.s32.totalorder %s32, 0
      %p52 = por %p50, %p51
      %p53 = scmp.ne.s32.totalorder %s42, %s45
      %p54 = scmp.eq.s32.totalorder %s37, 1
      %p55 = por %p53, %p54
      %p56 = scmp.ne.s32.totalorder %s45, %s46
      %p57 = scmp.eq.s32.totalorder %s37, 0
      %p58 = por %p56, %p57
      %p59 = scmp.ne.s32.totalorder %s45, %s46
      %p60 = scmp.eq.s32.totalorder %s38, 1
      %p61 = por %p59, %p60
      %p63 = scmp.ne.s32.totalorder %s46, %s62
      %p64 = scmp.eq.s32.totalorder %s38, 0
      %p65 = por %p63, %p64
      %s66 = ssub.s32 %s32, %s39
      %p67 = scmp.eq.s32.totalorder %s66, 0
      %s69 = sadd.s32 %s68, 1
      %s70 = scalar_select %p67, %s68, %s69
      %p73 = pneg %p67
      %p74 = scmp.eq.s32.totalorder %s32, 1
      %p75 = por %p73, %p74
      %p76 = scmp.ne.s32.totalorder %s68, %s71
      %p77 = scmp.eq.s32.totalorder %s32, 0
      %p78 = por %p76, %p77
      %p79 = scmp.ne.s32.totalorder %s68, %s71
      %p80 = scmp.eq.s32.totalorder %s37, 1
      %p81 = por %p79, %p80
      %p82 = scmp.ne.s32.totalorder %s71, %s72
      %p83 = scmp.eq.s32.totalorder %s37, 0
      %p84 = por %p82, %p83
      %p85 = scmp.ne.s32.totalorder %s71, %s72
      %p86 = scmp.eq.s32.totalorder %s38, 1
      %p87 = por %p85, %p86
      %p89 = scmp.ne.s32.totalorder %s72, %s88
      %p90 = scmp.eq.s32.totalorder %s38, 0
      %p91 = por %p89, %p90
      %s92 = ssub.s32 %s32, %s39
      %p93 = scmp.eq.s32.totalorder %s92, 0
      %s95 = sadd.s32 %s94, 1
      %s96 = scalar_select %p93, %s94, %s95
      %p99 = pneg %p93
      %p100 = scmp.eq.s32.totalorder %s32, 1
      %p101 = por %p99, %p100
      %p102 = scmp.ne.s32.totalorder %s94, %s97
      %p103 = scmp.eq.s32.totalorder %s32, 0
      %p104 = por %p102, %p103
      %p105 = scmp.ne.s32.totalorder %s94, %s97
      %p106 = scmp.eq.s32.totalorder %s37, 1
      %p107 = por %p105, %p106
      %p108 = scmp.ne.s32.totalorder %s97, %s98
      %p109 = scmp.eq.s32.totalorder %s37, 0
      %p110 = por %p108, %p109
      %p111 = scmp.ne.s32.totalorder %s97, %s98
      %p112 = scmp.eq.s32.totalorder %s38, 1
      %p113 = por %p111, %p112
      %p115 = scmp.ne.s32.totalorder %s98, %s114
      %p116 = scmp.eq.s32.totalorder %s38, 0
      %p117 = por %p115, %p116
      %s118 = ssub.s32 %s32, %s39
      %p119 = scmp.eq.s32.totalorder %s118, 0
      %s121 = sadd.s32 %s120, 1
      %s122 = scalar_select %p119, %s120, %s121
      %p125 = pneg %p119
      %p126 = scmp.eq.s32.totalorder %s32, 1
      %p127 = por %p125, %p126
      %p128 = scmp.ne.s32.totalorder %s120, %s123
      %p129 = scmp.eq.s32.totalorder %s32, 0
      %p130 = por %p128, %p129
      %p131 = scmp.ne.s32.totalorder %s120, %s123
      %p132 = scmp.eq.s32.totalorder %s37, 1
      %p133 = por %p131, %p132
      %p134 = scmp.ne.s32.totalorder %s123, %s124
      %p135 = scmp.eq.s32.totalorder %s37, 0
      %p136 = por %p134, %p135
      %p137 = scmp.ne.s32.totalorder %s123, %s124
      %p138 = scmp.eq.s32.totalorder %s38, 1
      %p139 = por %p137, %p138
      %p141 = scmp.ne.s32.totalorder %s124, %s140
      %p142 = scmp.eq.s32.totalorder %s38, 0
      %p143 = por %p141, %p142
      %s144 = ssub.s32 %s32, %s39
      %p145 = scmp.eq.s32.totalorder %s144, 0
      %s147 = sadd.s32 %s146, 1
      %s148 = scalar_select %p145, %s146, %s147
      %p151 = pneg %p145
      %p152 = scmp.eq.s32.totalorder %s32, 1
      %p153 = por %p151, %p152
      %p154 = scmp.ne.s32.totalorder %s146, %s149
      %p155 = scmp.eq.s32.totalorder %s32, 0
      %p156 = por %p154, %p155
      %p157 = scmp.ne.s32.totalorder %s146, %s149
      %p158 = scmp.eq.s32.totalorder %s37, 1
      %p159 = por %p157, %p158
      %p160 = scmp.ne.s32.totalorder %s149, %s150
      %p161 = scmp.eq.s32.totalorder %s37, 0
      %p162 = por %p160, %p161
      %p163 = scmp.ne.s32.totalorder %s149, %s150
      %p164 = scmp.eq.s32.totalorder %s38, 1
      %p165 = por %p163, %p164
      %p167 = scmp.ne.s32.totalorder %s150, %s166
      %p168 = scmp.eq.s32.totalorder %s38, 0
      %p169 = por %p167, %p168
      %s171 = sadd.s32 %s170, 1
      %p174 = scmp.eq.s32.totalorder %s32, 1
      %p175 = scmp.ne.s32.totalorder %s170, %s172
      %p176 = scmp.eq.s32.totalorder %s32, 0
      %p177 = por %p175, %p176
      %p178 = scmp.ne.s32.totalorder %s170, %s172
      %p179 = scmp.eq.s32.totalorder %s37, 1
      %p180 = por %p178, %p179
      %p181 = scmp.ne.s32.totalorder %s172, %s173
      %p182 = scmp.eq.s32.totalorder %s37, 0
      %p183 = por %p181, %p182
      %p184 = scmp.ne.s32.totalorder %s172, %s173
      %p185 = scmp.eq.s32.totalorder %s38, 1
      %p186 = por %p184, %p185
      %p188 = scmp.ne.s32.totalorder %s173, %s187
      %p189 = scmp.eq.s32.totalorder %s38, 0
      %p190 = por %p188, %p189
      %s192 = sadd.s32 %s191, 1
      %p195 = scmp.eq.s32.totalorder %s32, 1
      %p196 = scmp.ne.s32.totalorder %s191, %s193
      %p197 = scmp.eq.s32.totalorder %s32, 0
      %p198 = por %p196, %p197
      %p199 = scmp.ne.s32.totalorder %s191, %s193
      %p200 = scmp.eq.s32.totalorder %s37, 1
      %p201 = por %p199, %p200
      %p202 = scmp.ne.s32.totalorder %s193, %s194
      %p203 = scmp.eq.s32.totalorder %s37, 0
      %p204 = por %p202, %p203
      %p205 = scmp.ne.s32.totalorder %s193, %s194
      %p206 = scmp.eq.s32.totalorder %s38, 1
      %p207 = por %p205, %p206
      %p209 = scmp.ne.s32.totalorder %s194, %s208
      %p210 = scmp.eq.s32.totalorder %s38, 0
      %p211 = por %p209, %p210
      %s213 = sadd.s32 %s212, 1
      %p216 = scmp.eq.s32.totalorder %s32, 1
      %p217 = scmp.ne.s32.totalorder %s212, %s214
      %p218 = scmp.eq.s32.totalorder %s32, 0
      %p219 = por %p217, %p218
      %p220 = scmp.ne.s32.totalorder %s212, %s214
      %p221 = scmp.eq.s32.totalorder %s37, 1
      %p222 = por %p220, %p221
      %p223 = scmp.ne.s32.totalorder %s214, %s215
      %p224 = scmp.eq.s32.totalorder %s37, 0
      %p225 = por %p223, %p224
      %p226 = scmp.ne.s32.totalorder %s214, %s215
      %p227 = scmp.eq.s32.totalorder %s38, 1
      %p228 = por %p226, %p227
      %p230 = scmp.ne.s32.totalorder %s215, %s229
      %p231 = scmp.eq.s32.totalorder %s38, 0
      %p232 = por %p230, %p231
      %s234 = sadd.s32 %s233, 1
      %p237 = scmp.eq.s32.totalorder %s32, 1
      %p238 = scmp.ne.s32.totalorder %s233, %s235
      %p239 = scmp.eq.s32.totalorder %s32, 0
      %p240 = por %p238, %p239
      %p241 = scmp.ne.s32.totalorder %s233, %s235
      %p242 = scmp.eq.s32.totalorder %s37, 1
      %p243 = por %p241, %p242
      %p244 = scmp.ne.s32.totalorder %s235, %s236
      %p245 = scmp.eq.s32.totalorder %s37, 0
      %p246 = por %p244, %p245
      %p247 = scmp.ne.s32.totalorder %s235, %s236
      %p248 = scmp.eq.s32.totalorder %s38, 1
      %p249 = por %p247, %p248
      %p251 = scmp.ne.s32.totalorder %s236, %s250
      %p252 = scmp.eq.s32.totalorder %s38, 0
      %p253 = por %p251, %p252
      %s255 = sadd.s32 %s254, 1
      %p258 = scmp.eq.s32.totalorder %s32, 1
      %p259 = scmp.ne.s32.totalorder %s254, %s256
      %p260 = scmp.eq.s32.totalorder %s32, 0
      %p261 = por %p259, %p260
      %p262 = scmp.ne.s32.totalorder %s254, %s256
      %p263 = scmp.eq.s32.totalorder %s37, 1
      %p264 = por %p262, %p263
      %p265 = scmp.ne.s32.totalorder %s256, %s257
      %p266 = scmp.eq.s32.totalorder %s37, 0
      %p267 = por %p265, %p266
      %p268 = scmp.ne.s32.totalorder %s256, %s257
      %p269 = scmp.eq.s32.totalorder %s38, 1
      %p270 = por %p268, %p269
      %p272 = scmp.ne.s32.totalorder %s257, %s271
      %p273 = scmp.eq.s32.totalorder %s38, 0
      %p274 = por %p272, %p273
      %s276 = sadd.s32 %s275, 1
      %p279 = scmp.eq.s32.totalorder %s32, 1
      %p280 = scmp.ne.s32.totalorder %s275, %s277
      %p281 = scmp.eq.s32.totalorder %s32, 0
      %p282 = por %p280, %p281
      %p283 = scmp.ne.s32.totalorder %s275, %s277
      %p284 = scmp.eq.s32.totalorder %s37, 1
      %p285 = por %p283, %p284
      %p286 = scmp.ne.s32.totalorder %s277, %s278
      %p287 = scmp.eq.s32.totalorder %s37, 0
      %p288 = por %p286, %p287
      %p289 = scmp.ne.s32.totalorder %s277, %s278
      %p290 = scmp.eq.s32.totalorder %s38, 1
      %p291 = por %p289, %p290
      %p293 = scmp.ne.s32.totalorder %s278, %s292
      %p294 = scmp.eq.s32.totalorder %s38, 0
      %p295 = por %p293, %p294
      %s297 = sadd.s32 %s296, 1
      %p300 = scmp.eq.s32.totalorder %s32, 1
      %p301 = scmp.ne.s32.totalorder %s296, %s298
      %p302 = scmp.eq.s32.totalorder %s32, 0
      %p303 = por %p301, %p302
      %p304 = scmp.ne.s32.totalorder %s296, %s298
      %p305 = scmp.eq.s32.totalorder %s37, 1
      %p306 = por %p304, %p305
      %p307 = scmp.ne.s32.totalorder %s298, %s299
      %p308 = scmp.eq.s32.totalorder %s37, 0
      %p309 = por %p307, %p308
      %p310 = scmp.ne.s32.totalorder %s298, %s299
      %p311 = scmp.eq.s32.totalorder %s38, 1
      %p312 = por %p310, %p311
      %p314 = scmp.ne.s32.totalorder %s299, %s313
      %p315 = scmp.eq.s32.totalorder %s38, 0
      %p316 = por %p314, %p315
      %s318 = sadd.s32 %s317, 1
      %p321 = scmp.eq.s32.totalorder %s32, 1
      %p322 = scmp.ne.s32.totalorder %s317, %s319
      %p323 = scmp.eq.s32.totalorder %s32, 0
      %p324 = por %p322, %p323
      %p325 = scmp.ne.s32.totalorder %s317, %s319
      %p326 = scmp.eq.s32.totalorder %s37, 1
      %p327 = por %p325, %p326
      %p328 = scmp.ne.s32.totalorder %s319, %s320
      %p329 = scmp.eq.s32.totalorder %s37, 0
      %p330 = por %p328, %p329
      %p331 = scmp.ne.s32.totalorder %s319, %s320
      %p332 = scmp.eq.s32.totalorder %s38, 1
      %p333 = por %p331, %p332
      %p335 = scmp.ne.s32.totalorder %s320, %s334
      %p336 = scmp.eq.s32.totalorder %s38, 0
      %p337 = por %p335, %p336
      %s339 = sadd.s32 %s338, 1
      %p342 = scmp.eq.s32.totalorder %s32, 1
      %p343 = scmp.ne.s32.totalorder %s338, %s340
      %p344 = scmp.eq.s32.totalorder %s32, 0
      %p345 = por %p343, %p344
      %p346 = scmp.ne.s32.totalorder %s338, %s340
      %p347 = scmp.eq.s32.totalorder %s37, 1
      %p348 = por %p346, %p347
      %p349 = scmp.ne.s32.totalorder %s340, %s341
      %p350 = scmp.eq.s32.totalorder %s37, 0
      %p351 = por %p349, %p350
      %p352 = scmp.ne.s32.totalorder %s340, %s341
      %p353 = scmp.eq.s32.totalorder %s38, 1
      %p354 = por %p352, %p353
      %p356 = scmp.ne.s32.totalorder %s341, %s355
      %p357 = scmp.eq.s32.totalorder %s38, 0
      %p358 = por %p356, %p357
      %s360 = sadd.s32 %s359, 1
      %p363 = scmp.eq.s32.totalorder %s32, 1
      %p364 = scmp.ne.s32.totalorder %s359, %s361
      %p365 = scmp.eq.s32.totalorder %s32, 0
      %p366 = por %p364, %p365
      %p367 = scmp.ne.s32.totalorder %s359, %s361
      %p368 = scmp.eq.s32.totalorder %s37, 1
      %p369 = por %p367, %p368
      %p370 = scmp.ne.s32.totalorder %s361, %s362
      %p371 = scmp.eq.s32.totalorder %s37, 0
      %p372 = por %p370, %p371
      %p373 = scmp.ne.s32.totalorder %s361, %s362
      %p374 = scmp.eq.s32.totalorder %s38, 1
      %p375 = por %p373, %p374
      %p377 = scmp.ne.s32.totalorder %s362, %s376
      %p378 = scmp.eq.s32.totalorder %s38, 0
      %p379 = por %p377, %p378
      %s381 = sadd.s32 %s380, 1
      %p384 = scmp.eq.s32.totalorder %s32, 1
      %p385 = scmp.ne.s32.totalorder %s380, %s382
      %p386 = scmp.eq.s32.totalorder %s32, 0
      %p387 = por %p385, %p386
      %p388 = scmp.ne.s32.totalorder %s380, %s382
      %p389 = scmp.eq.s32.totalorder %s37, 1
      %p390 = por %p388, %p389
      %p391 = scmp.ne.s32.totalorder %s382, %s383
      %p392 = scmp.eq.s32.totalorder %s37, 0
      %p393 = por %p391, %p392
      %p394 = scmp.ne.s32.totalorder %s382, %s383
      %p395 = scmp.eq.s32.totalorder %s38, 1
      %p396 = por %p394, %p395
      %p398 = scmp.ne.s32.totalorder %s383, %s397
      %p399 = scmp.eq.s32.totalorder %s38, 0
      %p400 = por %p398, %p399
      %s402 = sadd.s32 %s401, 1
      %p405 = scmp.eq.s32.totalorder %s32, 1
      %p406 = scmp.ne.s32.totalorder %s401, %s403
      %p407 = scmp.eq.s32.totalorder %s32, 0
      %p408 = por %p406, %p407
      %p409 = scmp.ne.s32.totalorder %s401, %s403
      %p410 = scmp.eq.s32.totalorder %s37, 1
      %p411 = por %p409, %p410
      %p412 = scmp.ne.s32.totalorder %s403, %s404
      %p413 = scmp.eq.s32.totalorder %s37, 0
      %p414 = por %p412, %p413
      %p415 = scmp.ne.s32.totalorder %s403, %s404
      %p416 = scmp.eq.s32.totalorder %s38, 1
      %p417 = por %p415, %p416
      %p419 = scmp.ne.s32.totalorder %s404, %s418
      %p420 = scmp.eq.s32.totalorder %s38, 0
      %p421 = por %p419, %p420
      %s422 = ssub.s32 %s32, %s39
      %p423 = scmp.eq.s32.totalorder %s422, 0
      %s425 = sadd.s32 %s424, 1
      %s426 = scalar_select %p423, %s424, %s425
      %p429 = pneg %p423
      %p430 = scmp.eq.s32.totalorder %s32, 1
      %p431 = por %p429, %p430
      %p432 = scmp.ne.s32.totalorder %s424, %s427
      %p433 = scmp.eq.s32.totalorder %s32, 0
      %p434 = por %p432, %p433
      %p435 = scmp.ne.s32.totalorder %s424, %s427
      %p436 = scmp.eq.s32.totalorder %s37, 1
      %p437 = por %p435, %p436
      %p438 = scmp.ne.s32.totalorder %s427, %s428
      %p439 = scmp.eq.s32.totalorder %s37, 0
      %p440 = por %p438, %p439
      %p441 = scmp.ne.s32.totalorder %s427, %s428
      %p442 = scmp.eq.s32.totalorder %s38, 1
      %p443 = por %p441, %p442
      %p445 = scmp.ne.s32.totalorder %s428, %s444
      %p446 = scmp.eq.s32.totalorder %s38, 0
      %p447 = por %p445, %p446
      %p448 = scmp.le.s32.totalorder 1, %s32
      %p449 = scmp.lt.s32.totalorder %s32, 3
      %p450 = pnand %p448, %p449
      %p451 = pneg %p450
      // Predicated region
      $region9: #{gin_forward.1} parent=5 // pred_check
        _
      $region10: #{gin_forward.1} parent=5 // pred_check_branch
        %453 = sbr.rel (%p450) target = $region12
      $region11: #{gin_forward.1} parent=5 // pred_region
        %s454 = ssub.s32 %s32, 1
        // Predicated region
        $region13: #{gin_forward.1} parent=11 // pred_check
          %p455 = pneg %p183
        $region14: #{gin_forward.1} parent=11 // pred_check_branch
          %457 = sbr.rel (%p455) target = $region16
        $region15: #{gin_forward.1} parent=11 // pred_region
          %s459 = ssub.s32 16, 16
          %460 = vsyncadd [#allocation4], %s459
          %s462 = sshll.u32 %s5, 4
          %s463 = int_to_ptr.vmem [resolvable:$true] %s462
          %465 = dma.vmem_to_smem %s463, 16, [#allocation7], [#allocation4]
        $region16: #{gin_forward.1} parent=11 // pred_fallthru
          _
        // Predicated region
        $region17: #{gin_forward.1} parent=11 // pred_check
          %p466 = pneg %p204
        $region18: #{gin_forward.1} parent=11 // pred_check_branch
          %468 = sbr.rel (%p466) target = $region20
        $region19: #{gin_forward.1} parent=11 // pred_region
          %s470 = ssub.s32 2048, 2048
          %471 = vsyncadd [#allocation6], %s470
          %s472 = sshll.u32 [#allocation8], 4
          %s473 = int_to_ptr.vmem [resolvable:$true] %s472
          %478 = dma.hbm_to_vmem [thread:$0]  %s6, 2048, %s473, [#allocation6], 64, 64, 4
        $region20: #{gin_forward.1} parent=11 // pred_fallthru
          _
        // Predicated region
        $region21: #{gin_forward.1} parent=11 // pred_check
          %p479 = pneg %p225
        $region22: #{gin_forward.1} parent=11 // pred_check_branch
          %481 = sbr.rel (%p479) target = $region24
        $region23: #{gin_forward.1} parent=11 // pred_region
          _
        $region24: #{gin_forward.1} parent=11 // pred_fallthru
          _
        // Predicated region
        $region25: #{gin_forward.1} parent=11 // pred_check
          %p482 = pneg %p246
        $region26: #{gin_forward.1} parent=11 // pred_check_branch
          %484 = sbr.rel (%p482) target = $region28
        $region27: #{gin_forward.1} parent=11 // pred_region
          %s486 = ssub.s32 2048, 2048
          %487 = vsyncadd [#allocation10], %s486
          %s488 = sshll.u32 [#allocation9], 4
          %s489 = int_to_ptr.vmem [resolvable:$true] %s488
          %494 = dma.hbm_to_vmem [thread:$0]  %s8, 2048, %s489, [#allocation10], 64, 64, 4
        $region28: #{gin_forward.1} parent=11 // pred_fallthru
          _
        // Predicated region
        $region29: #{gin_forward.1} parent=11 // pred_check
          %p495 = pneg %p267
        $region30: #{gin_forward.1} parent=11 // pred_check_branch
          %497 = sbr.rel (%p495) target = $region32
        $region31: #{gin_forward.1} parent=11 // pred_region
          _
        $region32: #{gin_forward.1} parent=11 // pred_fallthru
          _
        // Predicated region
        $region33: #{gin_forward.1} parent=11 // pred_check
          %p498 = pneg %p288
        $region34: #{gin_forward.1} parent=11 // pred_check_branch
          %500 = sbr.rel (%p498) target = $region36
        $region35: #{gin_forward.1} parent=11 // pred_region
          _
        $region36: #{gin_forward.1} parent=11 // pred_fallthru
          _
        // Predicated region
        $region37: #{gin_forward.1} parent=11 // pred_check
          %p501 = pneg %p309
        $region38: #{gin_forward.1} parent=11 // pred_check_branch
          %503 = sbr.rel (%p501) target = $region40
        $region39: #{gin_forward.1} parent=11 // pred_region
          _
        $region40: #{gin_forward.1} parent=11 // pred_fallthru
          _
        // Predicated region
        $region41: #{gin_forward.1} parent=11 // pred_check
          %p504 = pneg %p330
        $region42: #{gin_forward.1} parent=11 // pred_check_branch
          %506 = sbr.rel (%p504) target = $region44
        $region43: #{gin_forward.1} parent=11 // pred_region
          _
        $region44: #{gin_forward.1} parent=11 // pred_fallthru
          _
        // Predicated region
        $region45: #{gin_forward.1} parent=11 // pred_check
          %p507 = pneg %p351
        $region46: #{gin_forward.1} parent=11 // pred_check_branch
          %509 = sbr.rel (%p507) target = $region48
        $region47: #{gin_forward.1} parent=11 // pred_region
          %s511 = ssub.s32 2048, 2048
          %512 = vsyncadd [#allocation10], %s511
          %s513 = sshll.u32 [#allocation11], 4
          %s514 = int_to_ptr.vmem [resolvable:$true] %s513
          %519 = dma.hbm_to_vmem [thread:$0]  %s13, 2048, %s514, [#allocation10], 64, 64, 4
        $region48: #{gin_forward.1} parent=11 // pred_fallthru
          _
        // Predicated region
        $region49: #{gin_forward.1} parent=11 // pred_check
          %p520 = pneg %p372
        $region50: #{gin_forward.1} parent=11 // pred_check_branch
          %522 = sbr.rel (%p520) target = $region52
        $region51: #{gin_forward.1} parent=11 // pred_region
          _
        $region52: #{gin_forward.1} parent=11 // pred_fallthru
          _
        // Predicated region
        $region53: #{gin_forward.1} parent=11 // pred_check
          %p523 = pneg %p393
        $region54: #{gin_forward.1} parent=11 // pred_check_branch
          %525 = sbr.rel (%p523) target = $region56
        $region55: #{gin_forward.1} parent=11 // pred_region
          %s527 = ssub.s32 2048, 2048
          %528 = vsyncadd [#allocation13], %s527
          %s529 = sshll.u32 [#allocation12], 4
          %s530 = int_to_ptr.vmem [resolvable:$true] %s529
          %535 = dma.hbm_to_vmem [thread:$0]  %s15, 2048, %s530, [#allocation13], 64, 64, 4
        $region56: #{gin_forward.1} parent=11 // pred_fallthru
          _
        // Predicated region
        $region57: #{gin_forward.1} parent=11 // pred_check
          %p536 = pneg %p414
        $region58: #{gin_forward.1} parent=11 // pred_check_branch
          %538 = sbr.rel (%p536) target = $region60
        $region59: #{gin_forward.1} parent=11 // pred_region
          _
        $region60: #{gin_forward.1} parent=11 // pred_fallthru
          _
      $region12: #{gin_forward.1} parent=5 // pred_fallthru
        _
      %p539 = scmp.lt.s32.totalorder %s32, 2
      // Predicated region
      $region61: #{gin_forward.1} parent=5 // pred_check
        %p540 = pneg %p539
      $region62: #{gin_forward.1} parent=5 // pred_check_branch
        %542 = sbr.rel (%p540) target = $region64
      $region63: #{gin_forward.1} parent=5 // pred_region
        // Predicated region
        $region65: #{gin_forward.1} parent=63 // pred_check
          %p543 = pneg %p52
        $region66: #{gin_forward.1} parent=63 // pred_check_branch
          %545 = sbr.rel (%p543) target = $region68
        $region67: #{gin_forward.1} parent=63 // pred_region
          %s546 = sand.u32 %s42, 1
          %s547 = scalar_lea.sflag [#allocation3], %s546
          %s548 = sand.u32 %s42, 1
          %s549 = smul.addr %s548, 64
          %s550 = scalar_lea.vmem [#allocation2], %s549
          %s552 = ssub.s32 1024, 1024
          %553 = vsyncadd %s547, %s552
          %s554 = smul.addr %s32, 16
          %s555 = smul.addr %s554, 64
          %s556 = scalar_lea.hbm %s0, %s555
          %s557 = sshll.u32 %s550, 4
          %s558 = int_to_ptr.vmem [resolvable:$true] %s557
          %563 = dma.hbm_to_vmem [thread:$0]  %s556, 1024, %s558, %s547, 64, 64, 4
        $region68: #{gin_forward.1} parent=63 // pred_fallthru
          _
        // Predicated region
        $region69: #{gin_forward.1} parent=63 // pred_check
          %p564 = pneg %p78
        $region70: #{gin_forward.1} parent=63 // pred_check_branch
          %566 = sbr.rel (%p564) target = $region72
        $region71: #{gin_forward.1} parent=63 // pred_region
          %p567 = scmp.lt.s32.totalorder %s32, 1
          %s568 = scalar_select %p567, %s32, 1
          %s569 = smul.addr %s568, 16
          %s570 = smul.addr %s569, 8
          %s571 = scalar_lea.vmem %s1, %s570
        $region72: #{gin_forward.1} parent=63 // pred_fallthru
          _
        // Predicated region
        $region73: #{gin_forward.1} parent=63 // pred_check
          %p572 = pneg %p104
        $region74: #{gin_forward.1} parent=63 // pred_check_branch
          %574 = sbr.rel (%p572) target = $region76
        $region75: #{gin_forward.1} parent=63 // pred_region
          %p575 = scmp.lt.s32.totalorder %s32, 1
          %s576 = scalar_select %p575, %s32, 1
          %s577 = smul.addr %s576, 8
          %s578 = scalar_lea.vmem %s2, %s577
        $region76: #{gin_forward.1} parent=63 // pred_fallthru
          _
        // Predicated region
        $region77: #{gin_forward.1} parent=63 // pred_check
          %p579 = pneg %p130
        $region78: #{gin_forward.1} parent=63 // pred_check_branch
          %581 = sbr.rel (%p579) target = $region80
        $region79: #{gin_forward.1} parent=63 // pred_region
          %p582 = scmp.lt.s32.totalorder %s32, 1
          %s583 = scalar_select %p582, %s32, 1
          %s584 = smul.addr %s583, 16
          %s585 = smul.addr %s584, 8
          %s586 = scalar_lea.vmem %s3, %s585
        $region80: #{gin_forward.1} parent=63 // pred_fallthru
          _
        // Predicated region
        $region81: #{gin_forward.1} parent=63 // pred_check
          %p587 = pneg %p156
        $region82: #{gin_forward.1} parent=63 // pred_check_branch
          %589 = sbr.rel (%p587) target = $region84
        $region83: #{gin_forward.1} parent=63 // pred_region
          %s590 = sand.u32 %s32, 1
          %s591 = scalar_lea.sflag [#allocation6], %s590
          %s592 = sand.u32 %s146, 1
          %s593 = smul.addr %s592, 8
          %s594 = scalar_lea.vmem [#allocation5], %s593
          %s596 = ssub.s32 128, 128
          %597 = vsyncadd %s591, %s596
          %s598 = smul.addr %s32, 128
          %s599 = scalar_lea.hbm %s4, %s598
          %s601 = sshll.u32 %s594, 4
          %s602 = int_to_ptr.vmem [resolvable:$true] %s601
          %604 = dma.hbm_to_vmem [thread:$0]  %s599, 128, %s602, %s591
        $region84: #{gin_forward.1} parent=63 // pred_fallthru
          _
      $region64: #{gin_forward.1} parent=5 // pred_fallthru
        _
      %p605 = scmp.le.s32.totalorder 1, %s32
      %p606 = scmp.lt.s32.totalorder %s32, 3
      %p607 = pnand %p605, %p606
      %p608 = pneg %p607
      // Predicated region
      $region85: #{gin_forward.1} parent=5 // pred_check
        _
      $region86: #{gin_forward.1} parent=5 // pred_check_branch
        %610 = sbr.rel (%p607) target = $region88
      $region87: #{gin_forward.1} parent=5 // pred_region
        %s611 = ssub.s32 %s32, 1
        %s612 = sand.u32 %s45, 1
        %s613 = scalar_lea.sflag [#allocation3], %s612
        %s614 = sand.u32 %s45, 1
        %s615 = smul.addr %s614, 64
        %s616 = scalar_lea.vmem [#allocation2], %s615
        // Predicated region
        $region89: #{gin_forward.1} parent=87 // pred_check
          %p617 = pneg %p58
        $region90: #{gin_forward.1} parent=87 // pred_check_branch
          %619 = sbr.rel (%p617) target = $region92
        $region91: #{gin_forward.1} parent=87 // pred_region
          %620 = dma.done %s613, 1024
        $region92: #{gin_forward.1} parent=87 // pred_fallthru
          _
        %s621 = sand.u32 %s37, 1
        %s622 = scalar_lea.sflag [#allocation6], %s621
        %s623 = sand.u32 %s149, 1
        %s624 = smul.addr %s623, 8
        %s625 = scalar_lea.vmem [#allocation5], %s624
        // Predicated region
        $region93: #{gin_forward.1} parent=87 // pred_check
          %p626 = pneg %p162
        $region94: #{gin_forward.1} parent=87 // pred_check_branch
          %628 = sbr.rel (%p626) target = $region96
        $region95: #{gin_forward.1} parent=87 // pred_region
          %629 = dma.done %s622, 128
        $region96: #{gin_forward.1} parent=87 // pred_fallthru
          _
        // Predicated region
        $region97: #{gin_forward.1} parent=87 // pred_check
          %p630 = pneg %p183
        $region98: #{gin_forward.1} parent=87 // pred_check_branch
          %632 = sbr.rel (%p630) target = $region100
        $region99: #{gin_forward.1} parent=87 // pred_region
          %633 = dma.done [#allocation4], 16
        $region100: #{gin_forward.1} parent=87 // pred_fallthru
          _
        // Predicated region
        $region101: #{gin_forward.1} parent=87 // pred_check
          %p634 = pneg %p204
        $region102: #{gin_forward.1} parent=87 // pred_check_branch
          %636 = sbr.rel (%p634) target = $region104
        $region103: #{gin_forward.1} parent=87 // pred_region
          %637 = dma.done [#allocation6], 2048
        $region104: #{gin_forward.1} parent=87 // pred_fallthru
          _
        // Predicated region
        $region105: #{gin_forward.1} parent=87 // pred_check
          %p638 = pneg %p246
        $region106: #{gin_forward.1} parent=87 // pred_check_branch
          %640 = sbr.rel (%p638) target = $region108
        $region107: #{gin_forward.1} parent=87 // pred_region
          %641 = dma.done [#allocation10], 2048
        $region108: #{gin_forward.1} parent=87 // pred_fallthru
          _
        // Predicated region
        $region109: #{gin_forward.1} parent=87 // pred_check
          %p642 = pneg %p351
        $region110: #{gin_forward.1} parent=87 // pred_check_branch
          %644 = sbr.rel (%p642) target = $region112
        $region111: #{gin_forward.1} parent=87 // pred_region
          %645 = dma.done [#allocation10], 2048
        $region112: #{gin_forward.1} parent=87 // pred_fallthru
          _
        // Predicated region
        $region113: #{gin_forward.1} parent=87 // pred_check
          %p646 = pneg %p393
        $region114: #{gin_forward.1} parent=87 // pred_check_branch
          %648 = sbr.rel (%p646) target = $region116
        $region115: #{gin_forward.1} parent=87 // pred_region
          %649 = dma.done [#allocation13], 2048
        $region116: #{gin_forward.1} parent=87 // pred_fallthru
          _
        %650 = sfence
        %s651 = sand.u32 %s45, 1
        %s652 = scalar_lea.sflag [#allocation3], %s651
        %s653 = sand.u32 %s45, 1
        %s654 = smul.addr %s653, 64
        %s655 = scalar_lea.vmem [#allocation2], %s654
        %p656 = pneg %p58
        %p657 = pneg %p55
        %p658 = scmp.lt.s32.totalorder %s37, 1
        %s659 = scalar_select %p658, %s37, 1
        %s660 = smul.addr %s659, 16
        %s661 = smul.addr %s660, 8
        %s662 = scalar_lea.vmem %s1, %s661
        %p663 = pneg %p84
        %p664 = pneg %p81
        %p665 = scmp.lt.s32.totalorder %s37, 1
        %s666 = scalar_select %p665, %s37, 1
        %s667 = smul.addr %s666, 8
        %s668 = scalar_lea.vmem %s2, %s667
        %p669 = pneg %p110
        %p670 = pneg %p107
        %p671 = scmp.lt.s32.totalorder %s37, 1
        %s672 = scalar_select %p671, %s37, 1
        %s673 = smul.addr %s672, 16
        %s674 = smul.addr %s673, 8
        %s675 = scalar_lea.vmem %s3, %s674
        %p676 = pneg %p136
        %p677 = pneg %p133
        %s678 = sand.u32 %s37, 1
        %s679 = scalar_lea.sflag [#allocation6], %s678
        %s680 = sand.u32 %s149, 1
        %s681 = smul.addr %s680, 8
        %s682 = scalar_lea.vmem [#allocation5], %s681
        %p683 = pneg %p162
        %p684 = pneg %p159
        %p685 = pneg %p183
        %p686 = pneg %p180
        %p687 = pneg %p204
        %p688 = pneg %p201
        %p689 = pneg %p225
        %p690 = pneg %p222
        %p691 = pneg %p246
        %p692 = pneg %p243
        %p693 = pneg %p267
        %p694 = pneg %p264
        %p695 = pneg %p288
        %p696 = pneg %p285
        %p697 = pneg %p309
        %p698 = pneg %p306
        %p699 = pneg %p330
        %p700 = pneg %p327
        %p701 = pneg %p351
        %p702 = pneg %p348
        %p703 = pneg %p372
        %p704 = pneg %p369
        %p705 = pneg %p393
        %p706 = pneg %p390
        %p707 = pneg %p414
        %p708 = pneg %p411
        %p709 = pneg %p440
        %p710 = pneg %p437
        %p711 = scmp.lt.s32.totalorder %s37, 1
        %s712 = scalar_select %p711, %s37, 1
        %s713 = smul.addr %s712, 2
        %s714 = smul.addr %s713, 8
        %s715 = scalar_lea.vmem %s17, %s714
        %p716 = scmp.lt.s32.totalorder %s37, 1
        %s717 = scalar_select %p716, %s37, 1
        %s718 = smul.addr %s717, 16
        %s719 = smul.addr %s718, 8
        %s720 = scalar_lea.vmem %s1, %s719
        %p721 = scmp.lt.s32.totalorder %s37, 1
        %s722 = scalar_select %p721, %s37, 1
        %s723 = smul.addr %s722, 8
        %s724 = scalar_lea.vmem %s2, %s723
        %p725 = scmp.lt.s32.totalorder %s37, 1
        %s726 = scalar_select %p725, %s37, 1
        %s727 = smul.addr %s726, 16
        %s728 = smul.addr %s727, 8
        %s729 = scalar_lea.vmem %s3, %s728
        %p730 = scmp.lt.s32.totalorder %s37, 1
        %s731 = scalar_select %p730, %s37, 1
        %s732 = smul.addr %s731, 2
        %s733 = smul.addr %s732, 8
        %s734 = scalar_lea.vmem %s17, %s733
        %v736 = vld [vmem:[%s616] sm:$0xf]
        %v737 = vld [vmem:[%s616 + $0x4] sm:$0xf]
        %v738 = vld [vmem:[%s616 + $0x8] sm:$0xf]
        %v739 = vld [vmem:[%s616 + $0xc] sm:$0xf]
        %v740 = vld [vmem:[%s616 + $0x10] sm:$0xf]
        %v741 = vld [vmem:[%s616 + $0x14] sm:$0xf]
        %v742 = vld [vmem:[%s616 + $0x18] sm:$0xf]
        %v743 = vld [vmem:[%s616 + $0x1c] sm:$0xf]
        %v744 = vld [vmem:[%s616 + $0x20] sm:$0xf]
        %v745 = vld [vmem:[%s616 + $0x24] sm:$0xf]
        %v746 = vld [vmem:[%s616 + $0x28] sm:$0xf]
        %v747 = vld [vmem:[%s616 + $0x2c] sm:$0xf]
        %v748 = vld [vmem:[%s616 + $0x30] sm:$0xf]
        %v749 = vld [vmem:[%s616 + $0x34] sm:$0xf]
        %v750 = vld [vmem:[%s616 + $0x38] sm:$0xf]
        %v751 = vld [vmem:[%s616 + $0x3c] sm:$0xf]
        %v752 = vld [vmem:[%s720] sm:$0xff]
        %v753 = vld [vmem:[%s720 + $0x8] sm:$0xff]
        %v754 = vld [vmem:[%s720 + $0x10] sm:$0xff]
        %v755 = vld [vmem:[%s720 + $0x18] sm:$0xff]
        %v756 = vld [vmem:[%s720 + $0x20] sm:$0xff]
        %v757 = vld [vmem:[%s720 + $0x28] sm:$0xff]
        %v758 = vld [vmem:[%s720 + $0x30] sm:$0xff]
        %v759 = vld [vmem:[%s720 + $0x38] sm:$0xff]
        %v760 = vld [vmem:[%s720 + $0x40] sm:$0xff]
        %v761 = vld [vmem:[%s720 + $0x48] sm:$0xff]
        %v762 = vld [vmem:[%s720 + $0x50] sm:$0xff]
        %v763 = vld [vmem:[%s720 + $0x58] sm:$0xff]
        %v764 = vld [vmem:[%s720 + $0x60] sm:$0xff]
        %v765 = vld [vmem:[%s720 + $0x68] sm:$0xff]
        %v766 = vld [vmem:[%s720 + $0x70] sm:$0xff]
        %v767 = vld [vmem:[%s720 + $0x78] sm:$0xff]
        %v768 = vld [vmem:[%s724] sm:$0xff]
        %v769 = vld [vmem:[%s729] sm:$0xff]
        %v770 = vld [vmem:[%s729 + $0x8] sm:$0xff]
        %v771 = vld [vmem:[%s729 + $0x10] sm:$0xff]
        %v772 = vld [vmem:[%s729 + $0x18] sm:$0xff]
        %v773 = vld [vmem:[%s729 + $0x20] sm:$0xff]
        %v774 = vld [vmem:[%s729 + $0x28] sm:$0xff]
        %v775 = vld [vmem:[%s729 + $0x30] sm:$0xff]
        %v776 = vld [vmem:[%s729 + $0x38] sm:$0xff]
        %v777 = vld [vmem:[%s729 + $0x40] sm:$0xff]
        %v778 = vld [vmem:[%s729 + $0x48] sm:$0xff]
        %v779 = vld [vmem:[%s729 + $0x50] sm:$0xff]
        %v780 = vld [vmem:[%s729 + $0x58] sm:$0xff]
        %v781 = vld [vmem:[%s729 + $0x60] sm:$0xff]
        %v782 = vld [vmem:[%s729 + $0x68] sm:$0xff]
        %v783 = vld [vmem:[%s729 + $0x70] sm:$0xff]
        %v784 = vld [vmem:[%s729 + $0x78] sm:$0xff]
        %v785 = vld [vmem:[%s625] sm:$0xff]
        %s786 = sld [smem:[#allocation7]]
        %s787 = sadd.f32 %s786, 1.0
        %v788 = vpack.c.bf16 %v753, %v752
        %v789 = vpack.c.bf16 %v755, %v754
        %v790 = vpack.c.bf16 %v757, %v756
        %v791 = vpack.c.bf16 %v759, %v758
        %v792 = vpack.c.bf16 %v761, %v760
        %v793 = vpack.c.bf16 %v763, %v762
        %v794 = vpack.c.bf16 %v765, %v764
        %v795 = vpack.c.bf16 %v767, %v766
        %v796 = vstv %s787
        %v797 = vmul.f32 %v796, %v752
        %v798 = vmul.f32 %v796, %v753
        %v799 = vmul.f32 %v796, %v754
        %v800 = vmul.f32 %v796, %v755
        %v801 = vmul.f32 %v796, %v756
        %v802 = vmul.f32 %v796, %v757
        %v803 = vmul.f32 %v796, %v758
        %v804 = vmul.f32 %v796, %v759
        %v805 = vmul.f32 %v796, %v760
        %v806 = vmul.f32 %v796, %v761
        %v807 = vmul.f32 %v796, %v762
        %v808 = vmul.f32 %v796, %v763
        %v809 = vmul.f32 %v796, %v764
        %v810 = vmul.f32 %v796, %v765
        %v811 = vmul.f32 %v796, %v766
        %v812 = vmul.f32 %v796, %v767
        %v829 = vunpack.c.l.b16 %v736
        %v830 = vunpack.c.l.b16 %v737
        %v831 = vunpack.c.l.b16 %v738
        %v832 = vunpack.c.l.b16 %v739
        %v833 = vunpack.c.l.b16 %v740
        %v834 = vunpack.c.l.b16 %v741
        %v835 = vunpack.c.l.b16 %v742
        %v836 = vunpack.c.l.b16 %v743
        %v837 = vunpack.c.l.b16 %v744
        %v838 = vunpack.c.l.b16 %v745
        %v839 = vunpack.c.l.b16 %v746
        %v840 = vunpack.c.l.b16 %v747
        %v841 = vunpack.c.l.b16 %v748
        %v842 = vunpack.c.l.b16 %v749
        %v843 = vunpack.c.l.b16 %v750
        %v844 = vunpack.c.l.b16 %v751
        %v845 = vpack.c.b16 %v830, %v829
        %v846 = vpack.c.b16 %v832, %v831
        %v847 = vpack.c.b16 %v834, %v833
        %v848 = vpack.c.b16 %v836, %v835
        %v849 = vpack.c.b16 %v838, %v837
        %v850 = vpack.c.b16 %v840, %v839
        %v851 = vpack.c.b16 %v842, %v841
        %v852 = vpack.c.b16 %v844, %v843
        %861 = vmatprep.subr.bf16.mxu0 0
        %862 = vmatpush1.bf16.msra.mxu0 %v788
        %863 = vmatprep.subr.bf16.mxu0 0
        %864 = vmatpush1.bf16.msra.mxu0 %v789
        %865 = vmatprep.subr.bf16.mxu0 0
        %866 = vmatpush1.bf16.msra.mxu0 %v790
        %867 = vmatprep.subr.bf16.mxu0 0
        %868 = vmatpush1.bf16.msra.mxu0 %v791
        %869 = vmatprep.subr.bf16.mxu0 0
        %870 = vmatpush1.bf16.msra.mxu0 %v792
        %871 = vmatprep.subr.bf16.mxu0 0
        %872 = vmatpush1.bf16.msra.mxu0 %v793
        %873 = vmatprep.subr.bf16.mxu0 0
        %874 = vmatpush1.bf16.msra.mxu0 %v794
        %875 = vmatprep.subr.bf16.mxu0 0
        %876 = vmatpush1.bf16.msra.mxu0 %v795
        %877 = vmatprep.subr.bf16.mxu0 0
        %878 = vmatpush1.bf16.msra.mxu0 0
        %879 = vmatprep.subr.bf16.mxu0 0
        %880 = vmatpush1.bf16.msra.mxu0 0
        %881 = vmatprep.subr.bf16.mxu0 0
        %882 = vmatpush1.bf16.msra.mxu0 0
        %883 = vmatprep.subr.bf16.mxu0 0
        %884 = vmatpush1.bf16.msra.mxu0 0
        %885 = vmatprep.subr.bf16.mxu0 0
        %886 = vmatpush1.bf16.msra.mxu0 0
        %887 = vmatprep.subr.bf16.mxu0 0
        %888 = vmatpush1.bf16.msra.mxu0 0
        %889 = vmatprep.subr.bf16.mxu0 0
        %890 = vmatpush1.bf16.msra.mxu0 0
        %891 = vmatprep.subr.bf16.mxu0 0
        %892 = vmatpush1.bf16.msra.mxu0 0
        %893 = vmatprep.mubr.bf16.mxu0 0
        %894 = vmatmul.mubr.bf16.gmra.mrb[0].mxu0 %v845
        %v895 = vpop.f32.mrb[0].mxu0
        %v896 = vadd.f32 %v797, %v895
        %v897 = vpop.f32.mrb[0].mxu0
        %v898 = vpop.f32.mrb[0].mxu0
        %v899 = vadd.f32 %v798, %v898
        %v900 = vpop.f32.mrb[0].mxu0
        %901 = vmatprep.mubr.bf16.mxu0 0
        %902 = vmatmul.mubr.bf16.gmra.mrb[0].mxu0 %v846
        %v903 = vpop.f32.mrb[0].mxu0
        %v904 = vadd.f32 %v799, %v903
        %v905 = vpop.f32.mrb[0].mxu0
        %v906 = vpop.f32.mrb[0].mxu0
        %v907 = vadd.f32 %v800, %v906
        %v908 = vpop.f32.mrb[0].mxu0
        %909 = vmatprep.mubr.bf16.mxu0 0
        %910 = vmatmul.mubr.bf16.gmra.mrb[0].mxu0 %v847
        %v911 = vpop.f32.mrb[0].mxu0
        %v912 = vadd.f32 %v801, %v911
        %v913 = vpop.f32.mrb[0].mxu0
        %v914 = vpop.f32.mrb[0].mxu0
        %v915 = vadd.f32 %v802, %v914
        %v916 = vpop.f32.mrb[0].mxu0
        %917 = vmatprep.mubr.bf16.mxu0 0
        %918 = vmatmul.mubr.bf16.gmra.mrb[0].mxu0 %v848
        %v919 = vpop.f32.mrb[0].mxu0
        %v920 = vadd.f32 %v803, %v919
        %v921 = vpop.f32.mrb[0].mxu0
        %v922 = vpop.f32.mrb[0].mxu0
        %v923 = vadd.f32 %v804, %v922
        %v924 = vpop.f32.mrb[0].mxu0
        %925 = vmatprep.mubr.bf16.mxu0 0
        %926 = vmatmul.mubr.bf16.gmra.mrb[0].mxu0 %v849
        %v927 = vpop.f32.mrb[0].mxu0
        %v928 = vadd.f32 %v805, %v927
        %v929 = vpop.f32.mrb[0].mxu0
        %v930 = vpop.f32.mrb[0].mxu0
        %v931 = vadd.f32 %v806, %v930
        %v932 = vpop.f32.mrb[0].mxu0
        %933 = vmatprep.mubr.bf16.mxu0 0
        %934 = vmatmul.mubr.bf16.gmra.mrb[0].mxu0 %v850
        %v935 = vpop.f32.mrb[0].mxu0
        %v936 = vadd.f32 %v807, %v935
        %v937 = vpop.f32.mrb[0].mxu0
        %v938 = vpop.f32.mrb[0].mxu0
        %v939 = vadd.f32 %v808, %v938
        %v940 = vpop.f32.mrb[0].mxu0
        %941 = vmatprep.mubr.bf16.mxu0 0
        %942 = vmatmul.mubr.bf16.gmra.mrb[0].mxu0 %v851
        %v943 = vpop.f32.mrb[0].mxu0
        %v944 = vadd.f32 %v809, %v943
        %v945 = vpop.f32.mrb[0].mxu0
        %v946 = vpop.f32.mrb[0].mxu0
        %v947 = vadd.f32 %v810, %v946
        %v948 = vpop.f32.mrb[0].mxu0
        %949 = vmatprep.mubr.bf16.mxu0 0
        %950 = vmatmul.mubr.bf16.gmra.mrb[0].mxu0 %v852
        %v951 = vpop.f32.mrb[0].mxu0
        %v952 = vadd.f32 %v811, %v951
        %v953 = vpop.f32.mrb[0].mxu0
        %v954 = vpop.f32.mrb[0].mxu0
        %v955 = vadd.f32 %v812, %v954
        %v956 = vpop.f32.mrb[0].mxu0
        %957 = vdwg.mxu0
        %v958 = vpack.c.bf16 %v899, %v896
        %v959 = vpack.c.bf16 %v907, %v904
        %v960 = vpack.c.bf16 %v915, %v912
        %v961 = vpack.c.bf16 %v923, %v920
        %v962 = vpack.c.bf16 %v931, %v928
        %v963 = vpack.c.bf16 %v939, %v936
        %v964 = vpack.c.bf16 %v947, %v944
        %v965 = vpack.c.bf16 %v955, %v952
        %v966 = vld [vmem:[#allocation8] sm:$0xf]
        %v967 = vld [vmem:[#allocation8 + $0x4] sm:$0xf]
        %v968 = vld [vmem:[#allocation8 + $0x8] sm:$0xf]
        %v969 = vld [vmem:[#allocation8 + $0xc] sm:$0xf]
        %v970 = vld [vmem:[#allocation8 + $0x10] sm:$0xf]
        %v971 = vld [vmem:[#allocation8 + $0x14] sm:$0xf]
        %v972 = vld [vmem:[#allocation8 + $0x18] sm:$0xf]
        %v973 = vld [vmem:[#allocation8 + $0x1c] sm:$0xf]
        %v974 = vld [vmem:[#allocation8 + $0x20] sm:$0xf]
        %v975 = vld [vmem:[#allocation8 + $0x24] sm:$0xf]
        %v976 = vld [vmem:[#allocation8 + $0x28] sm:$0xf]
        %v977 = vld [vmem:[#allocation8 + $0x2c] sm:$0xf]
        %v978 = vld [vmem:[#allocation8 + $0x30] sm:$0xf]
        %v979 = vld [vmem:[#allocation8 + $0x34] sm:$0xf]
        %v980 = vld [vmem:[#allocation8 + $0x38] sm:$0xf]
        %v981 = vld [vmem:[#allocation8 + $0x3c] sm:$0xf]
        %v982 = vld [vmem:[%s7] sm:$0x1]
        %v984 = vlaneseq
        %v985 = vshrl.u32 %v984, 7
        %v986 = vsub.s32 0, %v985
        %v987 = vrot.slane %v982, %v986
        %v1005 = vunpack.c.l.b16 %v966
        %v1006 = vunpack.c.l.b16 %v967
        %v1007 = vunpack.c.l.b16 %v968
        %v1008 = vunpack.c.l.b16 %v969
        %v1009 = vunpack.c.l.b16 %v970
        %v1010 = vunpack.c.l.b16 %v971
        %v1011 = vunpack.c.l.b16 %v972
        %v1012 = vunpack.c.l.b16 %v973
        %v1013 = vunpack.c.l.b16 %v974
        %v1014 = vunpack.c.l.b16 %v975
        %v1015 = vunpack.c.l.b16 %v976
        %v1016 = vunpack.c.l.b16 %v977
        %v1017 = vunpack.c.l.b16 %v978
        %v1018 = vunpack.c.l.b16 %v979
        %v1019 = vunpack.c.l.b16 %v980
        %v1020 = vunpack.c.l.b16 %v981
        %v1021 = vpack.c.b16 %v1006, %v1005
        %v1022 = vpack.c.b16 %v1008, %v1007
        %v1023 = vpack.c.b16 %v1010, %v1009
        %v1024 = vpack.c.b16 %v1012, %v1011
        %v1025 = vpack.c.b16 %v1014, %v1013
        %v1026 = vpack.c.b16 %v1016, %v1015
        %v1027 = vpack.c.b16 %v1018, %v1017
        %v1028 = vpack.c.b16 %v1020, %v1019
        %1037 = vmatprep.subr.bf16.mxu0 0
        %1038 = vmatpush1.bf16.msra.mxu0 %v1021
        %1039 = vmatprep.subr.bf16.mxu0 0
        %1040 = vmatpush1.bf16.msra.mxu0 %v1022
        %1041 = vmatprep.subr.bf16.mxu0 0
        %1042 = vmatpush1.bf16.msra.mxu0 %v1023
        %1043 = vmatprep.subr.bf16.mxu0 0
        %1044 = vmatpush1.bf16.msra.mxu0 %v1024
        %1045 = vmatprep.subr.bf16.mxu0 0
        %1046 = vmatpush1.bf16.msra.mxu0 %v1025
        %1047 = vmatprep.subr.bf16.mxu0 0
        %1048 = vmatpush1.bf16.msra.mxu0 %v1026
        %1049 = vmatprep.subr.bf16.mxu0 0
        %1050 = vmatpush1.bf16.msra.mxu0 %v1027
        %1051 = vmatprep.subr.bf16.mxu0 0
        %1052 = vmatpush1.bf16.msra.mxu0 %v1028
        %1053 = vmatprep.subr.bf16.mxu0 0
        %1054 = vmatpush1.bf16.msra.mxu0 0
        %1055 = vmatprep.subr.bf16.mxu0 0
        %1056 = vmatpush1.bf16.msra.mxu0 0
        %1057 = vmatprep.subr.bf16.mxu0 0
        %1058 = vmatpush1.bf16.msra.mxu0 0
        %1059 = vmatprep.subr.bf16.mxu0 0
        %1060 = vmatpush1.bf16.msra.mxu0 0
        %1061 = vmatprep.subr.bf16.mxu0 0
        %1062 = vmatpush1.bf16.msra.mxu0 0
        %1063 = vmatprep.subr.bf16.mxu0 0
        %1064 = vmatpush1.bf16.msra.mxu0 0
        %1065 = vmatprep.subr.bf16.mxu0 0
        %1066 = vmatpush1.bf16.msra.mxu0 0
        %1067 = vmatprep.subr.bf16.mxu0 0
        %1068 = vmatpush1.bf16.msra.mxu0 0
        %1069 = vmatprep.mubr.bf16.mxu0 0
        %1070 = vmatmul.mubr.bf16.gmra.mrb[0].mxu0 %v958
        %v1071 = vpop.f32.mrb[0].mxu0
        %v1072 = vadd.f32 %v987, %v1071
        %v1073 = vpop.f32.mrb[0].mxu0
        %v1074 = vpop.f32.mrb[0].mxu0
        %v1075 = vadd.f32 %v987, %v1074
        %v1076 = vpop.f32.mrb[0].mxu0
        %1077 = vmatprep.mubr.bf16.mxu0 0
        %1078 = vmatmul.mubr.bf16.gmra.mrb[0].mxu0 %v959
        %v1079 = vpop.f32.mrb[0].mxu0
        %v1080 = vadd.f32 %v987, %v1079
        %v1081 = vpop.f32.mrb[0].mxu0
        %v1082 = vpop.f32.mrb[0].mxu0
        %v1083 = vadd.f32 %v987, %v1082
        %v1084 = vpop.f32.mrb[0].mxu0
        %1085 = vmatprep.mubr.bf16.mxu0 0
        %1086 = vmatmul.mubr.bf16.gmra.mrb[0].mxu0 %v960
        %v1087 = vpop.f32.mrb[0].mxu0
        %v1088 = vadd.f32 %v987, %v1087
        %v1089 = vpop.f32.mrb[0].mxu0
        %v1090 = vpop.f32.mrb[0].mxu0
        %v1091 = vadd.f32 %v987, %v1090
        %v1092 = vpop.f32.mrb[0].mxu0
        %1093 = vmatprep.mubr.bf16.mxu0 0
        %1094 = vmatmul.mubr.bf16.gmra.mrb[0].mxu0 %v961
        %v1095 = vpop.f32.mrb[0].mxu0
        %v1096 = vadd.f32 %v987, %v1095
        %v1097 = vpop.f32.mrb[0].mxu0
        %v1098 = vpop.f32.mrb[0].mxu0
        %v1099 = vadd.f32 %v987, %v1098
        %v1100 = vpop.f32.mrb[0].mxu0
        %1101 = vmatprep.mubr.bf16.mxu0 0
        %1102 = vmatmul.mubr.bf16.gmra.mrb[0].mxu0 %v962
        %v1103 = vpop.f32.mrb[0].mxu0
        %v1104 = vadd.f32 %v987, %v1103
        %v1105 = vpop.f32.mrb[0].mxu0
        %v1106 = vpop.f32.mrb[0].mxu0
        %v1107 = vadd.f32 %v987, %v1106
        %v1108 = vpop.f32.mrb[0].mxu0
        %1109 = vmatprep.mubr.bf16.mxu0 0
        %1110 = vmatmul.mubr.bf16.gmra.mrb[0].mxu0 %v963
        %v1111 = vpop.f32.mrb[0].mxu0
        %v1112 = vadd.f32 %v987, %v1111
        %v1113 = vpop.f32.mrb[0].mxu0
        %v1114 = vpop.f32.mrb[0].mxu0
        %v1115 = vadd.f32 %v987, %v1114
        %v1116 = vpop.f32.mrb[0].mxu0
        %1117 = vmatprep.mubr.bf16.mxu0 0
        %1118 = vmatmul.mubr.bf16.gmra.mrb[0].mxu0 %v964
        %v1119 = vpop.f32.mrb[0].mxu0
        %v1120 = vadd.f32 %v987, %v1119
        %v1121 = vpop.f32.mrb[0].mxu0
        %v1122 = vpop.f32.mrb[0].mxu0
        %v1123 = vadd.f32 %v987, %v1122
        %v1124 = vpop.f32.mrb[0].mxu0
        %1125 = vmatprep.mubr.bf16.mxu0 0
        %1126 = vmatmul.mubr.bf16.gmra.mrb[0].mxu0 %v965
        %v1127 = vpop.f32.mrb[0].mxu0
        %v1128 = vadd.f32 %v987, %v1127
        %v1129 = vpop.f32.mrb[0].mxu0
        %v1130 = vpop.f32.mrb[0].mxu0
        %v1131 = vadd.f32 %v987, %v1130
        %v1132 = vpop.f32.mrb[0].mxu0
        %1133 = vdwg.mxu0
        %v1134 = vmax.f32 %v1072, 0.0
        %v1135 = vmax.f32 %v1075, 0.0
        %v1136 = vmax.f32 %v1080, 0.0
        %v1137 = vmax.f32 %v1083, 0.0
        %v1138 = vmax.f32 %v1088, 0.0
        %v1139 = vmax.f32 %v1091, 0.0
        %v1140 = vmax.f32 %v1096, 0.0
        %v1141 = vmax.f32 %v1099, 0.0
        %v1142 = vmax.f32 %v1104, 0.0
        %v1143 = vmax.f32 %v1107, 0.0
        %v1144 = vmax.f32 %v1112, 0.0
        %v1145 = vmax.f32 %v1115, 0.0
        %v1146 = vmax.f32 %v1120, 0.0
        %v1147 = vmax.f32 %v1123, 0.0
        %v1148 = vmax.f32 %v1128, 0.0
        %v1149 = vmax.f32 %v1131, 0.0
        %v1150 = vpack.c.bf16 %v1135, %v1134
        %v1151 = vpack.c.bf16 %v1137, %v1136
        %v1152 = vpack.c.bf16 %v1139, %v1138
        %v1153 = vpack.c.bf16 %v1141, %v1140
        %v1154 = vpack.c.bf16 %v1143, %v1142
        %v1155 = vpack.c.bf16 %v1145, %v1144
        %v1156 = vpack.c.bf16 %v1147, %v1146
        %v1157 = vpack.c.bf16 %v1149, %v1148
        %v1158 = vld [vmem:[#allocation9] sm:$0xf]
        %v1159 = vld [vmem:[#allocation9 + $0x4] sm:$0xf]
        %v1160 = vld [vmem:[#allocation9 + $0x8] sm:$0xf]
        %v1161 = vld [vmem:[#allocation9 + $0xc] sm:$0xf]
        %v1162 = vld [vmem:[#allocation9 + $0x10] sm:$0xf]
        %v1163 = vld [vmem:[#allocation9 + $0x14] sm:$0xf]
        %v1164 = vld [vmem:[#allocation9 + $0x18] sm:$0xf]
        %v1165 = vld [vmem:[#allocation9 + $0x1c] sm:$0xf]
        %v1166 = vld [vmem:[#allocation9 + $0x20] sm:$0xf]
        %v1167 = vld [vmem:[#allocation9 + $0x24] sm:$0xf]
        %v1168 = vld [vmem:[#allocation9 + $0x28] sm:$0xf]
        %v1169 = vld [vmem:[#allocation9 + $0x2c] sm:$0xf]
        %v1170 = vld [vmem:[#allocation9 + $0x30] sm:$0xf]
        %v1171 = vld [vmem:[#allocation9 + $0x34] sm:$0xf]
        %v1172 = vld [vmem:[#allocation9 + $0x38] sm:$0xf]
        %v1173 = vld [vmem:[#allocation9 + $0x3c] sm:$0xf]
        %v1174 = vld [vmem:[%s9] sm:$0x1]
        %v1176 = vlaneseq
        %v1177 = vshrl.u32 %v1176, 7
        %v1178 = vsub.s32 0, %v1177
        %v1179 = vrot.slane %v1174, %v1178
        %v1197 = vunpack.c.l.b16 %v1158
        %v1198 = vunpack.c.l.b16 %v1159
        %v1199 = vunpack.c.l.b16 %v1160
        %v1200 = vunpack.c.l.b16 %v1161
        %v1201 = vunpack.c.l.b16 %v1162
        %v1202 = vunpack.c.l.b16 %v1163
        %v1203 = vunpack.c.l.b16 %v1164
        %v1204 = vunpack.c.l.b16 %v1165
        %v1205 = vunpack.c.l.b16 %v1166
        %v1206 = vunpack.c.l.b16 %v1167
        %v1207 = vunpack.c.l.b16 %v1168
        %v1208 = vunpack.c.l.b16 %v1169
        %v1209 = vunpack.c.l.b16 %v1170
        %v1210 = vunpack.c.l.b16 %v1171
        %v1211 = vunpack.c.l.b16 %v1172
        %v1212 = vunpack.c.l.b16 %v1173
        %v1213 = vpack.c.b16 %v1198, %v1197
        %v1214 = vpack.c.b16 %v1200, %v1199
        %v1215 = vpack.c.b16 %v1202, %v1201
        %v1216 = vpack.c.b16 %v1204, %v1203
        %v1217 = vpack.c.b16 %v1206, %v1205
        %v1218 = vpack.c.b16 %v1208, %v1207
        %v1219 = vpack.c.b16 %v1210, %v1209
        %v1220 = vpack.c.b16 %v1212, %v1211
        %1229 = vmatprep.subr.bf16.mxu0 0
        %1230 = vmatpush1.bf16.msra.mxu0 %v1213
        %1231 = vmatprep.subr.bf16.mxu0 0
        %1232 = vmatpush1.bf16.msra.mxu0 %v1214
        %1233 = vmatprep.subr.bf16.mxu0 0
        %1234 = vmatpush1.bf16.msra.mxu0 %v1215
        %1235 = vmatprep.subr.bf16.mxu0 0
        %1236 = vmatpush1.bf16.msra.mxu0 %v1216
        %1237 = vmatprep.subr.bf16.mxu0 0
        %1238 = vmatpush1.bf16.msra.mxu0 %v1217
        %1239 = vmatprep.subr.bf16.mxu0 0
        %1240 = vmatpush1.bf16.msra.mxu0 %v1218
        %1241 = vmatprep.subr.bf16.mxu0 0
        %1242 = vmatpush1.bf16.msra.mxu0 %v1219
        %1243 = vmatprep.subr.bf16.mxu0 0
        %1244 = vmatpush1.bf16.msra.mxu0 %v1220
        %1245 = vmatprep.subr.bf16.mxu0 0
        %1246 = vmatpush1.bf16.msra.mxu0 0
        %1247 = vmatprep.subr.bf16.mxu0 0
        %1248 = vmatpush1.bf16.msra.mxu0 0
        %1249 = vmatprep.subr.bf16.mxu0 0
        %1250 = vmatpush1.bf16.msra.mxu0 0
        %1251 = vmatprep.subr.bf16.mxu0 0
        %1252 = vmatpush1.bf16.msra.mxu0 0
        %1253 = vmatprep.subr.bf16.mxu0 0
        %1254 = vmatpush1.bf16.msra.mxu0 0
        %1255 = vmatprep.subr.bf16.mxu0 0
        %1256 = vmatpush1.bf16.msra.mxu0 0
        %1257 = vmatprep.subr.bf16.mxu0 0
        %1258 = vmatpush1.bf16.msra.mxu0 0
        %1259 = vmatprep.subr.bf16.mxu0 0
        %1260 = vmatpush1.bf16.msra.mxu0 0
        %1261 = vmatprep.mubr.bf16.mxu0 0
        %1262 = vmatmul.mubr.bf16.gmra.mrb[0].mxu0 %v1150
        %v1263 = vpop.f32.mrb[0].mxu0
        %v1264 = vadd.f32 %v1179, %v1263
        %v1265 = vpop.f32.mrb[0].mxu0
        %v1266 = vpop.f32.mrb[0].mxu0
        %v1267 = vadd.f32 %v1179, %v1266
        %v1268 = vpop.f32.mrb[0].mxu0
        %1269 = vmatprep.mubr.bf16.mxu0 0
        %1270 = vmatmul.mubr.bf16.gmra.mrb[0].mxu0 %v1151
        %v1271 = vpop.f32.mrb[0].mxu0
        %v1272 = vadd.f32 %v1179, %v1271
        %v1273 = vpop.f32.mrb[0].mxu0
        %v1274 = vpop.f32.mrb[0].mxu0
        %v1275 = vadd.f32 %v1179, %v1274
        %v1276 = vpop.f32.mrb[0].mxu0
        %1277 = vmatprep.mubr.bf16.mxu0 0
        %1278 = vmatmul.mubr.bf16.gmra.mrb[0].mxu0 %v1152
        %v1279 = vpop.f32.mrb[0].mxu0
        %v1280 = vadd.f32 %v1179, %v1279
        %v1281 = vpop.f32.mrb[0].mxu0
        %v1282 = vpop.f32.mrb[0].mxu0
        %v1283 = vadd.f32 %v1179, %v1282
        %v1284 = vpop.f32.mrb[0].mxu0
        %1285 = vmatprep.mubr.bf16.mxu0 0
        %1286 = vmatmul.mubr.bf16.gmra.mrb[0].mxu0 %v1153
        %v1287 = vpop.f32.mrb[0].mxu0
        %v1288 = vadd.f32 %v1179, %v1287
        %v1289 = vpop.f32.mrb[0].mxu0
        %v1290 = vpop.f32.mrb[0].mxu0
        %v1291 = vadd.f32 %v1179, %v1290
        %v1292 = vpop.f32.mrb[0].mxu0
        %1293 = vmatprep.mubr.bf16.mxu0 0
        %1294 = vmatmul.mubr.bf16.gmra.mrb[0].mxu0 %v1154
        %v1295 = vpop.f32.mrb[0].mxu0
        %v1296 = vadd.f32 %v1179, %v1295
        %v1297 = vpop.f32.mrb[0].mxu0
        %v1298 = vpop.f32.mrb[0].mxu0
        %v1299 = vadd.f32 %v1179, %v1298
        %v1300 = vpop.f32.mrb[0].mxu0
        %1301 = vmatprep.mubr.bf16.mxu0 0
        %1302 = vmatmul.mubr.bf16.gmra.mrb[0].mxu0 %v1155
        %v1303 = vpop.f32.mrb[0].mxu0
        %v1304 = vadd.f32 %v1179, %v1303
        %v1305 = vpop.f32.mrb[0].mxu0
        %v1306 = vpop.f32.mrb[0].mxu0
        %v1307 = vadd.f32 %v1179, %v1306
        %v1308 = vpop.f32.mrb[0].mxu0
        %1309 = vmatprep.mubr.bf16.mxu0 0
        %1310 = vmatmul.mubr.bf16.gmra.mrb[0].mxu0 %v1156
        %v1311 = vpop.f32.mrb[0].mxu0
        %v1312 = vadd.f32 %v1179, %v1311
        %v1313 = vpop.f32.mrb[0].mxu0
        %v1314 = vpop.f32.mrb[0].mxu0
        %v1315 = vadd.f32 %v1179, %v1314
        %v1316 = vpop.f32.mrb[0].mxu0
        %1317 = vmatprep.mubr.bf16.mxu0 0
        %1318 = vmatmul.mubr.bf16.gmra.mrb[0].mxu0 %v1157
        %v1319 = vpop.f32.mrb[0].mxu0
        %v1320 = vadd.f32 %v1179, %v1319
        %v1321 = vpop.f32.mrb[0].mxu0
        %v1322 = vpop.f32.mrb[0].mxu0
        %v1323 = vadd.f32 %v1179, %v1322
        %v1324 = vpop.f32.mrb[0].mxu0
        %1325 = vdwg.mxu0
        %1326 = vmatprep.subr.mxu0 0.0
        %1327 = vmatpush1.msra.mxu0 %v1264
        %1328 = vmatprep.subr.mxu0 0.0
        %1329 = vmatpush1.msra.mxu0 %v1267
        %1330 = vmatprep.subr.mxu0 0.0
        %1331 = vmatpush1.msra.mxu0 %v1272
        %1332 = vmatprep.subr.mxu0 0.0
        %1333 = vmatpush1.msra.mxu0 %v1275
        %1334 = vmatprep.subr.mxu0 0.0
        %1335 = vmatpush1.msra.mxu0 %v1280
        %1336 = vmatprep.subr.mxu0 0.0
        %1337 = vmatpush1.msra.mxu0 %v1283
        %1338 = vmatprep.subr.mxu0 0.0
        %1339 = vmatpush1.msra.mxu0 %v1288
        %1340 = vmatprep.subr.mxu0 0.0
        %1341 = vmatpush1.msra.mxu0 %v1291
        %1342 = vmatprep.subr.mxu0 0.0
        %1343 = vmatpush1.msra.mxu0 %v1296
        %1344 = vmatprep.subr.mxu0 0.0
        %1345 = vmatpush1.msra.mxu0 %v1299
        %1346 = vmatprep.subr.mxu0 0.0
        %1347 = vmatpush1.msra.mxu0 %v1304
        %1348 = vmatprep.subr.mxu0 0.0
        %1349 = vmatpush1.msra.mxu0 %v1307
        %1350 = vmatprep.subr.mxu0 0.0
        %1351 = vmatpush1.msra.mxu0 %v1312
        %1352 = vmatprep.subr.mxu0 0.0
        %1353 = vmatpush1.msra.mxu0 %v1315
        %1354 = vmatprep.subr.mxu0 0.0
        %1355 = vmatpush1.msra.mxu0 %v1320
        %1356 = vmatprep.subr.mxu0 0.0
        %1357 = vmatpush1.msra.mxu0 %v1323
        %1358 = vmatprep.subr.mxu0 0.0
        %1359 = vmatpush1.msra.mxu0 0.0
        %1360 = vmatprep.subr.mxu0 0.0
        %1361 = vmatpush1.msra.mxu0 0.0
        %1362 = vmatprep.subr.mxu0 0.0
        %1363 = vmatpush1.msra.mxu0 0.0
        %1364 = vmatprep.subr.mxu0 0.0
        %1365 = vmatpush1.msra.mxu0 0.0
        %1366 = vmatprep.subr.mxu0 0.0
        %1367 = vmatpush1.msra.mxu0 0.0
        %1368 = vmatprep.subr.mxu0 0.0
        %1369 = vmatpush1.msra.mxu0 0.0
        %1370 = vmatprep.subr.mxu0 0.0
        %1371 = vmatpush1.msra.mxu0 0.0
        %1372 = vmatprep.subr.mxu0 0.0
        %1373 = vmatpush1.msra.mxu0 0.0
        %1374 = vmatprep.subr.mxu0 0.0
        %1375 = vmatpush1.msra.mxu0 0.0
        %1376 = vmatprep.subr.mxu0 0.0
        %1377 = vmatpush1.msra.mxu0 0.0
        %1378 = vmatprep.subr.mxu0 0.0
        %1379 = vmatpush1.msra.mxu0 0.0
        %1380 = vmatprep.subr.mxu0 0.0
        %1381 = vmatpush1.msra.mxu0 0.0
        %1382 = vmatprep.subr.mxu0 0.0
        %1383 = vmatpush1.msra.mxu0 0.0
        %1384 = vmatprep.subr.mxu0 0.0
        %1385 = vmatpush1.msra.mxu0 0.0
        %1386 = vmatprep.subr.mxu0 0.0
        %1387 = vmatpush1.msra.mxu0 0.0
        %1388 = vmatprep.subr.mxu0 0.0
        %1389 = vmatpush1.msra.mxu0 0.0
        %1390 = vmatprep.mubr.f32.mxu0 0.0
        %1391 = vmatmul.mubr.f32.gmra.mrb[0].mxu0 %v768
        %v1392 = vpop.f32.mrb[0].mxu0
        %v1393 = vadd.f32 0.0, %v1392
        %v1394 = vpop.f32.mrb[0].mxu0
        %1395 = vdwg.mxu0
        %vm1396 = vcmask 64512
        %v1398 = vsel %vm1396, %v769, 0
        %v1401 = vsel %vm1396, %v770, 0
        %v1404 = vsel %vm1396, %v771, 0
        %v1407 = vsel %vm1396, %v772, 0
        %v1410 = vsel %vm1396, %v773, 0
        %v1413 = vsel %vm1396, %v774, 0
        %v1416 = vsel %vm1396, %v775, 0
        %v1419 = vsel %vm1396, %v776, 0
        %v1422 = vsel %vm1396, %v777, 0
        %v1425 = vsel %vm1396, %v778, 0
        %v1428 = vsel %vm1396, %v779, 0
        %v1431 = vsel %vm1396, %v780, 0
        %v1434 = vsel %vm1396, %v781, 0
        %v1437 = vsel %vm1396, %v782, 0
        %v1440 = vsel %vm1396, %v783, 0
        %v1443 = vsel %vm1396, %v784, 0
        %1445 = vmatprep.subr.mxu0 0.0
        %1446 = vmatpush1.msra.mxu0 %v1393
        %1447 = vmatprep.subr.mxu0 0.0
        %1448 = vmatpush1.msra.mxu0 0.0
        %1449 = vmatprep.subr.mxu0 0.0
        %1450 = vmatpush1.msra.mxu0 0.0
        %1451 = vmatprep.subr.mxu0 0.0
        %1452 = vmatpush1.msra.mxu0 0.0
        %1453 = vmatprep.subr.mxu0 0.0
        %1454 = vmatpush1.msra.mxu0 0.0
        %1455 = vmatprep.subr.mxu0 0.0
        %1456 = vmatpush1.msra.mxu0 0.0
        %1457 = vmatprep.subr.mxu0 0.0
        %1458 = vmatpush1.msra.mxu0 0.0
        %1459 = vmatprep.subr.mxu0 0.0
        %1460 = vmatpush1.msra.mxu0 0.0
        %1461 = vmatprep.subr.mxu0 0.0
        %1462 = vmatpush1.msra.mxu0 0.0
        %1463 = vmatprep.subr.mxu0 0.0
        %1464 = vmatpush1.msra.mxu0 0.0
        %1465 = vmatprep.subr.mxu0 0.0
        %1466 = vmatpush1.msra.mxu0 0.0
        %1467 = vmatprep.subr.mxu0 0.0
        %1468 = vmatpush1.msra.mxu0 0.0
        %1469 = vmatprep.subr.mxu0 0.0
        %1470 = vmatpush1.msra.mxu0 0.0
        %1471 = vmatprep.subr.mxu0 0.0
        %1472 = vmatpush1.msra.mxu0 0.0
        %1473 = vmatprep.subr.mxu0 0.0
        %1474 = vmatpush1.msra.mxu0 0.0
        %1475 = vmatprep.subr.mxu0 0.0
        %1476 = vmatpush1.msra.mxu0 0.0
        %1477 = vmatprep.subr.mxu0 0.0
        %1478 = vmatpush1.msra.mxu0 0.0
        %1479 = vmatprep.subr.mxu0 0.0
        %1480 = vmatpush1.msra.mxu0 0.0
        %1481 = vmatprep.subr.mxu0 0.0
        %1482 = vmatpush1.msra.mxu0 0.0
        %1483 = vmatprep.subr.mxu0 0.0
        %1484 = vmatpush1.msra.mxu0 0.0
        %1485 = vmatprep.subr.mxu0 0.0
        %1486 = vmatpush1.msra.mxu0 0.0
        %1487 = vmatprep.subr.mxu0 0.0
        %1488 = vmatpush1.msra.mxu0 0.0
        %1489 = vmatprep.subr.mxu0 0.0
        %1490 = vmatpush1.msra.mxu0 0.0
        %1491 = vmatprep.subr.mxu0 0.0
        %1492 = vmatpush1.msra.mxu0 0.0
        %1493 = vmatprep.subr.mxu0 0.0
        %1494 = vmatpush1.msra.mxu0 0.0
        %1495 = vmatprep.subr.mxu0 0.0
        %1496 = vmatpush1.msra.mxu0 0.0
        %1497 = vmatprep.subr.mxu0 0.0
        %1498 = vmatpush1.msra.mxu0 0.0
        %1499 = vmatprep.subr.mxu0 0.0
        %1500 = vmatpush1.msra.mxu0 0.0
        %1501 = vmatprep.subr.mxu0 0.0
        %1502 = vmatpush1.msra.mxu0 0.0
        %1503 = vmatprep.subr.mxu0 0.0
        %1504 = vmatpush1.msra.mxu0 0.0
        %1505 = vmatprep.subr.mxu0 0.0
        %1506 = vmatpush1.msra.mxu0 0.0
        %1507 = vmatprep.subr.mxu0 0.0
        %1508 = vmatpush1.msra.mxu0 0.0
        %1509 = vmatprep.mubr.f32.mxu0 0.0
        %1510 = vmatmul.mubr.f32.gmra.mrb[0].mxu0 %v1398
        %v1511 = vpop.f32.mrb[0].mxu0
        %v1512 = vadd.f32 0.0, %v1511
        %v1513 = vpop.f32.mrb[0].mxu0
        %1514 = vmatprep.mubr.f32.mxu0 0.0
        %1515 = vmatmul.mubr.f32.gmra.mrb[0].mxu0 %v1401
        %v1516 = vpop.f32.mrb[0].mxu0
        %v1517 = vadd.f32 0.0, %v1516
        %v1518 = vpop.f32.mrb[0].mxu0
        %1519 = vmatprep.mubr.f32.mxu0 0.0
        %1520 = vmatmul.mubr.f32.gmra.mrb[0].mxu0 %v1404
        %v1521 = vpop.f32.mrb[0].mxu0
        %v1522 = vadd.f32 0.0, %v1521
        %v1523 = vpop.f32.mrb[0].mxu0
        %1524 = vmatprep.mubr.f32.mxu0 0.0
        %1525 = vmatmul.mubr.f32.gmra.mrb[0].mxu0 %v1407
        %v1526 = vpop.f32.mrb[0].mxu0
        %v1527 = vadd.f32 0.0, %v1526
        %v1528 = vpop.f32.mrb[0].mxu0
        %1529 = vmatprep.mubr.f32.mxu0 0.0
        %1530 = vmatmul.mubr.f32.gmra.mrb[0].mxu0 %v1410
        %v1531 = vpop.f32.mrb[0].mxu0
        %v1532 = vadd.f32 0.0, %v1531
        %v1533 = vpop.f32.mrb[0].mxu0
        %1534 = vmatprep.mubr.f32.mxu0 0.0
        %1535 = vmatmul.mubr.f32.gmra.mrb[0].mxu0 %v1413
        %v1536 = vpop.f32.mrb[0].mxu0
        %v1537 = vadd.f32 0.0, %v1536
        %v1538 = vpop.f32.mrb[0].mxu0
        %1539 = vmatprep.mubr.f32.mxu0 0.0
        %1540 = vmatmul.mubr.f32.gmra.mrb[0].mxu0 %v1416
        %v1541 = vpop.f32.mrb[0].mxu0
        %v1542 = vadd.f32 0.0, %v1541
        %v1543 = vpop.f32.mrb[0].mxu0
        %1544 = vmatprep.mubr.f32.mxu0 0.0
        %1545 = vmatmul.mubr.f32.gmra.mrb[0].mxu0 %v1419
        %v1546 = vpop.f32.mrb[0].mxu0
        %v1547 = vadd.f32 0.0, %v1546
        %v1548 = vpop.f32.mrb[0].mxu0
        %1549 = vmatprep.mubr.f32.mxu0 0.0
        %1550 = vmatmul.mubr.f32.gmra.mrb[0].mxu0 %v1422
        %v1551 = vpop.f32.mrb[0].mxu0
        %v1552 = vadd.f32 0.0, %v1551
        %v1553 = vpop.f32.mrb[0].mxu0
        %1554 = vmatprep.mubr.f32.mxu0 0.0
        %1555 = vmatmul.mubr.f32.gmra.mrb[0].mxu0 %v1425
        %v1556 = vpop.f32.mrb[0].mxu0
        %v1557 = vadd.f32 0.0, %v1556
        %v1558 = vpop.f32.mrb[0].mxu0
        %1559 = vmatprep.mubr.f32.mxu0 0.0
        %1560 = vmatmul.mubr.f32.gmra.mrb[0].mxu0 %v1428
        %v1561 = vpop.f32.mrb[0].mxu0
        %v1562 = vadd.f32 0.0, %v1561
        %v1563 = vpop.f32.mrb[0].mxu0
        %1564 = vmatprep.mubr.f32.mxu0 0.0
        %1565 = vmatmul.mubr.f32.gmra.mrb[0].mxu0 %v1431
        %v1566 = vpop.f32.mrb[0].mxu0
        %v1567 = vadd.f32 0.0, %v1566
        %v1568 = vpop.f32.mrb[0].mxu0
        %1569 = vmatprep.mubr.f32.mxu0 0.0
        %1570 = vmatmul.mubr.f32.gmra.mrb[0].mxu0 %v1434
        %v1571 = vpop.f32.mrb[0].mxu0
        %v1572 = vadd.f32 0.0, %v1571
        %v1573 = vpop.f32.mrb[0].mxu0
        %1574 = vmatprep.mubr.f32.mxu0 0.0
        %1575 = vmatmul.mubr.f32.gmra.mrb[0].mxu0 %v1437
        %v1576 = vpop.f32.mrb[0].mxu0
        %v1577 = vadd.f32 0.0, %v1576
        %v1578 = vpop.f32.mrb[0].mxu0
        %1579 = vmatprep.mubr.f32.mxu0 0.0
        %1580 = vmatmul.mubr.f32.gmra.mrb[0].mxu0 %v1440
        %v1581 = vpop.f32.mrb[0].mxu0
        %v1582 = vadd.f32 0.0, %v1581
        %v1583 = vpop.f32.mrb[0].mxu0
        %1584 = vmatprep.mubr.f32.mxu0 0.0
        %1585 = vmatmul.mubr.f32.gmra.mrb[0].mxu0 %v1443
        %v1586 = vpop.f32.mrb[0].mxu0
        %v1587 = vadd.f32 0.0, %v1586
        %v1588 = vpop.f32.mrb[0].mxu0
        %1589 = vdwg.mxu0
        %v1590 = vld [vmem:[%s12] sm:$0x1]
        %v1592 = vlaneseq
        %v1593 = vshrl.u32 %v1592, 7
        %v1594 = vsub.s32 0, %v1593
        %v1595 = vrot.slane %v1590, %v1594
        %v1597 = vmul.f32 %v1512, %v1595
        %v1598 = vmul.f32 %v1517, %v1595
        %v1599 = vmul.f32 %v1522, %v1595
        %v1600 = vmul.f32 %v1527, %v1595
        %v1601 = vmul.f32 %v1532, %v1595
        %v1602 = vmul.f32 %v1537, %v1595
        %v1603 = vmul.f32 %v1542, %v1595
        %v1604 = vmul.f32 %v1547, %v1595
        %v1605 = vmul.f32 %v1552, %v1595
        %v1606 = vmul.f32 %v1557, %v1595
        %v1607 = vmul.f32 %v1562, %v1595
        %v1608 = vmul.f32 %v1567, %v1595
        %v1609 = vmul.f32 %v1572, %v1595
        %v1610 = vmul.f32 %v1577, %v1595
        %v1611 = vmul.f32 %v1582, %v1595
        %v1612 = vmul.f32 %v1587, %v1595
        %v1613 = vsub.f32 %v1264, %v1597
        %v1614 = vsub.f32 %v1267, %v1598
        %v1615 = vsub.f32 %v1272, %v1599
        %v1616 = vsub.f32 %v1275, %v1600
        %v1617 = vsub.f32 %v1280, %v1601
        %v1618 = vsub.f32 %v1283, %v1602
        %v1619 = vsub.f32 %v1288, %v1603
        %v1620 = vsub.f32 %v1291, %v1604
        %v1621 = vsub.f32 %v1296, %v1605
        %v1622 = vsub.f32 %v1299, %v1606
        %v1623 = vsub.f32 %v1304, %v1607
        %v1624 = vsub.f32 %v1307, %v1608
        %v1625 = vsub.f32 %v1312, %v1609
        %v1626 = vsub.f32 %v1315, %v1610
        %v1627 = vsub.f32 %v1320, %v1611
        %v1628 = vsub.f32 %v1323, %v1612
        %v1629 = vmul.f32 %v1613, %v1613
        %v1630 = vmul.f32 %v1614, %v1614
        %v1631 = vmul.f32 %v1615, %v1615
        %v1632 = vmul.f32 %v1616, %v1616
        %v1633 = vmul.f32 %v1617, %v1617
        %v1634 = vmul.f32 %v1618, %v1618
        %v1635 = vmul.f32 %v1619, %v1619
        %v1636 = vmul.f32 %v1620, %v1620
        %v1637 = vmul.f32 %v1621, %v1621
        %v1638 = vmul.f32 %v1622, %v1622
        %v1639 = vmul.f32 %v1623, %v1623
        %v1640 = vmul.f32 %v1624, %v1624
        %v1641 = vmul.f32 %v1625, %v1625
        %v1642 = vmul.f32 %v1626, %v1626
        %v1643 = vmul.f32 %v1627, %v1627
        %v1644 = vmul.f32 %v1628, %v1628
        %1645 = vmatprep.subr.mxu0 0.0
        %1646 = vmatpush1.msra.mxu0 %v1629
        %1647 = vmatprep.subr.mxu0 0.0
        %1648 = vmatpush1.msra.mxu0 %v1630
        %1649 = vmatprep.subr.mxu0 0.0
        %1650 = vmatpush1.msra.mxu0 %v1631
        %1651 = vmatprep.subr.mxu0 0.0
        %1652 = vmatpush1.msra.mxu0 %v1632
        %1653 = vmatprep.subr.mxu0 0.0
        %1654 = vmatpush1.msra.mxu0 %v1633
        %1655 = vmatprep.subr.mxu0 0.0
        %1656 = vmatpush1.msra.mxu0 %v1634
        %1657 = vmatprep.subr.mxu0 0.0
        %1658 = vmatpush1.msra.mxu0 %v1635
        %1659 = vmatprep.subr.mxu0 0.0
        %1660 = vmatpush1.msra.mxu0 %v1636
        %1661 = vmatprep.subr.mxu0 0.0
        %1662 = vmatpush1.msra.mxu0 %v1637
        %1663 = vmatprep.subr.mxu0 0.0
        %1664 = vmatpush1.msra.mxu0 %v1638
        %1665 = vmatprep.subr.mxu0 0.0
        %1666 = vmatpush1.msra.mxu0 %v1639
        %1667 = vmatprep.subr.mxu0 0.0
        %1668 = vmatpush1.msra.mxu0 %v1640
        %1669 = vmatprep.subr.mxu0 0.0
        %1670 = vmatpush1.msra.mxu0 %v1641
        %1671 = vmatprep.subr.mxu0 0.0
        %1672 = vmatpush1.msra.mxu0 %v1642
        %1673 = vmatprep.subr.mxu0 0.0
        %1674 = vmatpush1.msra.mxu0 %v1643
        %1675 = vmatprep.subr.mxu0 0.0
        %1676 = vmatpush1.msra.mxu0 %v1644
        %1677 = vmatprep.subr.mxu0 0.0
        %1678 = vmatpush1.msra.mxu0 0.0
        %1679 = vmatprep.subr.mxu0 0.0
        %1680 = vmatpush1.msra.mxu0 0.0
        %1681 = vmatprep.subr.mxu0 0.0
        %1682 = vmatpush1.msra.mxu0 0.0
        %1683 = vmatprep.subr.mxu0 0.0
        %1684 = vmatpush1.msra.mxu0 0.0
        %1685 = vmatprep.subr.mxu0 0.0
        %1686 = vmatpush1.msra.mxu0 0.0
        %1687 = vmatprep.subr.mxu0 0.0
        %1688 = vmatpush1.msra.mxu0 0.0
        %1689 = vmatprep.subr.mxu0 0.0
        %1690 = vmatpush1.msra.mxu0 0.0
        %1691 = vmatprep.subr.mxu0 0.0
        %1692 = vmatpush1.msra.mxu0 0.0
        %1693 = vmatprep.subr.mxu0 0.0
        %1694 = vmatpush1.msra.mxu0 0.0
        %1695 = vmatprep.subr.mxu0 0.0
        %1696 = vmatpush1.msra.mxu0 0.0
        %1697 = vmatprep.subr.mxu0 0.0
        %1698 = vmatpush1.msra.mxu0 0.0
        %1699 = vmatprep.subr.mxu0 0.0
        %1700 = vmatpush1.msra.mxu0 0.0
        %1701 = vmatprep.subr.mxu0 0.0
        %1702 = vmatpush1.msra.mxu0 0.0
        %1703 = vmatprep.subr.mxu0 0.0
        %1704 = vmatpush1.msra.mxu0 0.0
        %1705 = vmatprep.subr.mxu0 0.0
        %1706 = vmatpush1.msra.mxu0 0.0
        %1707 = vmatprep.subr.mxu0 0.0
        %1708 = vmatpush1.msra.mxu0 0.0
        %1709 = vmatprep.mubr.f32.mxu0 0.0
        %1710 = vmatmul.mubr.f32.gmra.mrb[0].mxu0 %v768
        %v1711 = vpop.f32.mrb[0].mxu0
        %v1712 = vadd.f32 1e-08, %v1711
        %v1713 = vpop.f32.mrb[0].mxu0
        %1714 = vdwg.mxu0
        %v1715 = vrsqrt.pop %v1712
        %1716 = vmatprep.subr.mxu0 0.0
        %1717 = vmatpush1.msra.mxu0 %v1715
        %1718 = vmatprep.subr.mxu0 0.0
        %1719 = vmatpush1.msra.mxu0 0.0
        %1720 = vmatprep.subr.mxu0 0.0
        %1721 = vmatpush1.msra.mxu0 0.0
        %1722 = vmatprep.subr.mxu0 0.0
        %1723 = vmatpush1.msra.mxu0 0.0
        %1724 = vmatprep.subr.mxu0 0.0
        %1725 = vmatpush1.msra.mxu0 0.0
        %1726 = vmatprep.subr.mxu0 0.0
        %1727 = vmatpush1.msra.mxu0 0.0
        %1728 = vmatprep.subr.mxu0 0.0
        %1729 = vmatpush1.msra.mxu0 0.0
        %1730 = vmatprep.subr.mxu0 0.0
        %1731 = vmatpush1.msra.mxu0 0.0
        %1732 = vmatprep.subr.mxu0 0.0
        %1733 = vmatpush1.msra.mxu0 0.0
        %1734 = vmatprep.subr.mxu0 0.0
        %1735 = vmatpush1.msra.mxu0 0.0
        %1736 = vmatprep.subr.mxu0 0.0
        %1737 = vmatpush1.msra.mxu0 0.0
        %1738 = vmatprep.subr.mxu0 0.0
        %1739 = vmatpush1.msra.mxu0 0.0
        %1740 = vmatprep.subr.mxu0 0.0
        %1741 = vmatpush1.msra.mxu0 0.0
        %1742 = vmatprep.subr.mxu0 0.0
        %1743 = vmatpush1.msra.mxu0 0.0
        %1744 = vmatprep.subr.mxu0 0.0
        %1745 = vmatpush1.msra.mxu0 0.0
        %1746 = vmatprep.subr.mxu0 0.0
        %1747 = vmatpush1.msra.mxu0 0.0
        %1748 = vmatprep.subr.mxu0 0.0
        %1749 = vmatpush1.msra.mxu0 0.0
        %1750 = vmatprep.subr.mxu0 0.0
        %1751 = vmatpush1.msra.mxu0 0.0
        %1752 = vmatprep.subr.mxu0 0.0
        %1753 = vmatpush1.msra.mxu0 0.0
        %1754 = vmatprep.subr.mxu0 0.0
        %1755 = vmatpush1.msra.mxu0 0.0
        %1756 = vmatprep.subr.mxu0 0.0
        %1757 = vmatpush1.msra.mxu0 0.0
        %1758 = vmatprep.subr.mxu0 0.0
        %1759 = vmatpush1.msra.mxu0 0.0
        %1760 = vmatprep.subr.mxu0 0.0
        %1761 = vmatpush1.msra.mxu0 0.0
        %1762 = vmatprep.subr.mxu0 0.0
        %1763 = vmatpush1.msra.mxu0 0.0
        %1764 = vmatprep.subr.mxu0 0.0
        %1765 = vmatpush1.msra.mxu0 0.0
        %1766 = vmatprep.subr.mxu0 0.0
        %1767 = vmatpush1.msra.mxu0 0.0
        %1768 = vmatprep.subr.mxu0 0.0
        %1769 = vmatpush1.msra.mxu0 0.0
        %1770 = vmatprep.subr.mxu0 0.0
        %1771 = vmatpush1.msra.mxu0 0.0
        %1772 = vmatprep.subr.mxu0 0.0
        %1773 = vmatpush1.msra.mxu0 0.0
        %1774 = vmatprep.subr.mxu0 0.0
        %1775 = vmatpush1.msra.mxu0 0.0
        %1776 = vmatprep.subr.mxu0 0.0
        %1777 = vmatpush1.msra.mxu0 0.0
        %1778 = vmatprep.subr.mxu0 0.0
        %1779 = vmatpush1.msra.mxu0 0.0
        %1780 = vmatprep.mubr.f32.mxu0 0.0
        %1781 = vmatmul.mubr.f32.gmra.mrb[0].mxu0 %v1398
        %v1782 = vpop.f32.mrb[0].mxu0
        %v1783 = vadd.f32 0.0, %v1782
        %v1784 = vpop.f32.mrb[0].mxu0
        %1785 = vmatprep.mubr.f32.mxu0 0.0
        %1786 = vmatmul.mubr.f32.gmra.mrb[0].mxu0 %v1401
        %v1787 = vpop.f32.mrb[0].mxu0
        %v1788 = vadd.f32 0.0, %v1787
        %v1789 = vpop.f32.mrb[0].mxu0
        %1790 = vmatprep.mubr.f32.mxu0 0.0
        %1791 = vmatmul.mubr.f32.gmra.mrb[0].mxu0 %v1404
        %v1792 = vpop.f32.mrb[0].mxu0
        %v1793 = vadd.f32 0.0, %v1792
        %v1794 = vpop.f32.mrb[0].mxu0
        %1795 = vmatprep.mubr.f32.mxu0 0.0
        %1796 = vmatmul.mubr.f32.gmra.mrb[0].mxu0 %v1407
        %v1797 = vpop.f32.mrb[0].mxu0
        %v1798 = vadd.f32 0.0, %v1797
        %v1799 = vpop.f32.mrb[0].mxu0
        %1800 = vmatprep.mubr.f32.mxu0 0.0
        %1801 = vmatmul.mubr.f32.gmra.mrb[0].mxu0 %v1410
        %v1802 = vpop.f32.mrb[0].mxu0
        %v1803 = vadd.f32 0.0, %v1802
        %v1804 = vpop.f32.mrb[0].mxu0
        %1805 = vmatprep.mubr.f32.mxu0 0.0
        %1806 = vmatmul.mubr.f32.gmra.mrb[0].mxu0 %v1413
        %v1807 = vpop.f32.mrb[0].mxu0
        %v1808 = vadd.f32 0.0, %v1807
        %v1809 = vpop.f32.mrb[0].mxu0
        %1810 = vmatprep.mubr.f32.mxu0 0.0
        %1811 = vmatmul.mubr.f32.gmra.mrb[0].mxu0 %v1416
        %v1812 = vpop.f32.mrb[0].mxu0
        %v1813 = vadd.f32 0.0, %v1812
        %v1814 = vpop.f32.mrb[0].mxu0
        %1815 = vmatprep.mubr.f32.mxu0 0.0
        %1816 = vmatmul.mubr.f32.gmra.mrb[0].mxu0 %v1419
        %v1817 = vpop.f32.mrb[0].mxu0
        %v1818 = vadd.f32 0.0, %v1817
        %v1819 = vpop.f32.mrb[0].mxu0
        %1820 = vmatprep.mubr.f32.mxu0 0.0
        %1821 = vmatmul.mubr.f32.gmra.mrb[0].mxu0 %v1422
        %v1822 = vpop.f32.mrb[0].mxu0
        %v1823 = vadd.f32 0.0, %v1822
        %v1824 = vpop.f32.mrb[0].mxu0
        %1825 = vmatprep.mubr.f32.mxu0 0.0
        %1826 = vmatmul.mubr.f32.gmra.mrb[0].mxu0 %v1425
        %v1827 = vpop.f32.mrb[0].mxu0
        %v1828 = vadd.f32 0.0, %v1827
        %v1829 = vpop.f32.mrb[0].mxu0
        %1830 = vmatprep.mubr.f32.mxu0 0.0
        %1831 = vmatmul.mubr.f32.gmra.mrb[0].mxu0 %v1428
        %v1832 = vpop.f32.mrb[0].mxu0
        %v1833 = vadd.f32 0.0, %v1832
        %v1834 = vpop.f32.mrb[0].mxu0
        %1835 = vmatprep.mubr.f32.mxu0 0.0
        %1836 = vmatmul.mubr.f32.gmra.mrb[0].mxu0 %v1431
        %v1837 = vpop.f32.mrb[0].mxu0
        %v1838 = vadd.f32 0.0, %v1837
        %v1839 = vpop.f32.mrb[0].mxu0
        %1840 = vmatprep.mubr.f32.mxu0 0.0
        %1841 = vmatmul.mubr.f32.gmra.mrb[0].mxu0 %v1434
        %v1842 = vpop.f32.mrb[0].mxu0
        %v1843 = vadd.f32 0.0, %v1842
        %v1844 = vpop.f32.mrb[0].mxu0
        %1845 = vmatprep.mubr.f32.mxu0 0.0
        %1846 = vmatmul.mubr.f32.gmra.mrb[0].mxu0 %v1437
        %v1847 = vpop.f32.mrb[0].mxu0
        %v1848 = vadd.f32 0.0, %v1847
        %v1849 = vpop.f32.mrb[0].mxu0
        %1850 = vmatprep.mubr.f32.mxu0 0.0
        %1851 = vmatmul.mubr.f32.gmra.mrb[0].mxu0 %v1440
        %v1852 = vpop.f32.mrb[0].mxu0
        %v1853 = vadd.f32 0.0, %v1852
        %v1854 = vpop.f32.mrb[0].mxu0
        %1855 = vmatprep.mubr.f32.mxu0 0.0
        %1856 = vmatmul.mubr.f32.gmra.mrb[0].mxu0 %v1443
        %v1857 = vpop.f32.mrb[0].mxu0
        %v1858 = vadd.f32 0.0, %v1857
        %v1859 = vpop.f32.mrb[0].mxu0
        %1860 = vdwg.mxu0
        %v1861 = vld [vmem:[%s10] sm:$0x1]
        %v1863 = vlaneseq
        %v1864 = vshrl.u32 %v1863, 7
        %v1865 = vsub.s32 0, %v1864
        %v1866 = vrot.slane %v1861, %v1865
        %v1868 = vmul.f32 %v1866, %v1613
        %v1869 = vmul.f32 %v1866, %v1614
        %v1870 = vmul.f32 %v1866, %v1615
        %v1871 = vmul.f32 %v1866, %v1616
        %v1872 = vmul.f32 %v1866, %v1617
        %v1873 = vmul.f32 %v1866, %v1618
        %v1874 = vmul.f32 %v1866, %v1619
        %v1875 = vmul.f32 %v1866, %v1620
        %v1876 = vmul.f32 %v1866, %v1621
        %v1877 = vmul.f32 %v1866, %v1622
        %v1878 = vmul.f32 %v1866, %v1623
        %v1879 = vmul.f32 %v1866, %v1624
        %v1880 = vmul.f32 %v1866, %v1625
        %v1881 = vmul.f32 %v1866, %v1626
        %v1882 = vmul.f32 %v1866, %v1627
        %v1883 = vmul.f32 %v1866, %v1628
        %v1884 = vmul.f32 %v1868, %v1783
        %v1885 = vmul.f32 %v1869, %v1788
        %v1886 = vmul.f32 %v1870, %v1793
        %v1887 = vmul.f32 %v1871, %v1798
        %v1888 = vmul.f32 %v1872, %v1803
        %v1889 = vmul.f32 %v1873, %v1808
        %v1890 = vmul.f32 %v1874, %v1813
        %v1891 = vmul.f32 %v1875, %v1818
        %v1892 = vmul.f32 %v1876, %v1823
        %v1893 = vmul.f32 %v1877, %v1828
        %v1894 = vmul.f32 %v1878, %v1833
        %v1895 = vmul.f32 %v1879, %v1838
        %v1896 = vmul.f32 %v1880, %v1843
        %v1897 = vmul.f32 %v1881, %v1848
        %v1898 = vmul.f32 %v1882, %v1853
        %v1899 = vmul.f32 %v1883, %v1858
        %v1900 = vld [vmem:[%s11] sm:$0x1]
        %v1902 = vlaneseq
        %v1903 = vshrl.u32 %v1902, 7
        %v1904 = vsub.s32 0, %v1903
        %v1905 = vrot.slane %v1900, %v1904
        %v1907 = vadd.f32 %v1884, %v1905
        %v1908 = vadd.f32 %v1885, %v1905
        %v1909 = vadd.f32 %v1886, %v1905
        %v1910 = vadd.f32 %v1887, %v1905
        %v1911 = vadd.f32 %v1888, %v1905
        %v1912 = vadd.f32 %v1889, %v1905
        %v1913 = vadd.f32 %v1890, %v1905
        %v1914 = vadd.f32 %v1891, %v1905
        %v1915 = vadd.f32 %v1892, %v1905
        %v1916 = vadd.f32 %v1893, %v1905
        %v1917 = vadd.f32 %v1894, %v1905
        %v1918 = vadd.f32 %v1895, %v1905
        %v1919 = vadd.f32 %v1896, %v1905
        %v1920 = vadd.f32 %v1897, %v1905
        %v1921 = vadd.f32 %v1898, %v1905
        %v1922 = vadd.f32 %v1899, %v1905
        %v1923 = vmax.f32 %v1907, 0.0
        %v1924 = vmax.f32 %v1908, 0.0
        %v1925 = vmax.f32 %v1909, 0.0
        %v1926 = vmax.f32 %v1910, 0.0
        %v1927 = vmax.f32 %v1911, 0.0
        %v1928 = vmax.f32 %v1912, 0.0
        %v1929 = vmax.f32 %v1913, 0.0
        %v1930 = vmax.f32 %v1914, 0.0
        %v1931 = vmax.f32 %v1915, 0.0
        %v1932 = vmax.f32 %v1916, 0.0
        %v1933 = vmax.f32 %v1917, 0.0
        %v1934 = vmax.f32 %v1918, 0.0
        %v1935 = vmax.f32 %v1919, 0.0
        %v1936 = vmax.f32 %v1920, 0.0
        %v1937 = vmax.f32 %v1921, 0.0
        %v1938 = vmax.f32 %v1922, 0.0
        %v1939 = vpack.c.bf16 %v1924, %v1923
        %v1940 = vpack.c.bf16 %v1926, %v1925
        %v1941 = vpack.c.bf16 %v1928, %v1927
        %v1942 = vpack.c.bf16 %v1930, %v1929
        %v1943 = vpack.c.bf16 %v1932, %v1931
        %v1944 = vpack.c.bf16 %v1934, %v1933
        %v1945 = vpack.c.bf16 %v1936, %v1935
        %v1946 = vpack.c.bf16 %v1938, %v1937
        %v1947 = vld [vmem:[#allocation11] sm:$0xf]
        %v1948 = vld [vmem:[#allocation11 + $0x4] sm:$0xf]
        %v1949 = vld [vmem:[#allocation11 + $0x8] sm:$0xf]
        %v1950 = vld [vmem:[#allocation11 + $0xc] sm:$0xf]
        %v1951 = vld [vmem:[#allocation11 + $0x10] sm:$0xf]
        %v1952 = vld [vmem:[#allocation11 + $0x14] sm:$0xf]
        %v1953 = vld [vmem:[#allocation11 + $0x18] sm:$0xf]
        %v1954 = vld [vmem:[#allocation11 + $0x1c] sm:$0xf]
        %v1955 = vld [vmem:[#allocation11 + $0x20] sm:$0xf]
        %v1956 = vld [vmem:[#allocation11 + $0x24] sm:$0xf]
        %v1957 = vld [vmem:[#allocation11 + $0x28] sm:$0xf]
        %v1958 = vld [vmem:[#allocation11 + $0x2c] sm:$0xf]
        %v1959 = vld [vmem:[#allocation11 + $0x30] sm:$0xf]
        %v1960 = vld [vmem:[#allocation11 + $0x34] sm:$0xf]
        %v1961 = vld [vmem:[#allocation11 + $0x38] sm:$0xf]
        %v1962 = vld [vmem:[#allocation11 + $0x3c] sm:$0xf]
        %v1963 = vld [vmem:[%s14] sm:$0x1]
        %v1965 = vlaneseq
        %v1966 = vshrl.u32 %v1965, 7
        %v1967 = vsub.s32 0, %v1966
        %v1968 = vrot.slane %v1963, %v1967
        %v1986 = vunpack.c.l.b16 %v1947
        %v1987 = vunpack.c.l.b16 %v1948
        %v1988 = vunpack.c.l.b16 %v1949
        %v1989 = vunpack.c.l.b16 %v1950
        %v1990 = vunpack.c.l.b16 %v1951
        %v1991 = vunpack.c.l.b16 %v1952
        %v1992 = vunpack.c.l.b16 %v1953
        %v1993 = vunpack.c.l.b16 %v1954
        %v1994 = vunpack.c.l.b16 %v1955
        %v1995 = vunpack.c.l.b16 %v1956
        %v1996 = vunpack.c.l.b16 %v1957
        %v1997 = vunpack.c.l.b16 %v1958
        %v1998 = vunpack.c.l.b16 %v1959
        %v1999 = vunpack.c.l.b16 %v1960
        %v2000 = vunpack.c.l.b16 %v1961
        %v2001 = vunpack.c.l.b16 %v1962
        %v2002 = vpack.c.b16 %v1987, %v1986
        %v2003 = vpack.c.b16 %v1989, %v1988
        %v2004 = vpack.c.b16 %v1991, %v1990
        %v2005 = vpack.c.b16 %v1993, %v1992
        %v2006 = vpack.c.b16 %v1995, %v1994
        %v2007 = vpack.c.b16 %v1997, %v1996
        %v2008 = vpack.c.b16 %v1999, %v1998
        %v2009 = vpack.c.b16 %v2001, %v2000
        %2018 = vmatprep.subr.bf16.mxu0 0
        %2019 = vmatpush1.bf16.msra.mxu0 %v2002
        %2020 = vmatprep.subr.bf16.mxu0 0
        %2021 = vmatpush1.bf16.msra.mxu0 %v2003
        %2022 = vmatprep.subr.bf16.mxu0 0
        %2023 = vmatpush1.bf16.msra.mxu0 %v2004
        %2024 = vmatprep.subr.bf16.mxu0 0
        %2025 = vmatpush1.bf16.msra.mxu0 %v2005
        %2026 = vmatprep.subr.bf16.mxu0 0
        %2027 = vmatpush1.bf16.msra.mxu0 %v2006
        %2028 = vmatprep.subr.bf16.mxu0 0
        %2029 = vmatpush1.bf16.msra.mxu0 %v2007
        %2030 = vmatprep.subr.bf16.mxu0 0
        %2031 = vmatpush1.bf16.msra.mxu0 %v2008
        %2032 = vmatprep.subr.bf16.mxu0 0
        %2033 = vmatpush1.bf16.msra.mxu0 %v2009
        %2034 = vmatprep.subr.bf16.mxu0 0
        %2035 = vmatpush1.bf16.msra.mxu0 0
        %2036 = vmatprep.subr.bf16.mxu0 0
        %2037 = vmatpush1.bf16.msra.mxu0 0
        %2038 = vmatprep.subr.bf16.mxu0 0
        %2039 = vmatpush1.bf16.msra.mxu0 0
        %2040 = vmatprep.subr.bf16.mxu0 0
        %2041 = vmatpush1.bf16.msra.mxu0 0
        %2042 = vmatprep.subr.bf16.mxu0 0
        %2043 = vmatpush1.bf16.msra.mxu0 0
        %2044 = vmatprep.subr.bf16.mxu0 0
        %2045 = vmatpush1.bf16.msra.mxu0 0
        %2046 = vmatprep.subr.bf16.mxu0 0
        %2047 = vmatpush1.bf16.msra.mxu0 0
        %2048 = vmatprep.subr.bf16.mxu0 0
        %2049 = vmatpush1.bf16.msra.mxu0 0
        %2050 = vmatprep.mubr.bf16.mxu0 0
        %2051 = vmatmul.mubr.bf16.gmra.mrb[0].mxu0 %v1939
        %v2052 = vpop.f32.mrb[0].mxu0
        %v2053 = vadd.f32 %v1968, %v2052
        %v2054 = vpop.f32.mrb[0].mxu0
        %v2055 = vpop.f32.mrb[0].mxu0
        %v2056 = vadd.f32 %v1968, %v2055
        %v2057 = vpop.f32.mrb[0].mxu0
        %2058 = vmatprep.mubr.bf16.mxu0 0
        %2059 = vmatmul.mubr.bf16.gmra.mrb[0].mxu0 %v1940
        %v2060 = vpop.f32.mrb[0].mxu0
        %v2061 = vadd.f32 %v1968, %v2060
        %v2062 = vpop.f32.mrb[0].mxu0
        %v2063 = vpop.f32.mrb[0].mxu0
        %v2064 = vadd.f32 %v1968, %v2063
        %v2065 = vpop.f32.mrb[0].mxu0
        %2066 = vmatprep.mubr.bf16.mxu0 0
        %2067 = vmatmul.mubr.bf16.gmra.mrb[0].mxu0 %v1941
        %v2068 = vpop.f32.mrb[0].mxu0
        %v2069 = vadd.f32 %v1968, %v2068
        %v2070 = vpop.f32.mrb[0].mxu0
        %v2071 = vpop.f32.mrb[0].mxu0
        %v2072 = vadd.f32 %v1968, %v2071
        %v2073 = vpop.f32.mrb[0].mxu0
        %2074 = vmatprep.mubr.bf16.mxu0 0
        %2075 = vmatmul.mubr.bf16.gmra.mrb[0].mxu0 %v1942
        %v2076 = vpop.f32.mrb[0].mxu0
        %v2077 = vadd.f32 %v1968, %v2076
        %v2078 = vpop.f32.mrb[0].mxu0
        %v2079 = vpop.f32.mrb[0].mxu0
        %v2080 = vadd.f32 %v1968, %v2079
        %v2081 = vpop.f32.mrb[0].mxu0
        %2082 = vmatprep.mubr.bf16.mxu0 0
        %2083 = vmatmul.mubr.bf16.gmra.mrb[0].mxu0 %v1943
        %v2084 = vpop.f32.mrb[0].mxu0
        %v2085 = vadd.f32 %v1968, %v2084
        %v2086 = vpop.f32.mrb[0].mxu0
        %v2087 = vpop.f32.mrb[0].mxu0
        %v2088 = vadd.f32 %v1968, %v2087
        %v2089 = vpop.f32.mrb[0].mxu0
        %2090 = vmatprep.mubr.bf16.mxu0 0
        %2091 = vmatmul.mubr.bf16.gmra.mrb[0].mxu0 %v1944
        %v2092 = vpop.f32.mrb[0].mxu0
        %v2093 = vadd.f32 %v1968, %v2092
        %v2094 = vpop.f32.mrb[0].mxu0
        %v2095 = vpop.f32.mrb[0].mxu0
        %v2096 = vadd.f32 %v1968, %v2095
        %v2097 = vpop.f32.mrb[0].mxu0
        %2098 = vmatprep.mubr.bf16.mxu0 0
        %2099 = vmatmul.mubr.bf16.gmra.mrb[0].mxu0 %v1945
        %v2100 = vpop.f32.mrb[0].mxu0
        %v2101 = vadd.f32 %v1968, %v2100
        %v2102 = vpop.f32.mrb[0].mxu0
        %v2103 = vpop.f32.mrb[0].mxu0
        %v2104 = vadd.f32 %v1968, %v2103
        %v2105 = vpop.f32.mrb[0].mxu0
        %2106 = vmatprep.mubr.bf16.mxu0 0
        %2107 = vmatmul.mubr.bf16.gmra.mrb[0].mxu0 %v1946
        %v2108 = vpop.f32.mrb[0].mxu0
        %v2109 = vadd.f32 %v1968, %v2108
        %v2110 = vpop.f32.mrb[0].mxu0
        %v2111 = vpop.f32.mrb[0].mxu0
        %v2112 = vadd.f32 %v1968, %v2111
        %v2113 = vpop.f32.mrb[0].mxu0
        %2114 = vdwg.mxu0
        %v2115 = vmax.f32 %v2053, 0.0
        %v2116 = vmax.f32 %v2056, 0.0
        %v2117 = vmax.f32 %v2061, 0.0
        %v2118 = vmax.f32 %v2064, 0.0
        %v2119 = vmax.f32 %v2069, 0.0
        %v2120 = vmax.f32 %v2072, 0.0
        %v2121 = vmax.f32 %v2077, 0.0
        %v2122 = vmax.f32 %v2080, 0.0
        %v2123 = vmax.f32 %v2085, 0.0
        %v2124 = vmax.f32 %v2088, 0.0
        %v2125 = vmax.f32 %v2093, 0.0
        %v2126 = vmax.f32 %v2096, 0.0
        %v2127 = vmax.f32 %v2101, 0.0
        %v2128 = vmax.f32 %v2104, 0.0
        %v2129 = vmax.f32 %v2109, 0.0
        %v2130 = vmax.f32 %v2112, 0.0
        %v2131 = vpack.c.bf16 %v2116, %v2115
        %v2132 = vpack.c.bf16 %v2118, %v2117
        %v2133 = vpack.c.bf16 %v2120, %v2119
        %v2134 = vpack.c.bf16 %v2122, %v2121
        %v2135 = vpack.c.bf16 %v2124, %v2123
        %v2136 = vpack.c.bf16 %v2126, %v2125
        %v2137 = vpack.c.bf16 %v2128, %v2127
        %v2138 = vpack.c.bf16 %v2130, %v2129
        %v2139 = vld [vmem:[#allocation12] sm:$0xf]
        %v2140 = vld [vmem:[#allocation12 + $0x4] sm:$0xf]
        %v2141 = vld [vmem:[#allocation12 + $0x8] sm:$0xf]
        %v2142 = vld [vmem:[#allocation12 + $0xc] sm:$0xf]
        %v2143 = vld [vmem:[#allocation12 + $0x10] sm:$0xf]
        %v2144 = vld [vmem:[#allocation12 + $0x14] sm:$0xf]
        %v2145 = vld [vmem:[#allocation12 + $0x18] sm:$0xf]
        %v2146 = vld [vmem:[#allocation12 + $0x1c] sm:$0xf]
        %v2147 = vld [vmem:[#allocation12 + $0x20] sm:$0xf]
        %v2148 = vld [vmem:[#allocation12 + $0x24] sm:$0xf]
        %v2149 = vld [vmem:[#allocation12 + $0x28] sm:$0xf]
        %v2150 = vld [vmem:[#allocation12 + $0x2c] sm:$0xf]
        %v2151 = vld [vmem:[#allocation12 + $0x30] sm:$0xf]
        %v2152 = vld [vmem:[#allocation12 + $0x34] sm:$0xf]
        %v2153 = vld [vmem:[#allocation12 + $0x38] sm:$0xf]
        %v2154 = vld [vmem:[#allocation12 + $0x3c] sm:$0xf]
        %v2155 = vld [vmem:[%s16] sm:$0x1]
        %v2157 = vlaneseq
        %v2158 = vshrl.u32 %v2157, 7
        %v2159 = vsub.s32 0, %v2158
        %v2160 = vrot.slane %v2155, %v2159
        %v2178 = vunpack.c.l.b16 %v2139
        %v2179 = vunpack.c.l.b16 %v2140
        %v2180 = vunpack.c.l.b16 %v2141
        %v2181 = vunpack.c.l.b16 %v2142
        %v2182 = vunpack.c.l.b16 %v2143
        %v2183 = vunpack.c.l.b16 %v2144
        %v2184 = vunpack.c.l.b16 %v2145
        %v2185 = vunpack.c.l.b16 %v2146
        %v2186 = vunpack.c.l.b16 %v2147
        %v2187 = vunpack.c.l.b16 %v2148
        %v2188 = vunpack.c.l.b16 %v2149
        %v2189 = vunpack.c.l.b16 %v2150
        %v2190 = vunpack.c.l.b16 %v2151
        %v2191 = vunpack.c.l.b16 %v2152
        %v2192 = vunpack.c.l.b16 %v2153
        %v2193 = vunpack.c.l.b16 %v2154
        %v2194 = vpack.c.b16 %v2179, %v2178
        %v2195 = vpack.c.b16 %v2181, %v2180
        %v2196 = vpack.c.b16 %v2183, %v2182
        %v2197 = vpack.c.b16 %v2185, %v2184
        %v2198 = vpack.c.b16 %v2187, %v2186
        %v2199 = vpack.c.b16 %v2189, %v2188
        %v2200 = vpack.c.b16 %v2191, %v2190
        %v2201 = vpack.c.b16 %v2193, %v2192
        %2210 = vmatprep.subr.bf16.mxu0 0
        %2211 = vmatpush1.bf16.msra.mxu0 %v2194
        %2212 = vmatprep.subr.bf16.mxu0 0
        %2213 = vmatpush1.bf16.msra.mxu0 %v2195
        %2214 = vmatprep.subr.bf16.mxu0 0
        %2215 = vmatpush1.bf16.msra.mxu0 %v2196
        %2216 = vmatprep.subr.bf16.mxu0 0
        %2217 = vmatpush1.bf16.msra.mxu0 %v2197
        %2218 = vmatprep.subr.bf16.mxu0 0
        %2219 = vmatpush1.bf16.msra.mxu0 %v2198
        %2220 = vmatprep.subr.bf16.mxu0 0
        %2221 = vmatpush1.bf16.msra.mxu0 %v2199
        %2222 = vmatprep.subr.bf16.mxu0 0
        %2223 = vmatpush1.bf16.msra.mxu0 %v2200
        %2224 = vmatprep.subr.bf16.mxu0 0
        %2225 = vmatpush1.bf16.msra.mxu0 %v2201
        %2226 = vmatprep.subr.bf16.mxu0 0
        %2227 = vmatpush1.bf16.msra.mxu0 0
        %2228 = vmatprep.subr.bf16.mxu0 0
        %2229 = vmatpush1.bf16.msra.mxu0 0
        %2230 = vmatprep.subr.bf16.mxu0 0
        %2231 = vmatpush1.bf16.msra.mxu0 0
        %2232 = vmatprep.subr.bf16.mxu0 0
        %2233 = vmatpush1.bf16.msra.mxu0 0
        %2234 = vmatprep.subr.bf16.mxu0 0
        %2235 = vmatpush1.bf16.msra.mxu0 0
        %2236 = vmatprep.subr.bf16.mxu0 0
        %2237 = vmatpush1.bf16.msra.mxu0 0
        %2238 = vmatprep.subr.bf16.mxu0 0
        %2239 = vmatpush1.bf16.msra.mxu0 0
        %2240 = vmatprep.subr.bf16.mxu0 0
        %2241 = vmatpush1.bf16.msra.mxu0 0
        %2242 = vmatprep.mubr.bf16.mxu0 0
        %2243 = vmatmul.mubr.bf16.gmra.mrb[0].mxu0 %v2131
        %v2244 = vpop.f32.mrb[0].mxu0
        %v2245 = vadd.f32 %v2160, %v2244
        %v2246 = vpop.f32.mrb[0].mxu0
        %v2247 = vpop.f32.mrb[0].mxu0
        %v2248 = vadd.f32 %v2160, %v2247
        %v2249 = vpop.f32.mrb[0].mxu0
        %2250 = vmatprep.mubr.bf16.mxu0 0
        %2251 = vmatmul.mubr.bf16.gmra.mrb[0].mxu0 %v2132
        %v2252 = vpop.f32.mrb[0].mxu0
        %v2253 = vadd.f32 %v2160, %v2252
        %v2254 = vpop.f32.mrb[0].mxu0
        %v2255 = vpop.f32.mrb[0].mxu0
        %v2256 = vadd.f32 %v2160, %v2255
        %v2257 = vpop.f32.mrb[0].mxu0
        %2258 = vmatprep.mubr.bf16.mxu0 0
        %2259 = vmatmul.mubr.bf16.gmra.mrb[0].mxu0 %v2133
        %v2260 = vpop.f32.mrb[0].mxu0
        %v2261 = vadd.f32 %v2160, %v2260
        %v2262 = vpop.f32.mrb[0].mxu0
        %v2263 = vpop.f32.mrb[0].mxu0
        %v2264 = vadd.f32 %v2160, %v2263
        %v2265 = vpop.f32.mrb[0].mxu0
        %2266 = vmatprep.mubr.bf16.mxu0 0
        %2267 = vmatmul.mubr.bf16.gmra.mrb[0].mxu0 %v2134
        %v2268 = vpop.f32.mrb[0].mxu0
        %v2269 = vadd.f32 %v2160, %v2268
        %v2270 = vpop.f32.mrb[0].mxu0
        %v2271 = vpop.f32.mrb[0].mxu0
        %v2272 = vadd.f32 %v2160, %v2271
        %v2273 = vpop.f32.mrb[0].mxu0
        %2274 = vmatprep.mubr.bf16.mxu0 0
        %2275 = vmatmul.mubr.bf16.gmra.mrb[0].mxu0 %v2135
        %v2276 = vpop.f32.mrb[0].mxu0
        %v2277 = vadd.f32 %v2160, %v2276
        %v2278 = vpop.f32.mrb[0].mxu0
        %v2279 = vpop.f32.mrb[0].mxu0
        %v2280 = vadd.f32 %v2160, %v2279
        %v2281 = vpop.f32.mrb[0].mxu0
        %2282 = vmatprep.mubr.bf16.mxu0 0
        %2283 = vmatmul.mubr.bf16.gmra.mrb[0].mxu0 %v2136
        %v2284 = vpop.f32.mrb[0].mxu0
        %v2285 = vadd.f32 %v2160, %v2284
        %v2286 = vpop.f32.mrb[0].mxu0
        %v2287 = vpop.f32.mrb[0].mxu0
        %v2288 = vadd.f32 %v2160, %v2287
        %v2289 = vpop.f32.mrb[0].mxu0
        %2290 = vmatprep.mubr.bf16.mxu0 0
        %2291 = vmatmul.mubr.bf16.gmra.mrb[0].mxu0 %v2137
        %v2292 = vpop.f32.mrb[0].mxu0
        %v2293 = vadd.f32 %v2160, %v2292
        %v2294 = vpop.f32.mrb[0].mxu0
        %v2295 = vpop.f32.mrb[0].mxu0
        %v2296 = vadd.f32 %v2160, %v2295
        %v2297 = vpop.f32.mrb[0].mxu0
        %2298 = vmatprep.mubr.bf16.mxu0 0
        %2299 = vmatmul.mubr.bf16.gmra.mrb[0].mxu0 %v2138
        %v2300 = vpop.f32.mrb[0].mxu0
        %v2301 = vadd.f32 %v2160, %v2300
        %v2302 = vpop.f32.mrb[0].mxu0
        %v2303 = vpop.f32.mrb[0].mxu0
        %v2304 = vadd.f32 %v2160, %v2303
        %v2305 = vpop.f32.mrb[0].mxu0
        %2306 = vdwg.mxu0
        %2307 = vmatprep.subr.mxu0 0.0
        %2308 = vmatpush1.msra.mxu0 %v2245
        %2309 = vmatprep.subr.mxu0 0.0
        %2310 = vmatpush1.msra.mxu0 %v2248
        %2311 = vmatprep.subr.mxu0 0.0
        %2312 = vmatpush1.msra.mxu0 %v2253
        %2313 = vmatprep.subr.mxu0 0.0
        %2314 = vmatpush1.msra.mxu0 %v2256
        %2315 = vmatprep.subr.mxu0 0.0
        %2316 = vmatpush1.msra.mxu0 %v2261
        %2317 = vmatprep.subr.mxu0 0.0
        %2318 = vmatpush1.msra.mxu0 %v2264
        %2319 = vmatprep.subr.mxu0 0.0
        %2320 = vmatpush1.msra.mxu0 %v2269
        %2321 = vmatprep.subr.mxu0 0.0
        %2322 = vmatpush1.msra.mxu0 %v2272
        %2323 = vmatprep.subr.mxu0 0.0
        %2324 = vmatpush1.msra.mxu0 %v2277
        %2325 = vmatprep.subr.mxu0 0.0
        %2326 = vmatpush1.msra.mxu0 %v2280
        %2327 = vmatprep.subr.mxu0 0.0
        %2328 = vmatpush1.msra.mxu0 %v2285
        %2329 = vmatprep.subr.mxu0 0.0
        %2330 = vmatpush1.msra.mxu0 %v2288
        %2331 = vmatprep.subr.mxu0 0.0
        %2332 = vmatpush1.msra.mxu0 %v2293
        %2333 = vmatprep.subr.mxu0 0.0
        %2334 = vmatpush1.msra.mxu0 %v2296
        %2335 = vmatprep.subr.mxu0 0.0
        %2336 = vmatpush1.msra.mxu0 %v2301
        %2337 = vmatprep.subr.mxu0 0.0
        %2338 = vmatpush1.msra.mxu0 %v2304
        %2339 = vmatprep.subr.mxu0 0.0
        %2340 = vmatpush1.msra.mxu0 0.0
        %2341 = vmatprep.subr.mxu0 0.0
        %2342 = vmatpush1.msra.mxu0 0.0
        %2343 = vmatprep.subr.mxu0 0.0
        %2344 = vmatpush1.msra.mxu0 0.0
        %2345 = vmatprep.subr.mxu0 0.0
        %2346 = vmatpush1.msra.mxu0 0.0
        %2347 = vmatprep.subr.mxu0 0.0
        %2348 = vmatpush1.msra.mxu0 0.0
        %2349 = vmatprep.subr.mxu0 0.0
        %2350 = vmatpush1.msra.mxu0 0.0
        %2351 = vmatprep.subr.mxu0 0.0
        %2352 = vmatpush1.msra.mxu0 0.0
        %2353 = vmatprep.subr.mxu0 0.0
        %2354 = vmatpush1.msra.mxu0 0.0
        %2355 = vmatprep.subr.mxu0 0.0
        %2356 = vmatpush1.msra.mxu0 0.0
        %2357 = vmatprep.subr.mxu0 0.0
        %2358 = vmatpush1.msra.mxu0 0.0
        %2359 = vmatprep.subr.mxu0 0.0
        %2360 = vmatpush1.msra.mxu0 0.0
        %2361 = vmatprep.subr.mxu0 0.0
        %2362 = vmatpush1.msra.mxu0 0.0
        %2363 = vmatprep.subr.mxu0 0.0
        %2364 = vmatpush1.msra.mxu0 0.0
        %2365 = vmatprep.subr.mxu0 0.0
        %2366 = vmatpush1.msra.mxu0 0.0
        %2367 = vmatprep.subr.mxu0 0.0
        %2368 = vmatpush1.msra.mxu0 0.0
        %2369 = vmatprep.subr.mxu0 0.0
        %2370 = vmatpush1.msra.mxu0 0.0
        %2371 = vmatprep.mubr.f32.mxu0 0.0
        %2372 = vmatmul.mubr.f32.gmra.mrb[0].mxu0 %v785
        %v2373 = vpop.f32.mrb[0].mxu0
        %v2374 = vadd.f32 0.0, %v2373
        %v2375 = vpop.f32.mrb[0].mxu0
        %2376 = vdwg.mxu0
        %2377 = vst [vmem:[%s734] sm:$0xff] %v2374
        %s2378 = sld [smem:[#allocation7 + $0x1]]
        %s2379 = sadd.f32 %s2378, 1.0
        %v2380 = vstv %s2379
        %v2381 = vmul.f32 %v2380, %v1923
        %v2382 = vmul.f32 %v2380, %v1924
        %v2383 = vmul.f32 %v2380, %v1925
        %v2384 = vmul.f32 %v2380, %v1926
        %v2385 = vmul.f32 %v2380, %v1927
        %v2386 = vmul.f32 %v2380, %v1928
        %v2387 = vmul.f32 %v2380, %v1929
        %v2388 = vmul.f32 %v2380, %v1930
        %v2389 = vmul.f32 %v2380, %v1931
        %v2390 = vmul.f32 %v2380, %v1932
        %v2391 = vmul.f32 %v2380, %v1933
        %v2392 = vmul.f32 %v2380, %v1934
        %v2393 = vmul.f32 %v2380, %v1935
        %v2394 = vmul.f32 %v2380, %v1936
        %v2395 = vmul.f32 %v2380, %v1937
        %v2396 = vmul.f32 %v2380, %v1938
        %2397 = vmatprep.subr.bf16.mxu0 0
        %2398 = vmatpush1.bf16.msra.mxu0 %v1939
        %2399 = vmatprep.subr.bf16.mxu0 0
        %2400 = vmatpush1.bf16.msra.mxu0 %v1940
        %2401 = vmatprep.subr.bf16.mxu0 0
        %2402 = vmatpush1.bf16.msra.mxu0 %v1941
        %2403 = vmatprep.subr.bf16.mxu0 0
        %2404 = vmatpush1.bf16.msra.mxu0 %v1942
        %2405 = vmatprep.subr.bf16.mxu0 0
        %2406 = vmatpush1.bf16.msra.mxu0 %v1943
        %2407 = vmatprep.subr.bf16.mxu0 0
        %2408 = vmatpush1.bf16.msra.mxu0 %v1944
        %2409 = vmatprep.subr.bf16.mxu0 0
        %2410 = vmatpush1.bf16.msra.mxu0 %v1945
        %2411 = vmatprep.subr.bf16.mxu0 0
        %2412 = vmatpush1.bf16.msra.mxu0 %v1946
        %2413 = vmatprep.subr.bf16.mxu0 0
        %2414 = vmatpush1.bf16.msra.mxu0 0
        %2415 = vmatprep.subr.bf16.mxu0 0
        %2416 = vmatpush1.bf16.msra.mxu0 0
        %2417 = vmatprep.subr.bf16.mxu0 0
        %2418 = vmatpush1.bf16.msra.mxu0 0
        %2419 = vmatprep.subr.bf16.mxu0 0
        %2420 = vmatpush1.bf16.msra.mxu0 0
        %2421 = vmatprep.subr.bf16.mxu0 0
        %2422 = vmatpush1.bf16.msra.mxu0 0
        %2423 = vmatprep.subr.bf16.mxu0 0
        %2424 = vmatpush1.bf16.msra.mxu0 0
        %2425 = vmatprep.subr.bf16.mxu0 0
        %2426 = vmatpush1.bf16.msra.mxu0 0
        %2427 = vmatprep.subr.bf16.mxu0 0
        %2428 = vmatpush1.bf16.msra.mxu0 0
        %2429 = vmatprep.mubr.bf16.mxu0 0
        %2430 = vmatmul.mubr.bf16.gmra.mrb[0].mxu0 %v845
        %v2431 = vpop.f32.mrb[0].mxu0
        %v2432 = vadd.f32 %v2381, %v2431
        %v2433 = vpop.f32.mrb[0].mxu0
        %v2434 = vpop.f32.mrb[0].mxu0
        %v2435 = vadd.f32 %v2382, %v2434
        %v2436 = vpop.f32.mrb[0].mxu0
        %2437 = vmatprep.mubr.bf16.mxu0 0
        %2438 = vmatmul.mubr.bf16.gmra.mrb[0].mxu0 %v846
        %v2439 = vpop.f32.mrb[0].mxu0
        %v2440 = vadd.f32 %v2383, %v2439
        %v2441 = vpop.f32.mrb[0].mxu0
        %v2442 = vpop.f32.mrb[0].mxu0
        %v2443 = vadd.f32 %v2384, %v2442
        %v2444 = vpop.f32.mrb[0].mxu0
        %2445 = vmatprep.mubr.bf16.mxu0 0
        %2446 = vmatmul.mubr.bf16.gmra.mrb[0].mxu0 %v847
        %v2447 = vpop.f32.mrb[0].mxu0
        %v2448 = vadd.f32 %v2385, %v2447
        %v2449 = vpop.f32.mrb[0].mxu0
        %v2450 = vpop.f32.mrb[0].mxu0
        %v2451 = vadd.f32 %v2386, %v2450
        %v2452 = vpop.f32.mrb[0].mxu0
        %2453 = vmatprep.mubr.bf16.mxu0 0
        %2454 = vmatmul.mubr.bf16.gmra.mrb[0].mxu0 %v848
        %v2455 = vpop.f32.mrb[0].mxu0
        %v2456 = vadd.f32 %v2387, %v2455
        %v2457 = vpop.f32.mrb[0].mxu0
        %v2458 = vpop.f32.mrb[0].mxu0
        %v2459 = vadd.f32 %v2388, %v2458
        %v2460 = vpop.f32.mrb[0].mxu0
        %2461 = vmatprep.mubr.bf16.mxu0 0
        %2462 = vmatmul.mubr.bf16.gmra.mrb[0].mxu0 %v849
        %v2463 = vpop.f32.mrb[0].mxu0
        %v2464 = vadd.f32 %v2389, %v2463
        %v2465 = vpop.f32.mrb[0].mxu0
        %v2466 = vpop.f32.mrb[0].mxu0
        %v2467 = vadd.f32 %v2390, %v2466
        %v2468 = vpop.f32.mrb[0].mxu0
        %2469 = vmatprep.mubr.bf16.mxu0 0
        %2470 = vmatmul.mubr.bf16.gmra.mrb[0].mxu0 %v850
        %v2471 = vpop.f32.mrb[0].mxu0
        %v2472 = vadd.f32 %v2391, %v2471
        %v2473 = vpop.f32.mrb[0].mxu0
        %v2474 = vpop.f32.mrb[0].mxu0
        %v2475 = vadd.f32 %v2392, %v2474
        %v2476 = vpop.f32.mrb[0].mxu0
        %2477 = vmatprep.mubr.bf16.mxu0 0
        %2478 = vmatmul.mubr.bf16.gmra.mrb[0].mxu0 %v851
        %v2479 = vpop.f32.mrb[0].mxu0
        %v2480 = vadd.f32 %v2393, %v2479
        %v2481 = vpop.f32.mrb[0].mxu0
        %v2482 = vpop.f32.mrb[0].mxu0
        %v2483 = vadd.f32 %v2394, %v2482
        %v2484 = vpop.f32.mrb[0].mxu0
        %2485 = vmatprep.mubr.bf16.mxu0 0
        %2486 = vmatmul.mubr.bf16.gmra.mrb[0].mxu0 %v852
        %v2487 = vpop.f32.mrb[0].mxu0
        %v2488 = vadd.f32 %v2395, %v2487
        %v2489 = vpop.f32.mrb[0].mxu0
        %v2490 = vpop.f32.mrb[0].mxu0
        %v2491 = vadd.f32 %v2396, %v2490
        %v2492 = vpop.f32.mrb[0].mxu0
        %2493 = vdwg.mxu0
        %v2494 = vpack.c.bf16 %v2435, %v2432
        %v2495 = vpack.c.bf16 %v2443, %v2440
        %v2496 = vpack.c.bf16 %v2451, %v2448
        %v2497 = vpack.c.bf16 %v2459, %v2456
        %v2498 = vpack.c.bf16 %v2467, %v2464
        %v2499 = vpack.c.bf16 %v2475, %v2472
        %v2500 = vpack.c.bf16 %v2483, %v2480
        %v2501 = vpack.c.bf16 %v2491, %v2488
        %s2502 = scalar_lea.vmem [#allocation8], 64
        %v2503 = vld [vmem:[%s2502] sm:$0xf]
        %v2504 = vld [vmem:[%s2502 + $0x4] sm:$0xf]
        %v2505 = vld [vmem:[%s2502 + $0x8] sm:$0xf]
        %v2506 = vld [vmem:[%s2502 + $0xc] sm:$0xf]
        %v2507 = vld [vmem:[%s2502 + $0x10] sm:$0xf]
        %v2508 = vld [vmem:[%s2502 + $0x14] sm:$0xf]
        %v2509 = vld [vmem:[%s2502 + $0x18] sm:$0xf]
        %v2510 = vld [vmem:[%s2502 + $0x1c] sm:$0xf]
        %v2511 = vld [vmem:[%s2502 + $0x20] sm:$0xf]
        %v2512 = vld [vmem:[%s2502 + $0x24] sm:$0xf]
        %v2513 = vld [vmem:[%s2502 + $0x28] sm:$0xf]
        %v2514 = vld [vmem:[%s2502 + $0x2c] sm:$0xf]
        %v2515 = vld [vmem:[%s2502 + $0x30] sm:$0xf]
        %v2516 = vld [vmem:[%s2502 + $0x34] sm:$0xf]
        %v2517 = vld [vmem:[%s2502 + $0x38] sm:$0xf]
        %v2518 = vld [vmem:[%s2502 + $0x3c] sm:$0xf]
        %s2519 = scalar_lea.vmem %s7, 1
        %v2520 = vld [vmem:[%s2519] sm:$0x1]
        %v2522 = vlaneseq
        %v2523 = vshrl.u32 %v2522, 7
        %v2524 = vsub.s32 0, %v2523
        %v2525 = vrot.slane %v2520, %v2524
        %v2543 = vunpack.c.l.b16 %v2503
        %v2544 = vunpack.c.l.b16 %v2504
        %v2545 = vunpack.c.l.b16 %v2505
        %v2546 = vunpack.c.l.b16 %v2506
        %v2547 = vunpack.c.l.b16 %v2507
        %v2548 = vunpack.c.l.b16 %v2508
        %v2549 = vunpack.c.l.b16 %v2509
        %v2550 = vunpack.c.l.b16 %v2510
        %v2551 = vunpack.c.l.b16 %v2511
        %v2552 = vunpack.c.l.b16 %v2512
        %v2553 = vunpack.c.l.b16 %v2513
        %v2554 = vunpack.c.l.b16 %v2514
        %v2555 = vunpack.c.l.b16 %v2515
        %v2556 = vunpack.c.l.b16 %v2516
        %v2557 = vunpack.c.l.b16 %v2517
        %v2558 = vunpack.c.l.b16 %v2518
        %v2559 = vpack.c.b16 %v2544, %v2543
        %v2560 = vpack.c.b16 %v2546, %v2545
        %v2561 = vpack.c.b16 %v2548, %v2547
        %v2562 = vpack.c.b16 %v2550, %v2549
        %v2563 = vpack.c.b16 %v2552, %v2551
        %v2564 = vpack.c.b16 %v2554, %v2553
        %v2565 = vpack.c.b16 %v2556, %v2555
        %v2566 = vpack.c.b16 %v2558, %v2557
        %2575 = vmatprep.subr.bf16.mxu0 0
        %2576 = vmatpush1.bf16.msra.mxu0 %v2559
        %2577 = vmatprep.subr.bf16.mxu0 0
        %2578 = vmatpush1.bf16.msra.mxu0 %v2560
        %2579 = vmatprep.subr.bf16.mxu0 0
        %2580 = vmatpush1.bf16.msra.mxu0 %v2561
        %2581 = vmatprep.subr.bf16.mxu0 0
        %2582 = vmatpush1.bf16.msra.mxu0 %v2562
        %2583 = vmatprep.subr.bf16.mxu0 0
        %2584 = vmatpush1.bf16.msra.mxu0 %v2563
        %2585 = vmatprep.subr.bf16.mxu0 0
        %2586 = vmatpush1.bf16.msra.mxu0 %v2564
        %2587 = vmatprep.subr.bf16.mxu0 0
        %2588 = vmatpush1.bf16.msra.mxu0 %v2565
        %2589 = vmatprep.subr.bf16.mxu0 0
        %2590 = vmatpush1.bf16.msra.mxu0 %v2566
        %2591 = vmatprep.subr.bf16.mxu0 0
        %2592 = vmatpush1.bf16.msra.mxu0 0
        %2593 = vmatprep.subr.bf16.mxu0 0
        %2594 = vmatpush1.bf16.msra.mxu0 0
        %2595 = vmatprep.subr.bf16.mxu0 0
        %2596 = vmatpush1.bf16.msra.mxu0 0
        %2597 = vmatprep.subr.bf16.mxu0 0
        %2598 = vmatpush1.bf16.msra.mxu0 0
        %2599 = vmatprep.subr.bf16.mxu0 0
        %2600 = vmatpush1.bf16.msra.mxu0 0
        %2601 = vmatprep.subr.bf16.mxu0 0
        %2602 = vmatpush1.bf16.msra.mxu0 0
        %2603 = vmatprep.subr.bf16.mxu0 0
        %2604 = vmatpush1.bf16.msra.mxu0 0
        %2605 = vmatprep.subr.bf16.mxu0 0
        %2606 = vmatpush1.bf16.msra.mxu0 0
        %2607 = vmatprep.mubr.bf16.mxu0 0
        %2608 = vmatmul.mubr.bf16.gmra.mrb[0].mxu0 %v2494
        %v2609 = vpop.f32.mrb[0].mxu0
        %v2610 = vadd.f32 %v2525, %v2609
        %v2611 = vpop.f32.mrb[0].mxu0
        %v2612 = vpop.f32.mrb[0].mxu0
        %v2613 = vadd.f32 %v2525, %v2612
        %v2614 = vpop.f32.mrb[0].mxu0
        %2615 = vmatprep.mubr.bf16.mxu0 0
        %2616 = vmatmul.mubr.bf16.gmra.mrb[0].mxu0 %v2495
        %v2617 = vpop.f32.mrb[0].mxu0
        %v2618 = vadd.f32 %v2525, %v2617
        %v2619 = vpop.f32.mrb[0].mxu0
        %v2620 = vpop.f32.mrb[0].mxu0
        %v2621 = vadd.f32 %v2525, %v2620
        %v2622 = vpop.f32.mrb[0].mxu0
        %2623 = vmatprep.mubr.bf16.mxu0 0
        %2624 = vmatmul.mubr.bf16.gmra.mrb[0].mxu0 %v2496
        %v2625 = vpop.f32.mrb[0].mxu0
        %v2626 = vadd.f32 %v2525, %v2625
        %v2627 = vpop.f32.mrb[0].mxu0
        %v2628 = vpop.f32.mrb[0].mxu0
        %v2629 = vadd.f32 %v2525, %v2628
        %v2630 = vpop.f32.mrb[0].mxu0
        %2631 = vmatprep.mubr.bf16.mxu0 0
        %2632 = vmatmul.mubr.bf16.gmra.mrb[0].mxu0 %v2497
        %v2633 = vpop.f32.mrb[0].mxu0
        %v2634 = vadd.f32 %v2525, %v2633
        %v2635 = vpop.f32.mrb[0].mxu0
        %v2636 = vpop.f32.mrb[0].mxu0
        %v2637 = vadd.f32 %v2525, %v2636
        %v2638 = vpop.f32.mrb[0].mxu0
        %2639 = vmatprep.mubr.bf16.mxu0 0
        %2640 = vmatmul.mubr.bf16.gmra.mrb[0].mxu0 %v2498
        %v2641 = vpop.f32.mrb[0].mxu0
        %v2642 = vadd.f32 %v2525, %v2641
        %v2643 = vpop.f32.mrb[0].mxu0
        %v2644 = vpop.f32.mrb[0].mxu0
        %v2645 = vadd.f32 %v2525, %v2644
        %v2646 = vpop.f32.mrb[0].mxu0
        %2647 = vmatprep.mubr.bf16.mxu0 0
        %2648 = vmatmul.mubr.bf16.gmra.mrb[0].mxu0 %v2499
        %v2649 = vpop.f32.mrb[0].mxu0
        %v2650 = vadd.f32 %v2525, %v2649
        %v2651 = vpop.f32.mrb[0].mxu0
        %v2652 = vpop.f32.mrb[0].mxu0
        %v2653 = vadd.f32 %v2525, %v2652
        %v2654 = vpop.f32.mrb[0].mxu0
        %2655 = vmatprep.mubr.bf16.mxu0 0
        %2656 = vmatmul.mubr.bf16.gmra.mrb[0].mxu0 %v2500
        %v2657 = vpop.f32.mrb[0].mxu0
        %v2658 = vadd.f32 %v2525, %v2657
        %v2659 = vpop.f32.mrb[0].mxu0
        %v2660 = vpop.f32.mrb[0].mxu0
        %v2661 = vadd.f32 %v2525, %v2660
        %v2662 = vpop.f32.mrb[0].mxu0
        %2663 = vmatprep.mubr.bf16.mxu0 0
        %2664 = vmatmul.mubr.bf16.gmra.mrb[0].mxu0 %v2501
        %v2665 = vpop.f32.mrb[0].mxu0
        %v2666 = vadd.f32 %v2525, %v2665
        %v2667 = vpop.f32.mrb[0].mxu0
        %v2668 = vpop.f32.mrb[0].mxu0
        %v2669 = vadd.f32 %v2525, %v2668
        %v2670 = vpop.f32.mrb[0].mxu0
        %2671 = vdwg.mxu0
        %v2672 = vmax.f32 %v2610, 0.0
        %v2673 = vmax.f32 %v2613, 0.0
        %v2674 = vmax.f32 %v2618, 0.0
        %v2675 = vmax.f32 %v2621, 0.0
        %v2676 = vmax.f32 %v2626, 0.0
        %v2677 = vmax.f32 %v2629, 0.0
        %v2678 = vmax.f32 %v2634, 0.0
        %v2679 = vmax.f32 %v2637, 0.0
        %v2680 = vmax.f32 %v2642, 0.0
        %v2681 = vmax.f32 %v2645, 0.0
        %v2682 = vmax.f32 %v2650, 0.0
        %v2683 = vmax.f32 %v2653, 0.0
        %v2684 = vmax.f32 %v2658, 0.0
        %v2685 = vmax.f32 %v2661, 0.0
        %v2686 = vmax.f32 %v2666, 0.0
        %v2687 = vmax.f32 %v2669, 0.0
        %v2688 = vpack.c.bf16 %v2673, %v2672
        %v2689 = vpack.c.bf16 %v2675, %v2674
        %v2690 = vpack.c.bf16 %v2677, %v2676
        %v2691 = vpack.c.bf16 %v2679, %v2678
        %v2692 = vpack.c.bf16 %v2681, %v2680
        %v2693 = vpack.c.bf16 %v2683, %v2682
        %v2694 = vpack.c.bf16 %v2685, %v2684
        %v2695 = vpack.c.bf16 %v2687, %v2686
        %s2696 = scalar_lea.vmem [#allocation9], 64
        %v2697 = vld [vmem:[%s2696] sm:$0xf]
        %v2698 = vld [vmem:[%s2696 + $0x4] sm:$0xf]
        %v2699 = vld [vmem:[%s2696 + $0x8] sm:$0xf]
        %v2700 = vld [vmem:[%s2696 + $0xc] sm:$0xf]
        %v2701 = vld [vmem:[%s2696 + $0x10] sm:$0xf]
        %v2702 = vld [vmem:[%s2696 + $0x14] sm:$0xf]
        %v2703 = vld [vmem:[%s2696 + $0x18] sm:$0xf]
        %v2704 = vld [vmem:[%s2696 + $0x1c] sm:$0xf]
        %v2705 = vld [vmem:[%s2696 + $0x20] sm:$0xf]
        %v2706 = vld [vmem:[%s2696 + $0x24] sm:$0xf]
        %v2707 = vld [vmem:[%s2696 + $0x28] sm:$0xf]
        %v2708 = vld [vmem:[%s2696 + $0x2c] sm:$0xf]
        %v2709 = vld [vmem:[%s2696 + $0x30] sm:$0xf]
        %v2710 = vld [vmem:[%s2696 + $0x34] sm:$0xf]
        %v2711 = vld [vmem:[%s2696 + $0x38] sm:$0xf]
        %v2712 = vld [vmem:[%s2696 + $0x3c] sm:$0xf]
        %s2713 = scalar_lea.vmem %s9, 1
        %v2714 = vld [vmem:[%s2713] sm:$0x1]
        %v2716 = vlaneseq
        %v2717 = vshrl.u32 %v2716, 7
        %v2718 = vsub.s32 0, %v2717
        %v2719 = vrot.slane %v2714, %v2718
        %v2737 = vunpack.c.l.b16 %v2697
        %v2738 = vunpack.c.l.b16 %v2698
        %v2739 = vunpack.c.l.b16 %v2699
        %v2740 = vunpack.c.l.b16 %v2700
        %v2741 = vunpack.c.l.b16 %v2701
        %v2742 = vunpack.c.l.b16 %v2702
        %v2743 = vunpack.c.l.b16 %v2703
        %v2744 = vunpack.c.l.b16 %v2704
        %v2745 = vunpack.c.l.b16 %v2705
        %v2746 = vunpack.c.l.b16 %v2706
        %v2747 = vunpack.c.l.b16 %v2707
        %v2748 = vunpack.c.l.b16 %v2708
        %v2749 = vunpack.c.l.b16 %v2709
        %v2750 = vunpack.c.l.b16 %v2710
        %v2751 = vunpack.c.l.b16 %v2711
        %v2752 = vunpack.c.l.b16 %v2712
        %v2753 = vpack.c.b16 %v2738, %v2737
        %v2754 = vpack.c.b16 %v2740, %v2739
        %v2755 = vpack.c.b16 %v2742, %v2741
        %v2756 = vpack.c.b16 %v2744, %v2743
        %v2757 = vpack.c.b16 %v2746, %v2745
        %v2758 = vpack.c.b16 %v2748, %v2747
        %v2759 = vpack.c.b16 %v2750, %v2749
        %v2760 = vpack.c.b16 %v2752, %v2751
        %2769 = vmatprep.subr.bf16.mxu0 0
        %2770 = vmatpush1.bf16.msra.mxu0 %v2753
        %2771 = vmatprep.subr.bf16.mxu0 0
        %2772 = vmatpush1.bf16.msra.mxu0 %v2754
        %2773 = vmatprep.subr.bf16.mxu0 0
        %2774 = vmatpush1.bf16.msra.mxu0 %v2755
        %2775 = vmatprep.subr.bf16.mxu0 0
        %2776 = vmatpush1.bf16.msra.mxu0 %v2756
        %2777 = vmatprep.subr.bf16.mxu0 0
        %2778 = vmatpush1.bf16.msra.mxu0 %v2757
        %2779 = vmatprep.subr.bf16.mxu0 0
        %2780 = vmatpush1.bf16.msra.mxu0 %v2758
        %2781 = vmatprep.subr.bf16.mxu0 0
        %2782 = vmatpush1.bf16.msra.mxu0 %v2759
        %2783 = vmatprep.subr.bf16.mxu0 0
        %2784 = vmatpush1.bf16.msra.mxu0 %v2760
        %2785 = vmatprep.subr.bf16.mxu0 0
        %2786 = vmatpush1.bf16.msra.mxu0 0
        %2787 = vmatprep.subr.bf16.mxu0 0
        %2788 = vmatpush1.bf16.msra.mxu0 0
        %2789 = vmatprep.subr.bf16.mxu0 0
        %2790 = vmatpush1.bf16.msra.mxu0 0
        %2791 = vmatprep.subr.bf16.mxu0 0
        %2792 = vmatpush1.bf16.msra.mxu0 0
        %2793 = vmatprep.subr.bf16.mxu0 0
        %2794 = vmatpush1.bf16.msra.mxu0 0
        %2795 = vmatprep.subr.bf16.mxu0 0
        %2796 = vmatpush1.bf16.msra.mxu0 0
        %2797 = vmatprep.subr.bf16.mxu0 0
        %2798 = vmatpush1.bf16.msra.mxu0 0
        %2799 = vmatprep.subr.bf16.mxu0 0
        %2800 = vmatpush1.bf16.msra.mxu0 0
        %2801 = vmatprep.mubr.bf16.mxu0 0
        %2802 = vmatmul.mubr.bf16.gmra.mrb[0].mxu0 %v2688
        %v2803 = vpop.f32.mrb[0].mxu0
        %v2804 = vadd.f32 %v2719, %v2803
        %v2805 = vpop.f32.mrb[0].mxu0
        %v2806 = vpop.f32.mrb[0].mxu0
        %v2807 = vadd.f32 %v2719, %v2806
        %v2808 = vpop.f32.mrb[0].mxu0
        %2809 = vmatprep.mubr.bf16.mxu0 0
        %2810 = vmatmul.mubr.bf16.gmra.mrb[0].mxu0 %v2689
        %v2811 = vpop.f32.mrb[0].mxu0
        %v2812 = vadd.f32 %v2719, %v2811
        %v2813 = vpop.f32.mrb[0].mxu0
        %v2814 = vpop.f32.mrb[0].mxu0
        %v2815 = vadd.f32 %v2719, %v2814
        %v2816 = vpop.f32.mrb[0].mxu0
        %2817 = vmatprep.mubr.bf16.mxu0 0
        %2818 = vmatmul.mubr.bf16.gmra.mrb[0].mxu0 %v2690
        %v2819 = vpop.f32.mrb[0].mxu0
        %v2820 = vadd.f32 %v2719, %v2819
        %v2821 = vpop.f32.mrb[0].mxu0
        %v2822 = vpop.f32.mrb[0].mxu0
        %v2823 = vadd.f32 %v2719, %v2822
        %v2824 = vpop.f32.mrb[0].mxu0
        %2825 = vmatprep.mubr.bf16.mxu0 0
        %2826 = vmatmul.mubr.bf16.gmra.mrb[0].mxu0 %v2691
        %v2827 = vpop.f32.mrb[0].mxu0
        %v2828 = vadd.f32 %v2719, %v2827
        %v2829 = vpop.f32.mrb[0].mxu0
        %v2830 = vpop.f32.mrb[0].mxu0
        %v2831 = vadd.f32 %v2719, %v2830
        %v2832 = vpop.f32.mrb[0].mxu0
        %2833 = vmatprep.mubr.bf16.mxu0 0
        %2834 = vmatmul.mubr.bf16.gmra.mrb[0].mxu0 %v2692
        %v2835 = vpop.f32.mrb[0].mxu0
        %v2836 = vadd.f32 %v2719, %v2835
        %v2837 = vpop.f32.mrb[0].mxu0
        %v2838 = vpop.f32.mrb[0].mxu0
        %v2839 = vadd.f32 %v2719, %v2838
        %v2840 = vpop.f32.mrb[0].mxu0
        %2841 = vmatprep.mubr.bf16.mxu0 0
        %2842 = vmatmul.mubr.bf16.gmra.mrb[0].mxu0 %v2693
        %v2843 = vpop.f32.mrb[0].mxu0
        %v2844 = vadd.f32 %v2719, %v2843
        %v2845 = vpop.f32.mrb[0].mxu0
        %v2846 = vpop.f32.mrb[0].mxu0
        %v2847 = vadd.f32 %v2719, %v2846
        %v2848 = vpop.f32.mrb[0].mxu0
        %2849 = vmatprep.mubr.bf16.mxu0 0
        %2850 = vmatmul.mubr.bf16.gmra.mrb[0].mxu0 %v2694
        %v2851 = vpop.f32.mrb[0].mxu0
        %v2852 = vadd.f32 %v2719, %v2851
        %v2853 = vpop.f32.mrb[0].mxu0
        %v2854 = vpop.f32.mrb[0].mxu0
        %v2855 = vadd.f32 %v2719, %v2854
        %v2856 = vpop.f32.mrb[0].mxu0
        %2857 = vmatprep.mubr.bf16.mxu0 0
        %2858 = vmatmul.mubr.bf16.gmra.mrb[0].mxu0 %v2695
        %v2859 = vpop.f32.mrb[0].mxu0
        %v2860 = vadd.f32 %v2719, %v2859
        %v2861 = vpop.f32.mrb[0].mxu0
        %v2862 = vpop.f32.mrb[0].mxu0
        %v2863 = vadd.f32 %v2719, %v2862
        %v2864 = vpop.f32.mrb[0].mxu0
        %2865 = vdwg.mxu0
        %2866 = vmatprep.subr.mxu0 0.0
        %2867 = vmatpush1.msra.mxu0 %v2804
        %2868 = vmatprep.subr.mxu0 0.0
        %2869 = vmatpush1.msra.mxu0 %v2807
        %2870 = vmatprep.subr.mxu0 0.0
        %2871 = vmatpush1.msra.mxu0 %v2812
        %2872 = vmatprep.subr.mxu0 0.0
        %2873 = vmatpush1.msra.mxu0 %v2815
        %2874 = vmatprep.subr.mxu0 0.0
        %2875 = vmatpush1.msra.mxu0 %v2820
        %2876 = vmatprep.subr.mxu0 0.0
        %2877 = vmatpush1.msra.mxu0 %v2823
        %2878 = vmatprep.subr.mxu0 0.0
        %2879 = vmatpush1.msra.mxu0 %v2828
        %2880 = vmatprep.subr.mxu0 0.0
        %2881 = vmatpush1.msra.mxu0 %v2831
        %2882 = vmatprep.subr.mxu0 0.0
        %2883 = vmatpush1.msra.mxu0 %v2836
        %2884 = vmatprep.subr.mxu0 0.0
        %2885 = vmatpush1.msra.mxu0 %v2839
        %2886 = vmatprep.subr.mxu0 0.0
        %2887 = vmatpush1.msra.mxu0 %v2844
        %2888 = vmatprep.subr.mxu0 0.0
        %2889 = vmatpush1.msra.mxu0 %v2847
        %2890 = vmatprep.subr.mxu0 0.0
        %2891 = vmatpush1.msra.mxu0 %v2852
        %2892 = vmatprep.subr.mxu0 0.0
        %2893 = vmatpush1.msra.mxu0 %v2855
        %2894 = vmatprep.subr.mxu0 0.0
        %2895 = vmatpush1.msra.mxu0 %v2860
        %2896 = vmatprep.subr.mxu0 0.0
        %2897 = vmatpush1.msra.mxu0 %v2863
        %2898 = vmatprep.subr.mxu0 0.0
        %2899 = vmatpush1.msra.mxu0 0.0
        %2900 = vmatprep.subr.mxu0 0.0
        %2901 = vmatpush1.msra.mxu0 0.0
        %2902 = vmatprep.subr.mxu0 0.0
        %2903 = vmatpush1.msra.mxu0 0.0
        %2904 = vmatprep.subr.mxu0 0.0
        %2905 = vmatpush1.msra.mxu0 0.0
        %2906 = vmatprep.subr.mxu0 0.0
        %2907 = vmatpush1.msra.mxu0 0.0
        %2908 = vmatprep.subr.mxu0 0.0
        %2909 = vmatpush1.msra.mxu0 0.0
        %2910 = vmatprep.subr.mxu0 0.0
        %2911 = vmatpush1.msra.mxu0 0.0
        %2912 = vmatprep.subr.mxu0 0.0
        %2913 = vmatpush1.msra.mxu0 0.0
        %2914 = vmatprep.subr.mxu0 0.0
        %2915 = vmatpush1.msra.mxu0 0.0
        %2916 = vmatprep.subr.mxu0 0.0
        %2917 = vmatpush1.msra.mxu0 0.0
        %2918 = vmatprep.subr.mxu0 0.0
        %2919 = vmatpush1.msra.mxu0 0.0
        %2920 = vmatprep.subr.mxu0 0.0
        %2921 = vmatpush1.msra.mxu0 0.0
        %2922 = vmatprep.subr.mxu0 0.0
        %2923 = vmatpush1.msra.mxu0 0.0
        %2924 = vmatprep.subr.mxu0 0.0
        %2925 = vmatpush1.msra.mxu0 0.0
        %2926 = vmatprep.subr.mxu0 0.0
        %2927 = vmatpush1.msra.mxu0 0.0
        %2928 = vmatprep.subr.mxu0 0.0
        %2929 = vmatpush1.msra.mxu0 0.0
        %2930 = vmatprep.mubr.f32.mxu0 0.0
        %2931 = vmatmul.mubr.f32.gmra.mrb[0].mxu0 %v768
        %v2932 = vpop.f32.mrb[0].mxu0
        %v2933 = vadd.f32 0.0, %v2932
        %v2934 = vpop.f32.mrb[0].mxu0
        %2935 = vdwg.mxu0
        %2936 = vmatprep.subr.mxu0 0.0
        %2937 = vmatpush1.msra.mxu0 %v2933
        %2938 = vmatprep.subr.mxu0 0.0
        %2939 = vmatpush1.msra.mxu0 0.0
        %2940 = vmatprep.subr.mxu0 0.0
        %2941 = vmatpush1.msra.mxu0 0.0
        %2942 = vmatprep.subr.mxu0 0.0
        %2943 = vmatpush1.msra.mxu0 0.0
        %2944 = vmatprep.subr.mxu0 0.0
        %2945 = vmatpush1.msra.mxu0 0.0
        %2946 = vmatprep.subr.mxu0 0.0
        %2947 = vmatpush1.msra.mxu0 0.0
        %2948 = vmatprep.subr.mxu0 0.0
        %2949 = vmatpush1.msra.mxu0 0.0
        %2950 = vmatprep.subr.mxu0 0.0
        %2951 = vmatpush1.msra.mxu0 0.0
        %2952 = vmatprep.subr.mxu0 0.0
        %2953 = vmatpush1.msra.mxu0 0.0
        %2954 = vmatprep.subr.mxu0 0.0
        %2955 = vmatpush1.msra.mxu0 0.0
        %2956 = vmatprep.subr.mxu0 0.0
        %2957 = vmatpush1.msra.mxu0 0.0
        %2958 = vmatprep.subr.mxu0 0.0
        %2959 = vmatpush1.msra.mxu0 0.0
        %2960 = vmatprep.subr.mxu0 0.0
        %2961 = vmatpush1.msra.mxu0 0.0
        %2962 = vmatprep.subr.mxu0 0.0
        %2963 = vmatpush1.msra.mxu0 0.0
        %2964 = vmatprep.subr.mxu0 0.0
        %2965 = vmatpush1.msra.mxu0 0.0
        %2966 = vmatprep.subr.mxu0 0.0
        %2967 = vmatpush1.msra.mxu0 0.0
        %2968 = vmatprep.subr.mxu0 0.0
        %2969 = vmatpush1.msra.mxu0 0.0
        %2970 = vmatprep.subr.mxu0 0.0
        %2971 = vmatpush1.msra.mxu0 0.0
        %2972 = vmatprep.subr.mxu0 0.0
        %2973 = vmatpush1.msra.mxu0 0.0
        %2974 = vmatprep.subr.mxu0 0.0
        %2975 = vmatpush1.msra.mxu0 0.0
        %2976 = vmatprep.subr.mxu0 0.0
        %2977 = vmatpush1.msra.mxu0 0.0
        %2978 = vmatprep.subr.mxu0 0.0
        %2979 = vmatpush1.msra.mxu0 0.0
        %2980 = vmatprep.subr.mxu0 0.0
        %2981 = vmatpush1.msra.mxu0 0.0
        %2982 = vmatprep.subr.mxu0 0.0
        %2983 = vmatpush1.msra.mxu0 0.0
        %2984 = vmatprep.subr.mxu0 0.0
        %2985 = vmatpush1.msra.mxu0 0.0
        %2986 = vmatprep.subr.mxu0 0.0
        %2987 = vmatpush1.msra.mxu0 0.0
        %2988 = vmatprep.subr.mxu0 0.0
        %2989 = vmatpush1.msra.mxu0 0.0
        %2990 = vmatprep.subr.mxu0 0.0
        %2991 = vmatpush1.msra.mxu0 0.0
        %2992 = vmatprep.subr.mxu0 0.0
        %2993 = vmatpush1.msra.mxu0 0.0
        %2994 = vmatprep.subr.mxu0 0.0
        %2995 = vmatpush1.msra.mxu0 0.0
        %2996 = vmatprep.subr.mxu0 0.0
        %2997 = vmatpush1.msra.mxu0 0.0
        %2998 = vmatprep.subr.mxu0 0.0
        %2999 = vmatpush1.msra.mxu0 0.0
        %3000 = vmatprep.mubr.f32.mxu0 0.0
        %3001 = vmatmul.mubr.f32.gmra.mrb[0].mxu0 %v1398
        %v3002 = vpop.f32.mrb[0].mxu0
        %v3003 = vadd.f32 0.0, %v3002
        %v3004 = vpop.f32.mrb[0].mxu0
        %3005 = vmatprep.mubr.f32.mxu0 0.0
        %3006 = vmatmul.mubr.f32.gmra.mrb[0].mxu0 %v1401
        %v3007 = vpop.f32.mrb[0].mxu0
        %v3008 = vadd.f32 0.0, %v3007
        %v3009 = vpop.f32.mrb[0].mxu0
        %3010 = vmatprep.mubr.f32.mxu0 0.0
        %3011 = vmatmul.mubr.f32.gmra.mrb[0].mxu0 %v1404
        %v3012 = vpop.f32.mrb[0].mxu0
        %v3013 = vadd.f32 0.0, %v3012
        %v3014 = vpop.f32.mrb[0].mxu0
        %3015 = vmatprep.mubr.f32.mxu0 0.0
        %3016 = vmatmul.mubr.f32.gmra.mrb[0].mxu0 %v1407
        %v3017 = vpop.f32.mrb[0].mxu0
        %v3018 = vadd.f32 0.0, %v3017
        %v3019 = vpop.f32.mrb[0].mxu0
        %3020 = vmatprep.mubr.f32.mxu0 0.0
        %3021 = vmatmul.mubr.f32.gmra.mrb[0].mxu0 %v1410
        %v3022 = vpop.f32.mrb[0].mxu0
        %v3023 = vadd.f32 0.0, %v3022
        %v3024 = vpop.f32.mrb[0].mxu0
        %3025 = vmatprep.mubr.f32.mxu0 0.0
        %3026 = vmatmul.mubr.f32.gmra.mrb[0].mxu0 %v1413
        %v3027 = vpop.f32.mrb[0].mxu0
        %v3028 = vadd.f32 0.0, %v3027
        %v3029 = vpop.f32.mrb[0].mxu0
        %3030 = vmatprep.mubr.f32.mxu0 0.0
        %3031 = vmatmul.mubr.f32.gmra.mrb[0].mxu0 %v1416
        %v3032 = vpop.f32.mrb[0].mxu0
        %v3033 = vadd.f32 0.0, %v3032
        %v3034 = vpop.f32.mrb[0].mxu0
        %3035 = vmatprep.mubr.f32.mxu0 0.0
        %3036 = vmatmul.mubr.f32.gmra.mrb[0].mxu0 %v1419
        %v3037 = vpop.f32.mrb[0].mxu0
        %v3038 = vadd.f32 0.0, %v3037
        %v3039 = vpop.f32.mrb[0].mxu0
        %3040 = vmatprep.mubr.f32.mxu0 0.0
        %3041 = vmatmul.mubr.f32.gmra.mrb[0].mxu0 %v1422
        %v3042 = vpop.f32.mrb[0].mxu0
        %v3043 = vadd.f32 0.0, %v3042
        %v3044 = vpop.f32.mrb[0].mxu0
        %3045 = vmatprep.mubr.f32.mxu0 0.0
        %3046 = vmatmul.mubr.f32.gmra.mrb[0].mxu0 %v1425
        %v3047 = vpop.f32.mrb[0].mxu0
        %v3048 = vadd.f32 0.0, %v3047
        %v3049 = vpop.f32.mrb[0].mxu0
        %3050 = vmatprep.mubr.f32.mxu0 0.0
        %3051 = vmatmul.mubr.f32.gmra.mrb[0].mxu0 %v1428
        %v3052 = vpop.f32.mrb[0].mxu0
        %v3053 = vadd.f32 0.0, %v3052
        %v3054 = vpop.f32.mrb[0].mxu0
        %3055 = vmatprep.mubr.f32.mxu0 0.0
        %3056 = vmatmul.mubr.f32.gmra.mrb[0].mxu0 %v1431
        %v3057 = vpop.f32.mrb[0].mxu0
        %v3058 = vadd.f32 0.0, %v3057
        %v3059 = vpop.f32.mrb[0].mxu0
        %3060 = vmatprep.mubr.f32.mxu0 0.0
        %3061 = vmatmul.mubr.f32.gmra.mrb[0].mxu0 %v1434
        %v3062 = vpop.f32.mrb[0].mxu0
        %v3063 = vadd.f32 0.0, %v3062
        %v3064 = vpop.f32.mrb[0].mxu0
        %3065 = vmatprep.mubr.f32.mxu0 0.0
        %3066 = vmatmul.mubr.f32.gmra.mrb[0].mxu0 %v1437
        %v3067 = vpop.f32.mrb[0].mxu0
        %v3068 = vadd.f32 0.0, %v3067
        %v3069 = vpop.f32.mrb[0].mxu0
        %3070 = vmatprep.mubr.f32.mxu0 0.0
        %3071 = vmatmul.mubr.f32.gmra.mrb[0].mxu0 %v1440
        %v3072 = vpop.f32.mrb[0].mxu0
        %v3073 = vadd.f32 0.0, %v3072
        %v3074 = vpop.f32.mrb[0].mxu0
        %3075 = vmatprep.mubr.f32.mxu0 0.0
        %3076 = vmatmul.mubr.f32.gmra.mrb[0].mxu0 %v1443
        %v3077 = vpop.f32.mrb[0].mxu0
        %v3078 = vadd.f32 0.0, %v3077
        %v3079 = vpop.f32.mrb[0].mxu0
        %3080 = vdwg.mxu0
        %s3081 = scalar_lea.vmem %s12, 1
        %v3082 = vld [vmem:[%s3081] sm:$0x1]
        %v3084 = vlaneseq
        %v3085 = vshrl.u32 %v3084, 7
        %v3086 = vsub.s32 0, %v3085
        %v3087 = vrot.slane %v3082, %v3086
        %v3089 = vmul.f32 %v3003, %v3087
        %v3090 = vmul.f32 %v3008, %v3087
        %v3091 = vmul.f32 %v3013, %v3087
        %v3092 = vmul.f32 %v3018, %v3087
        %v3093 = vmul.f32 %v3023, %v3087
        %v3094 = vmul.f32 %v3028, %v3087
        %v3095 = vmul.f32 %v3033, %v3087
        %v3096 = vmul.f32 %v3038, %v3087
        %v3097 = vmul.f32 %v3043, %v3087
        %v3098 = vmul.f32 %v3048, %v3087
        %v3099 = vmul.f32 %v3053, %v3087
        %v3100 = vmul.f32 %v3058, %v3087
        %v3101 = vmul.f32 %v3063, %v3087
        %v3102 = vmul.f32 %v3068, %v3087
        %v3103 = vmul.f32 %v3073, %v3087
        %v3104 = vmul.f32 %v3078, %v3087
        %v3105 = vsub.f32 %v2804, %v3089
        %v3106 = vsub.f32 %v2807, %v3090
        %v3107 = vsub.f32 %v2812, %v3091
        %v3108 = vsub.f32 %v2815, %v3092
        %v3109 = vsub.f32 %v2820, %v3093
        %v3110 = vsub.f32 %v2823, %v3094
        %v3111 = vsub.f32 %v2828, %v3095
        %v3112 = vsub.f32 %v2831, %v3096
        %v3113 = vsub.f32 %v2836, %v3097
        %v3114 = vsub.f32 %v2839, %v3098
        %v3115 = vsub.f32 %v2844, %v3099
        %v3116 = vsub.f32 %v2847, %v3100
        %v3117 = vsub.f32 %v2852, %v3101
        %v3118 = vsub.f32 %v2855, %v3102
        %v3119 = vsub.f32 %v2860, %v3103
        %v3120 = vsub.f32 %v2863, %v3104
        %v3121 = vmul.f32 %v3105, %v3105
        %v3122 = vmul.f32 %v3106, %v3106
        %v3123 = vmul.f32 %v3107, %v3107
        %v3124 = vmul.f32 %v3108, %v3108
        %v3125 = vmul.f32 %v3109, %v3109
        %v3126 = vmul.f32 %v3110, %v3110
        %v3127 = vmul.f32 %v3111, %v3111
        %v3128 = vmul.f32 %v3112, %v3112
        %v3129 = vmul.f32 %v3113, %v3113
        %v3130 = vmul.f32 %v3114, %v3114
        %v3131 = vmul.f32 %v3115, %v3115
        %v3132 = vmul.f32 %v3116, %v3116
        %v3133 = vmul.f32 %v3117, %v3117
        %v3134 = vmul.f32 %v3118, %v3118
        %v3135 = vmul.f32 %v3119, %v3119
        %v3136 = vmul.f32 %v3120, %v3120
        %3137 = vmatprep.subr.mxu0 0.0
        %3138 = vmatpush1.msra.mxu0 %v3121
        %3139 = vmatprep.subr.mxu0 0.0
        %3140 = vmatpush1.msra.mxu0 %v3122
        %3141 = vmatprep.subr.mxu0 0.0
        %3142 = vmatpush1.msra.mxu0 %v3123
        %3143 = vmatprep.subr.mxu0 0.0
        %3144 = vmatpush1.msra.mxu0 %v3124
        %3145 = vmatprep.subr.mxu0 0.0
        %3146 = vmatpush1.msra.mxu0 %v3125
        %3147 = vmatprep.subr.mxu0 0.0
        %3148 = vmatpush1.msra.mxu0 %v3126
        %3149 = vmatprep.subr.mxu0 0.0
        %3150 = vmatpush1.msra.mxu0 %v3127
        %3151 = vmatprep.subr.mxu0 0.0
        %3152 = vmatpush1.msra.mxu0 %v3128
        %3153 = vmatprep.subr.mxu0 0.0
        %3154 = vmatpush1.msra.mxu0 %v3129
        %3155 = vmatprep.subr.mxu0 0.0
        %3156 = vmatpush1.msra.mxu0 %v3130
        %3157 = vmatprep.subr.mxu0 0.0
        %3158 = vmatpush1.msra.mxu0 %v3131
        %3159 = vmatprep.subr.mxu0 0.0
        %3160 = vmatpush1.msra.mxu0 %v3132
        %3161 = vmatprep.subr.mxu0 0.0
        %3162 = vmatpush1.msra.mxu0 %v3133
        %3163 = vmatprep.subr.mxu0 0.0
        %3164 = vmatpush1.msra.mxu0 %v3134
        %3165 = vmatprep.subr.mxu0 0.0
        %3166 = vmatpush1.msra.mxu0 %v3135
        %3167 = vmatprep.subr.mxu0 0.0
        %3168 = vmatpush1.msra.mxu0 %v3136
        %3169 = vmatprep.subr.mxu0 0.0
        %3170 = vmatpush1.msra.mxu0 0.0
        %3171 = vmatprep.subr.mxu0 0.0
        %3172 = vmatpush1.msra.mxu0 0.0
        %3173 = vmatprep.subr.mxu0 0.0
        %3174 = vmatpush1.msra.mxu0 0.0
        %3175 = vmatprep.subr.mxu0 0.0
        %3176 = vmatpush1.msra.mxu0 0.0
        %3177 = vmatprep.subr.mxu0 0.0
        %3178 = vmatpush1.msra.mxu0 0.0
        %3179 = vmatprep.subr.mxu0 0.0
        %3180 = vmatpush1.msra.mxu0 0.0
        %3181 = vmatprep.subr.mxu0 0.0
        %3182 = vmatpush1.msra.mxu0 0.0
        %3183 = vmatprep.subr.mxu0 0.0
        %3184 = vmatpush1.msra.mxu0 0.0
        %3185 = vmatprep.subr.mxu0 0.0
        %3186 = vmatpush1.msra.mxu0 0.0
        %3187 = vmatprep.subr.mxu0 0.0
        %3188 = vmatpush1.msra.mxu0 0.0
        %3189 = vmatprep.subr.mxu0 0.0
        %3190 = vmatpush1.msra.mxu0 0.0
        %3191 = vmatprep.subr.mxu0 0.0
        %3192 = vmatpush1.msra.mxu0 0.0
        %3193 = vmatprep.subr.mxu0 0.0
        %3194 = vmatpush1.msra.mxu0 0.0
        %3195 = vmatprep.subr.mxu0 0.0
        %3196 = vmatpush1.msra.mxu0 0.0
        %3197 = vmatprep.subr.mxu0 0.0
        %3198 = vmatpush1.msra.mxu0 0.0
        %3199 = vmatprep.subr.mxu0 0.0
        %3200 = vmatpush1.msra.mxu0 0.0
        %3201 = vmatprep.mubr.f32.mxu0 0.0
        %3202 = vmatmul.mubr.f32.gmra.mrb[0].mxu0 %v768
        %v3203 = vpop.f32.mrb[0].mxu0
        %v3204 = vadd.f32 1e-08, %v3203
        %v3205 = vpop.f32.mrb[0].mxu0
        %3206 = vdwg.mxu0
        %v3207 = vrsqrt.pop %v3204
        %3208 = vmatprep.subr.mxu0 0.0
        %3209 = vmatpush1.msra.mxu0 %v3207
        %3210 = vmatprep.subr.mxu0 0.0
        %3211 = vmatpush1.msra.mxu0 0.0
        %3212 = vmatprep.subr.mxu0 0.0
        %3213 = vmatpush1.msra.mxu0 0.0
        %3214 = vmatprep.subr.mxu0 0.0
        %3215 = vmatpush1.msra.mxu0 0.0
        %3216 = vmatprep.subr.mxu0 0.0
        %3217 = vmatpush1.msra.mxu0 0.0
        %3218 = vmatprep.subr.mxu0 0.0
        %3219 = vmatpush1.msra.mxu0 0.0
        %3220 = vmatprep.subr.mxu0 0.0
        %3221 = vmatpush1.msra.mxu0 0.0
        %3222 = vmatprep.subr.mxu0 0.0
        %3223 = vmatpush1.msra.mxu0 0.0
        %3224 = vmatprep.subr.mxu0 0.0
        %3225 = vmatpush1.msra.mxu0 0.0
        %3226 = vmatprep.subr.mxu0 0.0
        %3227 = vmatpush1.msra.mxu0 0.0
        %3228 = vmatprep.subr.mxu0 0.0
        %3229 = vmatpush1.msra.mxu0 0.0
        %3230 = vmatprep.subr.mxu0 0.0
        %3231 = vmatpush1.msra.mxu0 0.0
        %3232 = vmatprep.subr.mxu0 0.0
        %3233 = vmatpush1.msra.mxu0 0.0
        %3234 = vmatprep.subr.mxu0 0.0
        %3235 = vmatpush1.msra.mxu0 0.0
        %3236 = vmatprep.subr.mxu0 0.0
        %3237 = vmatpush1.msra.mxu0 0.0
        %3238 = vmatprep.subr.mxu0 0.0
        %3239 = vmatpush1.msra.mxu0 0.0
        %3240 = vmatprep.subr.mxu0 0.0
        %3241 = vmatpush1.msra.mxu0 0.0
        %3242 = vmatprep.subr.mxu0 0.0
        %3243 = vmatpush1.msra.mxu0 0.0
        %3244 = vmatprep.subr.mxu0 0.0
        %3245 = vmatpush1.msra.mxu0 0.0
        %3246 = vmatprep.subr.mxu0 0.0
        %3247 = vmatpush1.msra.mxu0 0.0
        %3248 = vmatprep.subr.mxu0 0.0
        %3249 = vmatpush1.msra.mxu0 0.0
        %3250 = vmatprep.subr.mxu0 0.0
        %3251 = vmatpush1.msra.mxu0 0.0
        %3252 = vmatprep.subr.mxu0 0.0
        %3253 = vmatpush1.msra.mxu0 0.0
        %3254 = vmatprep.subr.mxu0 0.0
        %3255 = vmatpush1.msra.mxu0 0.0
        %3256 = vmatprep.subr.mxu0 0.0
        %3257 = vmatpush1.msra.mxu0 0.0
        %3258 = vmatprep.subr.mxu0 0.0
        %3259 = vmatpush1.msra.mxu0 0.0
        %3260 = vmatprep.subr.mxu0 0.0
        %3261 = vmatpush1.msra.mxu0 0.0
        %3262 = vmatprep.subr.mxu0 0.0
        %3263 = vmatpush1.msra.mxu0 0.0
        %3264 = vmatprep.subr.mxu0 0.0
        %3265 = vmatpush1.msra.mxu0 0.0
        %3266 = vmatprep.subr.mxu0 0.0
        %3267 = vmatpush1.msra.mxu0 0.0
        %3268 = vmatprep.subr.mxu0 0.0
        %3269 = vmatpush1.msra.mxu0 0.0
        %3270 = vmatprep.subr.mxu0 0.0
        %3271 = vmatpush1.msra.mxu0 0.0
        %3272 = vmatprep.mubr.f32.mxu0 0.0
        %3273 = vmatmul.mubr.f32.gmra.mrb[0].mxu0 %v1398
        %v3274 = vpop.f32.mrb[0].mxu0
        %v3275 = vadd.f32 0.0, %v3274
        %v3276 = vpop.f32.mrb[0].mxu0
        %3277 = vmatprep.mubr.f32.mxu0 0.0
        %3278 = vmatmul.mubr.f32.gmra.mrb[0].mxu0 %v1401
        %v3279 = vpop.f32.mrb[0].mxu0
        %v3280 = vadd.f32 0.0, %v3279
        %v3281 = vpop.f32.mrb[0].mxu0
        %3282 = vmatprep.mubr.f32.mxu0 0.0
        %3283 = vmatmul.mubr.f32.gmra.mrb[0].mxu0 %v1404
        %v3284 = vpop.f32.mrb[0].mxu0
        %v3285 = vadd.f32 0.0, %v3284
        %v3286 = vpop.f32.mrb[0].mxu0
        %3287 = vmatprep.mubr.f32.mxu0 0.0
        %3288 = vmatmul.mubr.f32.gmra.mrb[0].mxu0 %v1407
        %v3289 = vpop.f32.mrb[0].mxu0
        %v3290 = vadd.f32 0.0, %v3289
        %v3291 = vpop.f32.mrb[0].mxu0
        %3292 = vmatprep.mubr.f32.mxu0 0.0
        %3293 = vmatmul.mubr.f32.gmra.mrb[0].mxu0 %v1410
        %v3294 = vpop.f32.mrb[0].mxu0
        %v3295 = vadd.f32 0.0, %v3294
        %v3296 = vpop.f32.mrb[0].mxu0
        %3297 = vmatprep.mubr.f32.mxu0 0.0
        %3298 = vmatmul.mubr.f32.gmra.mrb[0].mxu0 %v1413
        %v3299 = vpop.f32.mrb[0].mxu0
        %v3300 = vadd.f32 0.0, %v3299
        %v3301 = vpop.f32.mrb[0].mxu0
        %3302 = vmatprep.mubr.f32.mxu0 0.0
        %3303 = vmatmul.mubr.f32.gmra.mrb[0].mxu0 %v1416
        %v3304 = vpop.f32.mrb[0].mxu0
        %v3305 = vadd.f32 0.0, %v3304
        %v3306 = vpop.f32.mrb[0].mxu0
        %3307 = vmatprep.mubr.f32.mxu0 0.0
        %3308 = vmatmul.mubr.f32.gmra.mrb[0].mxu0 %v1419
        %v3309 = vpop.f32.mrb[0].mxu0
        %v3310 = vadd.f32 0.0, %v3309
        %v3311 = vpop.f32.mrb[0].mxu0
        %3312 = vmatprep.mubr.f32.mxu0 0.0
        %3313 = vmatmul.mubr.f32.gmra.mrb[0].mxu0 %v1422
        %v3314 = vpop.f32.mrb[0].mxu0
        %v3315 = vadd.f32 0.0, %v3314
        %v3316 = vpop.f32.mrb[0].mxu0
        %3317 = vmatprep.mubr.f32.mxu0 0.0
        %3318 = vmatmul.mubr.f32.gmra.mrb[0].mxu0 %v1425
        %v3319 = vpop.f32.mrb[0].mxu0
        %v3320 = vadd.f32 0.0, %v3319
        %v3321 = vpop.f32.mrb[0].mxu0
        %3322 = vmatprep.mubr.f32.mxu0 0.0
        %3323 = vmatmul.mubr.f32.gmra.mrb[0].mxu0 %v1428
        %v3324 = vpop.f32.mrb[0].mxu0
        %v3325 = vadd.f32 0.0, %v3324
        %v3326 = vpop.f32.mrb[0].mxu0
        %3327 = vmatprep.mubr.f32.mxu0 0.0
        %3328 = vmatmul.mubr.f32.gmra.mrb[0].mxu0 %v1431
        %v3329 = vpop.f32.mrb[0].mxu0
        %v3330 = vadd.f32 0.0, %v3329
        %v3331 = vpop.f32.mrb[0].mxu0
        %3332 = vmatprep.mubr.f32.mxu0 0.0
        %3333 = vmatmul.mubr.f32.gmra.mrb[0].mxu0 %v1434
        %v3334 = vpop.f32.mrb[0].mxu0
        %v3335 = vadd.f32 0.0, %v3334
        %v3336 = vpop.f32.mrb[0].mxu0
        %3337 = vmatprep.mubr.f32.mxu0 0.0
        %3338 = vmatmul.mubr.f32.gmra.mrb[0].mxu0 %v1437
        %v3339 = vpop.f32.mrb[0].mxu0
        %v3340 = vadd.f32 0.0, %v3339
        %v3341 = vpop.f32.mrb[0].mxu0
        %3342 = vmatprep.mubr.f32.mxu0 0.0
        %3343 = vmatmul.mubr.f32.gmra.mrb[0].mxu0 %v1440
        %v3344 = vpop.f32.mrb[0].mxu0
        %v3345 = vadd.f32 0.0, %v3344
        %v3346 = vpop.f32.mrb[0].mxu0
        %3347 = vmatprep.mubr.f32.mxu0 0.0
        %3348 = vmatmul.mubr.f32.gmra.mrb[0].mxu0 %v1443
        %v3349 = vpop.f32.mrb[0].mxu0
        %v3350 = vadd.f32 0.0, %v3349
        %v3351 = vpop.f32.mrb[0].mxu0
        %3352 = vdwg.mxu0
        %s3353 = scalar_lea.vmem %s10, 1
        %v3354 = vld [vmem:[%s3353] sm:$0x1]
        %v3356 = vlaneseq
        %v3357 = vshrl.u32 %v3356, 7
        %v3358 = vsub.s32 0, %v3357
        %v3359 = vrot.slane %v3354, %v3358
        %v3361 = vmul.f32 %v3359, %v3105
        %v3362 = vmul.f32 %v3359, %v3106
        %v3363 = vmul.f32 %v3359, %v3107
        %v3364 = vmul.f32 %v3359, %v3108
        %v3365 = vmul.f32 %v3359, %v3109
        %v3366 = vmul.f32 %v3359, %v3110
        %v3367 = vmul.f32 %v3359, %v3111
        %v3368 = vmul.f32 %v3359, %v3112
        %v3369 = vmul.f32 %v3359, %v3113
        %v3370 = vmul.f32 %v3359, %v3114
        %v3371 = vmul.f32 %v3359, %v3115
        %v3372 = vmul.f32 %v3359, %v3116
        %v3373 = vmul.f32 %v3359, %v3117
        %v3374 = vmul.f32 %v3359, %v3118
        %v3375 = vmul.f32 %v3359, %v3119
        %v3376 = vmul.f32 %v3359, %v3120
        %v3377 = vmul.f32 %v3361, %v3275
        %v3378 = vmul.f32 %v3362, %v3280
        %v3379 = vmul.f32 %v3363, %v3285
        %v3380 = vmul.f32 %v3364, %v3290
        %v3381 = vmul.f32 %v3365, %v3295
        %v3382 = vmul.f32 %v3366, %v3300
        %v3383 = vmul.f32 %v3367, %v3305
        %v3384 = vmul.f32 %v3368, %v3310
        %v3385 = vmul.f32 %v3369, %v3315
        %v3386 = vmul.f32 %v3370, %v3320
        %v3387 = vmul.f32 %v3371, %v3325
        %v3388 = vmul.f32 %v3372, %v3330
        %v3389 = vmul.f32 %v3373, %v3335
        %v3390 = vmul.f32 %v3374, %v3340
        %v3391 = vmul.f32 %v3375, %v3345
        %v3392 = vmul.f32 %v3376, %v3350
        %s3393 = scalar_lea.vmem %s11, 1
        %v3394 = vld [vmem:[%s3393] sm:$0x1]
        %v3396 = vlaneseq
        %v3397 = vshrl.u32 %v3396, 7
        %v3398 = vsub.s32 0, %v3397
        %v3399 = vrot.slane %v3394, %v3398
        %v3401 = vadd.f32 %v3377, %v3399
        %v3402 = vadd.f32 %v3378, %v3399
        %v3403 = vadd.f32 %v3379, %v3399
        %v3404 = vadd.f32 %v3380, %v3399
        %v3405 = vadd.f32 %v3381, %v3399
        %v3406 = vadd.f32 %v3382, %v3399
        %v3407 = vadd.f32 %v3383, %v3399
        %v3408 = vadd.f32 %v3384, %v3399
        %v3409 = vadd.f32 %v3385, %v3399
        %v3410 = vadd.f32 %v3386, %v3399
        %v3411 = vadd.f32 %v3387, %v3399
        %v3412 = vadd.f32 %v3388, %v3399
        %v3413 = vadd.f32 %v3389, %v3399
        %v3414 = vadd.f32 %v3390, %v3399
        %v3415 = vadd.f32 %v3391, %v3399
        %v3416 = vadd.f32 %v3392, %v3399
        %v3417 = vmax.f32 %v3401, 0.0
        %v3418 = vmax.f32 %v3402, 0.0
        %v3419 = vmax.f32 %v3403, 0.0
        %v3420 = vmax.f32 %v3404, 0.0
        %v3421 = vmax.f32 %v3405, 0.0
        %v3422 = vmax.f32 %v3406, 0.0
        %v3423 = vmax.f32 %v3407, 0.0
        %v3424 = vmax.f32 %v3408, 0.0
        %v3425 = vmax.f32 %v3409, 0.0
        %v3426 = vmax.f32 %v3410, 0.0
        %v3427 = vmax.f32 %v3411, 0.0
        %v3428 = vmax.f32 %v3412, 0.0
        %v3429 = vmax.f32 %v3413, 0.0
        %v3430 = vmax.f32 %v3414, 0.0
        %v3431 = vmax.f32 %v3415, 0.0
        %v3432 = vmax.f32 %v3416, 0.0
        %v3433 = vpack.c.bf16 %v3418, %v3417
        %v3434 = vpack.c.bf16 %v3420, %v3419
        %v3435 = vpack.c.bf16 %v3422, %v3421
        %v3436 = vpack.c.bf16 %v3424, %v3423
        %v3437 = vpack.c.bf16 %v3426, %v3425
        %v3438 = vpack.c.bf16 %v3428, %v3427
        %v3439 = vpack.c.bf16 %v3430, %v3429
        %v3440 = vpack.c.bf16 %v3432, %v3431
        %s3441 = scalar_lea.vmem [#allocation11], 64
        %v3442 = vld [vmem:[%s3441] sm:$0xf]
        %v3443 = vld [vmem:[%s3441 + $0x4] sm:$0xf]
        %v3444 = vld [vmem:[%s3441 + $0x8] sm:$0xf]
        %v3445 = vld [vmem:[%s3441 + $0xc] sm:$0xf]
        %v3446 = vld [vmem:[%s3441 + $0x10] sm:$0xf]
        %v3447 = vld [vmem:[%s3441 + $0x14] sm:$0xf]
        %v3448 = vld [vmem:[%s3441 + $0x18] sm:$0xf]
        %v3449 = vld [vmem:[%s3441 + $0x1c] sm:$0xf]
        %v3450 = vld [vmem:[%s3441 + $0x20] sm:$0xf]
        %v3451 = vld [vmem:[%s3441 + $0x24] sm:$0xf]
        %v3452 = vld [vmem:[%s3441 + $0x28] sm:$0xf]
        %v3453 = vld [vmem:[%s3441 + $0x2c] sm:$0xf]
        %v3454 = vld [vmem:[%s3441 + $0x30] sm:$0xf]
        %v3455 = vld [vmem:[%s3441 + $0x34] sm:$0xf]
        %v3456 = vld [vmem:[%s3441 + $0x38] sm:$0xf]
        %v3457 = vld [vmem:[%s3441 + $0x3c] sm:$0xf]
        %s3458 = scalar_lea.vmem %s14, 1
        %v3459 = vld [vmem:[%s3458] sm:$0x1]
        %v3461 = vlaneseq
        %v3462 = vshrl.u32 %v3461, 7
        %v3463 = vsub.s32 0, %v3462
        %v3464 = vrot.slane %v3459, %v3463
        %v3482 = vunpack.c.l.b16 %v3442
        %v3483 = vunpack.c.l.b16 %v3443
        %v3484 = vunpack.c.l.b16 %v3444
        %v3485 = vunpack.c.l.b16 %v3445
        %v3486 = vunpack.c.l.b16 %v3446
        %v3487 = vunpack.c.l.b16 %v3447
        %v3488 = vunpack.c.l.b16 %v3448
        %v3489 = vunpack.c.l.b16 %v3449
        %v3490 = vunpack.c.l.b16 %v3450
        %v3491 = vunpack.c.l.b16 %v3451
        %v3492 = vunpack.c.l.b16 %v3452
        %v3493 = vunpack.c.l.b16 %v3453
        %v3494 = vunpack.c.l.b16 %v3454
        %v3495 = vunpack.c.l.b16 %v3455
        %v3496 = vunpack.c.l.b16 %v3456
        %v3497 = vunpack.c.l.b16 %v3457
        %v3498 = vpack.c.b16 %v3483, %v3482
        %v3499 = vpack.c.b16 %v3485, %v3484
        %v3500 = vpack.c.b16 %v3487, %v3486
        %v3501 = vpack.c.b16 %v3489, %v3488
        %v3502 = vpack.c.b16 %v3491, %v3490
        %v3503 = vpack.c.b16 %v3493, %v3492
        %v3504 = vpack.c.b16 %v3495, %v3494
        %v3505 = vpack.c.b16 %v3497, %v3496
        %3514 = vmatprep.subr.bf16.mxu0 0
        %3515 = vmatpush1.bf16.msra.mxu0 %v3498
        %3516 = vmatprep.subr.bf16.mxu0 0
        %3517 = vmatpush1.bf16.msra.mxu0 %v3499
        %3518 = vmatprep.subr.bf16.mxu0 0
        %3519 = vmatpush1.bf16.msra.mxu0 %v3500
        %3520 = vmatprep.subr.bf16.mxu0 0
        %3521 = vmatpush1.bf16.msra.mxu0 %v3501
        %3522 = vmatprep.subr.bf16.mxu0 0
        %3523 = vmatpush1.bf16.msra.mxu0 %v3502
        %3524 = vmatprep.subr.bf16.mxu0 0
        %3525 = vmatpush1.bf16.msra.mxu0 %v3503
        %3526 = vmatprep.subr.bf16.mxu0 0
        %3527 = vmatpush1.bf16.msra.mxu0 %v3504
        %3528 = vmatprep.subr.bf16.mxu0 0
        %3529 = vmatpush1.bf16.msra.mxu0 %v3505
        %3530 = vmatprep.subr.bf16.mxu0 0
        %3531 = vmatpush1.bf16.msra.mxu0 0
        %3532 = vmatprep.subr.bf16.mxu0 0
        %3533 = vmatpush1.bf16.msra.mxu0 0
        %3534 = vmatprep.subr.bf16.mxu0 0
        %3535 = vmatpush1.bf16.msra.mxu0 0
        %3536 = vmatprep.subr.bf16.mxu0 0
        %3537 = vmatpush1.bf16.msra.mxu0 0
        %3538 = vmatprep.subr.bf16.mxu0 0
        %3539 = vmatpush1.bf16.msra.mxu0 0
        %3540 = vmatprep.subr.bf16.mxu0 0
        %3541 = vmatpush1.bf16.msra.mxu0 0
        %3542 = vmatprep.subr.bf16.mxu0 0
        %3543 = vmatpush1.bf16.msra.mxu0 0
        %3544 = vmatprep.subr.bf16.mxu0 0
        %3545 = vmatpush1.bf16.msra.mxu0 0
        %3546 = vmatprep.mubr.bf16.mxu0 0
        %3547 = vmatmul.mubr.bf16.gmra.mrb[0].mxu0 %v3433
        %v3548 = vpop.f32.mrb[0].mxu0
        %v3549 = vadd.f32 %v3464, %v3548
        %v3550 = vpop.f32.mrb[0].mxu0
        %v3551 = vpop.f32.mrb[0].mxu0
        %v3552 = vadd.f32 %v3464, %v3551
        %v3553 = vpop.f32.mrb[0].mxu0
        %3554 = vmatprep.mubr.bf16.mxu0 0
        %3555 = vmatmul.mubr.bf16.gmra.mrb[0].mxu0 %v3434
        %v3556 = vpop.f32.mrb[0].mxu0
        %v3557 = vadd.f32 %v3464, %v3556
        %v3558 = vpop.f32.mrb[0].mxu0
        %v3559 = vpop.f32.mrb[0].mxu0
        %v3560 = vadd.f32 %v3464, %v3559
        %v3561 = vpop.f32.mrb[0].mxu0
        %3562 = vmatprep.mubr.bf16.mxu0 0
        %3563 = vmatmul.mubr.bf16.gmra.mrb[0].mxu0 %v3435
        %v3564 = vpop.f32.mrb[0].mxu0
        %v3565 = vadd.f32 %v3464, %v3564
        %v3566 = vpop.f32.mrb[0].mxu0
        %v3567 = vpop.f32.mrb[0].mxu0
        %v3568 = vadd.f32 %v3464, %v3567
        %v3569 = vpop.f32.mrb[0].mxu0
        %3570 = vmatprep.mubr.bf16.mxu0 0
        %3571 = vmatmul.mubr.bf16.gmra.mrb[0].mxu0 %v3436
        %v3572 = vpop.f32.mrb[0].mxu0
        %v3573 = vadd.f32 %v3464, %v3572
        %v3574 = vpop.f32.mrb[0].mxu0
        %v3575 = vpop.f32.mrb[0].mxu0
        %v3576 = vadd.f32 %v3464, %v3575
        %v3577 = vpop.f32.mrb[0].mxu0
        %3578 = vmatprep.mubr.bf16.mxu0 0
        %3579 = vmatmul.mubr.bf16.gmra.mrb[0].mxu0 %v3437
        %v3580 = vpop.f32.mrb[0].mxu0
        %v3581 = vadd.f32 %v3464, %v3580
        %v3582 = vpop.f32.mrb[0].mxu0
        %v3583 = vpop.f32.mrb[0].mxu0
        %v3584 = vadd.f32 %v3464, %v3583
        %v3585 = vpop.f32.mrb[0].mxu0
        %3586 = vmatprep.mubr.bf16.mxu0 0
        %3587 = vmatmul.mubr.bf16.gmra.mrb[0].mxu0 %v3438
        %v3588 = vpop.f32.mrb[0].mxu0
        %v3589 = vadd.f32 %v3464, %v3588
        %v3590 = vpop.f32.mrb[0].mxu0
        %v3591 = vpop.f32.mrb[0].mxu0
        %v3592 = vadd.f32 %v3464, %v3591
        %v3593 = vpop.f32.mrb[0].mxu0
        %3594 = vmatprep.mubr.bf16.mxu0 0
        %3595 = vmatmul.mubr.bf16.gmra.mrb[0].mxu0 %v3439
        %v3596 = vpop.f32.mrb[0].mxu0
        %v3597 = vadd.f32 %v3464, %v3596
        %v3598 = vpop.f32.mrb[0].mxu0
        %v3599 = vpop.f32.mrb[0].mxu0
        %v3600 = vadd.f32 %v3464, %v3599
        %v3601 = vpop.f32.mrb[0].mxu0
        %3602 = vmatprep.mubr.bf16.mxu0 0
        %3603 = vmatmul.mubr.bf16.gmra.mrb[0].mxu0 %v3440
        %v3604 = vpop.f32.mrb[0].mxu0
        %v3605 = vadd.f32 %v3464, %v3604
        %v3606 = vpop.f32.mrb[0].mxu0
        %v3607 = vpop.f32.mrb[0].mxu0
        %v3608 = vadd.f32 %v3464, %v3607
        %v3609 = vpop.f32.mrb[0].mxu0
        %3610 = vdwg.mxu0
        %v3611 = vmax.f32 %v3549, 0.0
        %v3612 = vmax.f32 %v3552, 0.0
        %v3613 = vmax.f32 %v3557, 0.0
        %v3614 = vmax.f32 %v3560, 0.0
        %v3615 = vmax.f32 %v3565, 0.0
        %v3616 = vmax.f32 %v3568, 0.0
        %v3617 = vmax.f32 %v3573, 0.0
        %v3618 = vmax.f32 %v3576, 0.0
        %v3619 = vmax.f32 %v3581, 0.0
        %v3620 = vmax.f32 %v3584, 0.0
        %v3621 = vmax.f32 %v3589, 0.0
        %v3622 = vmax.f32 %v3592, 0.0
        %v3623 = vmax.f32 %v3597, 0.0
        %v3624 = vmax.f32 %v3600, 0.0
        %v3625 = vmax.f32 %v3605, 0.0
        %v3626 = vmax.f32 %v3608, 0.0
        %v3627 = vpack.c.bf16 %v3612, %v3611
        %v3628 = vpack.c.bf16 %v3614, %v3613
        %v3629 = vpack.c.bf16 %v3616, %v3615
        %v3630 = vpack.c.bf16 %v3618, %v3617
        %v3631 = vpack.c.bf16 %v3620, %v3619
        %v3632 = vpack.c.bf16 %v3622, %v3621
        %v3633 = vpack.c.bf16 %v3624, %v3623
        %v3634 = vpack.c.bf16 %v3626, %v3625
        %s3635 = scalar_lea.vmem [#allocation12], 64
        %v3636 = vld [vmem:[%s3635] sm:$0xf]
        %v3637 = vld [vmem:[%s3635 + $0x4] sm:$0xf]
        %v3638 = vld [vmem:[%s3635 + $0x8] sm:$0xf]
        %v3639 = vld [vmem:[%s3635 + $0xc] sm:$0xf]
        %v3640 = vld [vmem:[%s3635 + $0x10] sm:$0xf]
        %v3641 = vld [vmem:[%s3635 + $0x14] sm:$0xf]
        %v3642 = vld [vmem:[%s3635 + $0x18] sm:$0xf]
        %v3643 = vld [vmem:[%s3635 + $0x1c] sm:$0xf]
        %v3644 = vld [vmem:[%s3635 + $0x20] sm:$0xf]
        %v3645 = vld [vmem:[%s3635 + $0x24] sm:$0xf]
        %v3646 = vld [vmem:[%s3635 + $0x28] sm:$0xf]
        %v3647 = vld [vmem:[%s3635 + $0x2c] sm:$0xf]
        %v3648 = vld [vmem:[%s3635 + $0x30] sm:$0xf]
        %v3649 = vld [vmem:[%s3635 + $0x34] sm:$0xf]
        %v3650 = vld [vmem:[%s3635 + $0x38] sm:$0xf]
        %v3651 = vld [vmem:[%s3635 + $0x3c] sm:$0xf]
        %s3652 = scalar_lea.vmem %s16, 1
        %v3653 = vld [vmem:[%s3652] sm:$0x1]
        %v3655 = vlaneseq
        %v3656 = vshrl.u32 %v3655, 7
        %v3657 = vsub.s32 0, %v3656
        %v3658 = vrot.slane %v3653, %v3657
        %v3676 = vunpack.c.l.b16 %v3636
        %v3677 = vunpack.c.l.b16 %v3637
        %v3678 = vunpack.c.l.b16 %v3638
        %v3679 = vunpack.c.l.b16 %v3639
        %v3680 = vunpack.c.l.b16 %v3640
        %v3681 = vunpack.c.l.b16 %v3641
        %v3682 = vunpack.c.l.b16 %v3642
        %v3683 = vunpack.c.l.b16 %v3643
        %v3684 = vunpack.c.l.b16 %v3644
        %v3685 = vunpack.c.l.b16 %v3645
        %v3686 = vunpack.c.l.b16 %v3646
        %v3687 = vunpack.c.l.b16 %v3647
        %v3688 = vunpack.c.l.b16 %v3648
        %v3689 = vunpack.c.l.b16 %v3649
        %v3690 = vunpack.c.l.b16 %v3650
        %v3691 = vunpack.c.l.b16 %v3651
        %v3692 = vpack.c.b16 %v3677, %v3676
        %v3693 = vpack.c.b16 %v3679, %v3678
        %v3694 = vpack.c.b16 %v3681, %v3680
        %v3695 = vpack.c.b16 %v3683, %v3682
        %v3696 = vpack.c.b16 %v3685, %v3684
        %v3697 = vpack.c.b16 %v3687, %v3686
        %v3698 = vpack.c.b16 %v3689, %v3688
        %v3699 = vpack.c.b16 %v3691, %v3690
        %3708 = vmatprep.subr.bf16.mxu0 0
        %3709 = vmatpush1.bf16.msra.mxu0 %v3692
        %3710 = vmatprep.subr.bf16.mxu0 0
        %3711 = vmatpush1.bf16.msra.mxu0 %v3693
        %3712 = vmatprep.subr.bf16.mxu0 0
        %3713 = vmatpush1.bf16.msra.mxu0 %v3694
        %3714 = vmatprep.subr.bf16.mxu0 0
        %3715 = vmatpush1.bf16.msra.mxu0 %v3695
        %3716 = vmatprep.subr.bf16.mxu0 0
        %3717 = vmatpush1.bf16.msra.mxu0 %v3696
        %3718 = vmatprep.subr.bf16.mxu0 0
        %3719 = vmatpush1.bf16.msra.mxu0 %v3697
        %3720 = vmatprep.subr.bf16.mxu0 0
        %3721 = vmatpush1.bf16.msra.mxu0 %v3698
        %3722 = vmatprep.subr.bf16.mxu0 0
        %3723 = vmatpush1.bf16.msra.mxu0 %v3699
        %3724 = vmatprep.subr.bf16.mxu0 0
        %3725 = vmatpush1.bf16.msra.mxu0 0
        %3726 = vmatprep.subr.bf16.mxu0 0
        %3727 = vmatpush1.bf16.msra.mxu0 0
        %3728 = vmatprep.subr.bf16.mxu0 0
        %3729 = vmatpush1.bf16.msra.mxu0 0
        %3730 = vmatprep.subr.bf16.mxu0 0
        %3731 = vmatpush1.bf16.msra.mxu0 0
        %3732 = vmatprep.subr.bf16.mxu0 0
        %3733 = vmatpush1.bf16.msra.mxu0 0
        %3734 = vmatprep.subr.bf16.mxu0 0
        %3735 = vmatpush1.bf16.msra.mxu0 0
        %3736 = vmatprep.subr.bf16.mxu0 0
        %3737 = vmatpush1.bf16.msra.mxu0 0
        %3738 = vmatprep.subr.bf16.mxu0 0
        %3739 = vmatpush1.bf16.msra.mxu0 0
        %3740 = vmatprep.mubr.bf16.mxu0 0
        %3741 = vmatmul.mubr.bf16.gmra.mrb[0].mxu0 %v3627
        %v3742 = vpop.f32.mrb[0].mxu0
        %v3743 = vadd.f32 %v3658, %v3742
        %v3744 = vpop.f32.mrb[0].mxu0
        %v3745 = vpop.f32.mrb[0].mxu0
        %v3746 = vadd.f32 %v3658, %v3745
        %v3747 = vpop.f32.mrb[0].mxu0
        %3748 = vmatprep.mubr.bf16.mxu0 0
        %3749 = vmatmul.mubr.bf16.gmra.mrb[0].mxu0 %v3628
        %v3750 = vpop.f32.mrb[0].mxu0
        %v3751 = vadd.f32 %v3658, %v3750
        %v3752 = vpop.f32.mrb[0].mxu0
        %v3753 = vpop.f32.mrb[0].mxu0
        %v3754 = vadd.f32 %v3658, %v3753
        %v3755 = vpop.f32.mrb[0].mxu0
        %3756 = vmatprep.mubr.bf16.mxu0 0
        %3757 = vmatmul.mubr.bf16.gmra.mrb[0].mxu0 %v3629
        %v3758 = vpop.f32.mrb[0].mxu0
        %v3759 = vadd.f32 %v3658, %v3758
        %v3760 = vpop.f32.mrb[0].mxu0
        %v3761 = vpop.f32.mrb[0].mxu0
        %v3762 = vadd.f32 %v3658, %v3761
        %v3763 = vpop.f32.mrb[0].mxu0
        %3764 = vmatprep.mubr.bf16.mxu0 0
        %3765 = vmatmul.mubr.bf16.gmra.mrb[0].mxu0 %v3630
        %v3766 = vpop.f32.mrb[0].mxu0
        %v3767 = vadd.f32 %v3658, %v3766
        %v3768 = vpop.f32.mrb[0].mxu0
        %v3769 = vpop.f32.mrb[0].mxu0
        %v3770 = vadd.f32 %v3658, %v3769
        %v3771 = vpop.f32.mrb[0].mxu0
        %3772 = vmatprep.mubr.bf16.mxu0 0
        %3773 = vmatmul.mubr.bf16.gmra.mrb[0].mxu0 %v3631
        %v3774 = vpop.f32.mrb[0].mxu0
        %v3775 = vadd.f32 %v3658, %v3774
        %v3776 = vpop.f32.mrb[0].mxu0
        %v3777 = vpop.f32.mrb[0].mxu0
        %v3778 = vadd.f32 %v3658, %v3777
        %v3779 = vpop.f32.mrb[0].mxu0
        %3780 = vmatprep.mubr.bf16.mxu0 0
        %3781 = vmatmul.mubr.bf16.gmra.mrb[0].mxu0 %v3632
        %v3782 = vpop.f32.mrb[0].mxu0
        %v3783 = vadd.f32 %v3658, %v3782
        %v3784 = vpop.f32.mrb[0].mxu0
        %v3785 = vpop.f32.mrb[0].mxu0
        %v3786 = vadd.f32 %v3658, %v3785
        %v3787 = vpop.f32.mrb[0].mxu0
        %3788 = vmatprep.mubr.bf16.mxu0 0
        %3789 = vmatmul.mubr.bf16.gmra.mrb[0].mxu0 %v3633
        %v3790 = vpop.f32.mrb[0].mxu0
        %v3791 = vadd.f32 %v3658, %v3790
        %v3792 = vpop.f32.mrb[0].mxu0
        %v3793 = vpop.f32.mrb[0].mxu0
        %v3794 = vadd.f32 %v3658, %v3793
        %v3795 = vpop.f32.mrb[0].mxu0
        %3796 = vmatprep.mubr.bf16.mxu0 0
        %3797 = vmatmul.mubr.bf16.gmra.mrb[0].mxu0 %v3634
        %v3798 = vpop.f32.mrb[0].mxu0
        %v3799 = vadd.f32 %v3658, %v3798
        %v3800 = vpop.f32.mrb[0].mxu0
        %v3801 = vpop.f32.mrb[0].mxu0
        %v3802 = vadd.f32 %v3658, %v3801
        %v3803 = vpop.f32.mrb[0].mxu0
        %3804 = vdwg.mxu0
        %3805 = vmatprep.subr.mxu0 0.0
        %3806 = vmatpush1.msra.mxu0 %v3743
        %3807 = vmatprep.subr.mxu0 0.0
        %3808 = vmatpush1.msra.mxu0 %v3746
        %3809 = vmatprep.subr.mxu0 0.0
        %3810 = vmatpush1.msra.mxu0 %v3751
        %3811 = vmatprep.subr.mxu0 0.0
        %3812 = vmatpush1.msra.mxu0 %v3754
        %3813 = vmatprep.subr.mxu0 0.0
        %3814 = vmatpush1.msra.mxu0 %v3759
        %3815 = vmatprep.subr.mxu0 0.0
        %3816 = vmatpush1.msra.mxu0 %v3762
        %3817 = vmatprep.subr.mxu0 0.0
        %3818 = vmatpush1.msra.mxu0 %v3767
        %3819 = vmatprep.subr.mxu0 0.0
        %3820 = vmatpush1.msra.mxu0 %v3770
        %3821 = vmatprep.subr.mxu0 0.0
        %3822 = vmatpush1.msra.mxu0 %v3775
        %3823 = vmatprep.subr.mxu0 0.0
        %3824 = vmatpush1.msra.mxu0 %v3778
        %3825 = vmatprep.subr.mxu0 0.0
        %3826 = vmatpush1.msra.mxu0 %v3783
        %3827 = vmatprep.subr.mxu0 0.0
        %3828 = vmatpush1.msra.mxu0 %v3786
        %3829 = vmatprep.subr.mxu0 0.0
        %3830 = vmatpush1.msra.mxu0 %v3791
        %3831 = vmatprep.subr.mxu0 0.0
        %3832 = vmatpush1.msra.mxu0 %v3794
        %3833 = vmatprep.subr.mxu0 0.0
        %3834 = vmatpush1.msra.mxu0 %v3799
        %3835 = vmatprep.subr.mxu0 0.0
        %3836 = vmatpush1.msra.mxu0 %v3802
        %3837 = vmatprep.subr.mxu0 0.0
        %3838 = vmatpush1.msra.mxu0 0.0
        %3839 = vmatprep.subr.mxu0 0.0
        %3840 = vmatpush1.msra.mxu0 0.0
        %3841 = vmatprep.subr.mxu0 0.0
        %3842 = vmatpush1.msra.mxu0 0.0
        %3843 = vmatprep.subr.mxu0 0.0
        %3844 = vmatpush1.msra.mxu0 0.0
        %3845 = vmatprep.subr.mxu0 0.0
        %3846 = vmatpush1.msra.mxu0 0.0
        %3847 = vmatprep.subr.mxu0 0.0
        %3848 = vmatpush1.msra.mxu0 0.0
        %3849 = vmatprep.subr.mxu0 0.0
        %3850 = vmatpush1.msra.mxu0 0.0
        %3851 = vmatprep.subr.mxu0 0.0
        %3852 = vmatpush1.msra.mxu0 0.0
        %3853 = vmatprep.subr.mxu0 0.0
        %3854 = vmatpush1.msra.mxu0 0.0
        %3855 = vmatprep.subr.mxu0 0.0
        %3856 = vmatpush1.msra.mxu0 0.0
        %3857 = vmatprep.subr.mxu0 0.0
        %3858 = vmatpush1.msra.mxu0 0.0
        %3859 = vmatprep.subr.mxu0 0.0
        %3860 = vmatpush1.msra.mxu0 0.0
        %3861 = vmatprep.subr.mxu0 0.0
        %3862 = vmatpush1.msra.mxu0 0.0
        %3863 = vmatprep.subr.mxu0 0.0
        %3864 = vmatpush1.msra.mxu0 0.0
        %3865 = vmatprep.subr.mxu0 0.0
        %3866 = vmatpush1.msra.mxu0 0.0
        %3867 = vmatprep.subr.mxu0 0.0
        %3868 = vmatpush1.msra.mxu0 0.0
        %3869 = vmatprep.mubr.f32.mxu0 0.0
        %3870 = vmatmul.mubr.f32.gmra.mrb[0].mxu0 %v785
        %v3871 = vpop.f32.mrb[0].mxu0
        %v3872 = vadd.f32 0.0, %v3871
        %v3873 = vpop.f32.mrb[0].mxu0
        %3874 = vdwg.mxu0
        %s3875 = scalar_lea.vmem %s734, 8
        %3876 = vst [vmem:[%s3875] sm:$0xff] %v3872
        %p3877 = scmp.lt.s32.totalorder %s37, 1
        %s3878 = scalar_select %p3877, %s37, 1
        %s3879 = smul.addr %s3878, 2
        %s3880 = smul.addr %s3879, 8
        %s3881 = scalar_lea.vmem %s17, %s3880
        // Predicated region
        $region117: #{gin_forward.1} parent=87 // pred_check
          %p3882 = pneg %p437
        $region118: #{gin_forward.1} parent=87 // pred_check_branch
          %3884 = sbr.rel (%p3882) target = $region120
        $region119: #{gin_forward.1} parent=87 // pred_region
          _
        $region120: #{gin_forward.1} parent=87 // pred_fallthru
          _
      $region88: #{gin_forward.1} parent=5 // pred_fallthru
        _
      %p3885 = scmp.le.s32.totalorder 2, %s32
      // Predicated region
      $region121: #{gin_forward.1} parent=5 // pred_check
        %p3886 = pneg %p3885
      $region122: #{gin_forward.1} parent=5 // pred_check_branch
        %3888 = sbr.rel (%p3886) target = $region124
      $region123: #{gin_forward.1} parent=5 // pred_region
        %s3889 = ssub.s32 %s32, 2
        // Predicated region
        $region125: #{gin_forward.1} parent=123 // pred_check
          %p3890 = pneg %p443
        $region126: #{gin_forward.1} parent=123 // pred_check_branch
          %3892 = sbr.rel (%p3890) target = $region128
        $region127: #{gin_forward.1} parent=123 // pred_region
          %p3893 = scmp.lt.s32.totalorder %s38, 1
          %s3894 = scalar_select %p3893, %s38, 1
          %s3895 = smul.addr %s3894, 2
          %s3896 = smul.addr %s3895, 8
          %s3897 = scalar_lea.vmem %s17, %s3896
        $region128: #{gin_forward.1} parent=123 // pred_fallthru
          _
      $region124: #{gin_forward.1} parent=5 // pred_fallthru
        _
    $region6: #{gin_forward.1} parent=1 // loop_footer
      %s36 = sadd.s32 1, %s32
    $region7: #{gin_forward.1} parent=1 // loop_footer_branch
      %31 = sbr.rel target = $region3
    $region8: #{gin_forward.1} parent=1 // loop_exit
      _
    %3898 = vsyncpa [#allocation3], 1
    %s3899 = scalar_lea.sflag [#allocation3], 1
    %3900 = vsyncpa %s3899, 1
    %3901 = vsyncpa [#allocation6], 1
    %s3902 = scalar_lea.sflag [#allocation6], 1
    %3903 = vsyncpa %s3902, 1
    %3904 = vsyncpa [#allocation10], 1
    %3905 = vsyncpa [#allocation13], 1
    %3906 = vsyncpa [#allocation4], 1
    %s3907 = scalar_lea.sflag [#allocation4], 1
    %3908 = vsyncpa %s3907, 1

</llo_original>
